<compile_context>
chip_gen: v7x
topology: tpu7x:2x2x1
jax: 0.10.0
libtpu: 0.0.40
codegen_flags: <defaults>
</compile_context>

<pallas_src>
import functools

import jax
import jax.numpy as jnp
from jax.experimental import pallas as pl
from jax.experimental.pallas import tpu as pltpu

PAD = 128          # padded feature width (lane dim)
HIDDEN = 32        # MLP hidden size from the module
N_W_PER_LAYER = 10  # split-weight matrices per MetaLayer
N_B_PER_LAYER = 6   # bias vectors per MetaLayer


# ----------------------------------------------------------------------------
# Fused Pallas kernel: all MetaLayers (edge update -> node update) in one call
# ----------------------------------------------------------------------------
def graphnet_kernel(x_ref, e_ref, row_oh_ref, col_oh_ref, scat_ref,
                    w_ref, b_ref, e_out_ref, *, num_layers):
    f32 = jnp.float32
    x = x_ref[...]            # (N, PAD)  node features (zero-padded lanes)
    e = e_ref[...]            # (E, PAD)  edge features (zero-padded lanes)
    row_oh = row_oh_ref[...]  # (E, N)    one-hot of edge source nodes
    col_oh = col_oh_ref[...]  # (E, N)    one-hot of edge destination nodes
    scat = scat_ref[...]      # (N, E)    count-normalized scatter_mean matrix

    def dot(a, b):
        return jnp.dot(a, b, preferred_element_type=f32)

    # Static (unrolled) layer loop: activations stay resident across layers.
    for layer in range(num_layers):
        wo = layer * N_W_PER_LAYER
        bo = layer * N_B_PER_LAYER

        # gather: x[row] / x[col] via one-hot matmuls (exact for 0/1 f32)
        src = dot(row_oh, x)                                   # (E, PAD)
        dst = dot(col_oh, x)                                   # (E, PAD)

        # ---- EdgeModel: relu(cat([src, dst, e]) @ W1 + b1) @ W2 + b2 ----
        # (concat expressed as split-weight matmuls; lanes beyond the real
        #  feature widths are zero so the split form is exact)
        h = jnp.maximum(dot(src, w_ref[wo + 0]) + dot(dst, w_ref[wo + 1])
                        + dot(e, w_ref[wo + 2]) + b_ref[bo + 0], 0.0)
        e = dot(h, w_ref[wo + 3]) + b_ref[bo + 1]              # new edge_attr

        # ---- NodeModel mlp1: per-edge message from cat([x[row], edge_attr]) --
        h = jnp.maximum(dot(src, w_ref[wo + 4]) + dot(e, w_ref[wo + 5])
                        + b_ref[bo + 2], 0.0)
        msg = dot(h, w_ref[wo + 6]) + b_ref[bo + 3]            # (E, PAD)

        # ---- scatter_mean over destination nodes (dense normalized matmul) --
        agg = dot(scat, msg)                                   # (N, PAD)

        # ---- NodeModel mlp2: cat([x, agg]) -> new node features ----
        h = jnp.maximum(dot(x, w_ref[wo + 7]) + dot(agg, w_ref[wo + 8])
                        + b_ref[bo + 4], 0.0)
        x = dot(h, w_ref[wo + 9]) + b_ref[bo + 5]              # new node feats

    e_out_ref[...] = e


def graphnet_pallas(x_p, e_p, row_oh, col_oh, scat, w_all, b_all, num_layers):
    E = e_p.shape[0]
    kernel = functools.partial(graphnet_kernel, num_layers=num_layers)
    vmem_spec = pl.BlockSpec(memory_space=pltpu.MemorySpace.VMEM)
    return pl.pallas_call(
        kernel,
        out_shape=jax.ShapeDtypeStruct((E, PAD), jnp.float32),
        in_specs=[vmem_spec] * 7,
        out_specs=vmem_spec,
        compiler_params=pltpu.CompilerParams(
            vmem_limit_bytes=32 * 1024 * 1024),   # ~2 MiB actual; safe on v5e/v6e/v7x
    )(x_p, e_p, row_oh, col_oh, scat, w_all, b_all)


# ----------------------------------------------------------------------------
# Deterministic parameter construction (PyTorch Linear-style uniform init)
# ----------------------------------------------------------------------------
def init_linear(key, fan_in, fan_out):
    k1, k2 = jax.random.split(key)
    bound = float(fan_in) ** -0.5
    w = jax.random.uniform(k1, (fan_in, fan_out), jnp.float32, -bound, bound)
    b = jax.random.uniform(k2, (fan_out,), jnp.float32, -bound, bound)
    return w, b


def pad_w(w):
    return jnp.zeros((PAD, PAD), jnp.float32).at[:w.shape[0], :w.shape[1]].set(w)


def pad_b(b):
    return jnp.zeros((1, PAD), jnp.float32).at[0, :b.shape[0]].set(b)


def make_layer_params(key, n_in, e_in, e_out, n_out):
    keys = jax.random.split(key, 6)
    # EdgeModel MLP: Lin(e_in + 2*n_in, H) -> ReLU -> Lin(H, e_out)
    w1e, b1e = init_linear(keys[0], e_in + 2 * n_in, HIDDEN)
    w2e, b2e = init_linear(keys[1], HIDDEN, e_out)
    # NodeModel mlp1: Lin(n_in + e_out, H) -> ReLU -> Lin(H, n_out)
    w1n, b1n = init_linear(keys[2], n_in + e_out, HIDDEN)
    w2n, b2n = init_linear(keys[3], HIDDEN, n_out)
    # NodeModel mlp2: Lin(n_in + n_out, H) -> ReLU -> Lin(H, n_out)
    w1m, b1m = init_linear(keys[4], n_in + n_out, HIDDEN)
    w2m, b2m = init_linear(keys[5], HIDDEN, n_out)

    raw = dict(w1e=w1e, b1e=b1e, w2e=w2e, b2e=b2e,
               w1n=w1n, b1n=b1n, w2n=w2n, b2n=b2n,
               w1m=w1m, b1m=b1m, w2m=w2m, b2m=b2m)
    # split-weight padded tiles, in the order the kernel consumes them
    w_list = [
        pad_w(w1e[:n_in]), pad_w(w1e[n_in:2 * n_in]), pad_w(w1e[2 * n_in:]),
        pad_w(w2e),
        pad_w(w1n[:n_in]), pad_w(w1n[n_in:]), pad_w(w2n),
        pad_w(w1m[:n_in]), pad_w(w1m[n_in:]), pad_w(w2m),
    ]
    b_list = [pad_b(b1e), pad_b(b2e), pad_b(b1n), pad_b(b2n),
              pad_b(b1m), pad_b(b2m)]
    return raw, w_list, b_list


# ----------------------------------------------------------------------------
# GraphNet forward (fused Pallas) and pure-JAX reference
# ----------------------------------------------------------------------------
def graphnet_forward(x, edge_index, edge_attr, w_all, b_all, num_layers,
                     final_e_out):
    N = x.shape[0]
    E = edge_attr.shape[0]
    row, col = edge_index[0], edge_index[1]
    row_oh = jax.nn.one_hot(row, N, dtype=jnp.float32)            # (E, N)
    col_oh = jax.nn.one_hot(col, N, dtype=jnp.float32)            # (E, N)
    counts = jnp.sum(col_oh, axis=0)                              # (N,)
    scat = (col_oh / jnp.maximum(counts, 1.0)[None, :]).T         # (N, E)

    x_p = jnp.zeros((N, PAD), jnp.float32).at[:, :x.shape[1]].set(x)
    e_p = jnp.zeros((E, PAD), jnp.float32).at[:, :edge_attr.shape[1]].set(edge_attr)

    e_out = graphnet_pallas(x_p, e_p, row_oh, col_oh, scat, w_all, b_all,
                            num_layers)
    return e_out[:, :final_e_out]                                 # final edge_attr


def graphnet_reference(x, edge_index, edge_attr, raw_params):
    row, col = edge_index[0], edge_index[1]
    N = x.shape[0]
    e = edge_attr
    for p in raw_params:
        src, dst = x[row], x[col]
        h = jax.nn.relu(jnp.concatenate([src, dst, e], 1) @ p["w1e"] + p["b1e"])
        e = h @ p["w2e"] + p["b2e"]
        h = jax.nn.relu(jnp.concatenate([src, e], 1) @ p["w1n"] + p["b1n"])
        msg = h @ p["w2n"] + p["b2n"]
        summ = jnp.zeros((N, msg.shape[1]), jnp.float32).at[col].add(msg)
        cnt = jnp.zeros((N,), jnp.float32).at[col].add(1.0)
        agg = summ / jnp.maximum(cnt, 1.0)[:, None]
        h = jax.nn.relu(jnp.concatenate([x, agg], 1) @ p["w1m"] + p["b1m"])
        x = h @ p["w2m"] + p["b2m"]
    return e


if __name__ == "__main__":
    key = jax.random.PRNGKey(0)
    k_x, k_e, k_ei, k_p = jax.random.split(key, 4)

    # small graph: N nodes, E edges ; GraphNet(middle_layer=1)
    N, E = 16, 32
    middle_layer = 1
    x = jax.random.normal(k_x, (N, 2), jnp.float32)          # node features (n_in=2)
    edge_attr = jax.random.normal(k_e, (E, 3), jnp.float32)   # edge features (e_in=3)
    edge_index = jax.random.randint(k_ei, (2, E), 0, N)       # [row; col]

    # per-layer (n_in, e_in, e_out, n_out) from GraphNet.__init__
    configs = [(2, 3, 4, 4)] + [(4, 4, 4, 4)] * middle_layer + [(4, 4, 1, 1)]
    layer_keys = jax.random.split(k_p, len(configs))
    raw_params, w_tiles, b_tiles = [], [], []
    for lk, cfg in zip(layer_keys, configs):
        raw, w_list, b_list = make_layer_params(lk, *cfg)
        raw_params.append(raw)
        w_tiles.extend(w_list)
        b_tiles.extend(b_list)

    # stacked parameter DMAs: (L*10, 128, 128) and (L*6, 1, 128)
    w_all = jnp.stack(w_tiles)                                # (30, 128, 128)
    b_all = jnp.stack(b_tiles)                                # (18, 1, 128)

    out = graphnet_forward(x, edge_index, edge_attr, w_all, b_all,
                           num_layers=len(configs),
                           final_e_out=configs[-1][2])
    out = jax.block_until_ready(out)

    ref = jax.block_until_ready(
        graphnet_reference(x, edge_index, edge_attr, raw_params))

    assert out.shape == (E, 1), out.shape
    assert jnp.allclose(out, ref, atol=1e-2, rtol=1e-2), (
        "mismatch", float(jnp.max(jnp.abs(out - ref))))
    print("KERNEL_OK")
</pallas_src>

<mosaic_0001>
module attributes {stable_mosaic.version = 11 : i64} {
  func.func @graphnet_kernel(%arg0: memref<16x128xf32, #tpu.memory_space<vmem>>, %arg1: memref<32x128xf32, #tpu.memory_space<vmem>>, %arg2: memref<32x16xf32, #tpu.memory_space<vmem>>, %arg3: memref<32x16xf32, #tpu.memory_space<vmem>>, %arg4: memref<16x32xf32, #tpu.memory_space<vmem>>, %arg5: memref<30x128x128xf32, #tpu.memory_space<vmem>>, %arg6: memref<18x1x128xf32, #tpu.memory_space<vmem>>, %arg7: memref<32x128xf32, #tpu.memory_space<vmem>>) attributes {dimension_semantics = [], scalar_prefetch = 0 : i64, scratch_operands = 0 : i64, tpu.core_type = #tpu.core_type<tc>} {
    %c0 = arith.constant 0 : index
    %c0_0 = arith.constant 0 : index
    %0 = vector.load %arg0[%c0, %c0_0] : memref<16x128xf32, #tpu.memory_space<vmem>>, vector<16x128xf32>
    %c0_1 = arith.constant 0 : index
    %c0_2 = arith.constant 0 : index
    %1 = vector.load %arg1[%c0_1, %c0_2] : memref<32x128xf32, #tpu.memory_space<vmem>>, vector<32x128xf32>
    %c0_3 = arith.constant 0 : index
    %c0_4 = arith.constant 0 : index
    %2 = vector.load %arg2[%c0_3, %c0_4] : memref<32x16xf32, #tpu.memory_space<vmem>>, vector<32x16xf32>
    %c0_5 = arith.constant 0 : index
    %c0_6 = arith.constant 0 : index
    %3 = vector.load %arg3[%c0_5, %c0_6] : memref<32x16xf32, #tpu.memory_space<vmem>>, vector<32x16xf32>
    %c0_7 = arith.constant 0 : index
    %c0_8 = arith.constant 0 : index
    %4 = vector.load %arg4[%c0_7, %c0_8] : memref<16x32xf32, #tpu.memory_space<vmem>>, vector<16x32xf32>
    %cst = arith.constant dense<0.000000e+00> : vector<32x128xf32>
    %5 = tpu.matmul %2, %0, %cst {dimension_numbers = #tpu.dot_dimension_numbers<[1], [0], [0], [1], [0, 0, 1, 1], [], []>} : vector<32x16xf32>, vector<16x128xf32>, vector<32x128xf32> -> vector<32x128xf32>
    %cst_9 = arith.constant dense<0.000000e+00> : vector<32x128xf32>
    %6 = tpu.matmul %3, %0, %cst_9 {dimension_numbers = #tpu.dot_dimension_numbers<[1], [0], [0], [1], [0, 0, 1, 1], [], []>} : vector<32x16xf32>, vector<16x128xf32>, vector<32x128xf32> -> vector<32x128xf32>
    %c0_10 = arith.constant 0 : index
    %c0_11 = arith.constant 0 : index
    %c0_12 = arith.constant 0 : index
    %7 = vector.load %arg5[%c0_10, %c0_11, %c0_12] : memref<30x128x128xf32, #tpu.memory_space<vmem>>, vector<1x128x128xf32>
    %8 = vector.shape_cast %7 : vector<1x128x128xf32> to vector<128x128xf32>
    %cst_13 = arith.constant dense<0.000000e+00> : vector<32x128xf32>
    %9 = tpu.matmul %5, %8, %cst_13 {dimension_numbers = #tpu.dot_dimension_numbers<[1], [0], [0], [1], [0, 0, 1, 1], [], []>} : vector<32x128xf32>, vector<128x128xf32>, vector<32x128xf32> -> vector<32x128xf32>
    %c1 = arith.constant 1 : index
    %c0_14 = arith.constant 0 : index
    %c0_15 = arith.constant 0 : index
    %10 = vector.load %arg5[%c1, %c0_14, %c0_15] : memref<30x128x128xf32, #tpu.memory_space<vmem>>, vector<1x128x128xf32>
    %11 = vector.shape_cast %10 : vector<1x128x128xf32> to vector<128x128xf32>
    %cst_16 = arith.constant dense<0.000000e+00> : vector<32x128xf32>
    %12 = tpu.matmul %6, %11, %cst_16 {dimension_numbers = #tpu.dot_dimension_numbers<[1], [0], [0], [1], [0, 0, 1, 1], [], []>} : vector<32x128xf32>, vector<128x128xf32>, vector<32x128xf32> -> vector<32x128xf32>
    %13 = arith.addf %9, %12 : vector<32x128xf32>
    %c2 = arith.constant 2 : index
    %c0_17 = arith.constant 0 : index
    %c0_18 = arith.constant 0 : index
    %14 = vector.load %arg5[%c2, %c0_17, %c0_18] : memref<30x128x128xf32, #tpu.memory_space<vmem>>, vector<1x128x128xf32>
    %15 = vector.shape_cast %14 : vector<1x128x128xf32> to vector<128x128xf32>
    %cst_19 = arith.constant dense<0.000000e+00> : vector<32x128xf32>
    %16 = tpu.matmul %1, %15, %cst_19 {dimension_numbers = #tpu.dot_dimension_numbers<[1], [0], [0], [1], [0, 0, 1, 1], [], []>} : vector<32x128xf32>, vector<128x128xf32>, vector<32x128xf32> -> vector<32x128xf32>
    %17 = arith.addf %13, %16 : vector<32x128xf32>
    %c0_20 = arith.constant 0 : index
    %c0_21 = arith.constant 0 : index
    %c0_22 = arith.constant 0 : index
    %18 = vector.load %arg6[%c0_20, %c0_21, %c0_22] : memref<18x1x128xf32, #tpu.memory_space<vmem>>, vector<1x1x128xf32>
    %19 = vector.shape_cast %18 : vector<1x1x128xf32> to vector<1x128xf32>
    %20 = vector.broadcast %19 : vector<1x128xf32> to vector<32x128xf32>
    %21 = arith.addf %17, %20 : vector<32x128xf32>
    %cst_23 = arith.constant 0.000000e+00 : f32
    %22 = vector.broadcast %cst_23 : f32 to vector<32x128xf32>
    %23 = arith.maximumf %21, %22 : vector<32x128xf32>
    %c3 = arith.constant 3 : index
    %c0_24 = arith.constant 0 : index
    %c0_25 = arith.constant 0 : index
    %24 = vector.load %arg5[%c3, %c0_24, %c0_25] : memref<30x128x128xf32, #tpu.memory_space<vmem>>, vector<1x128x128xf32>
    %25 = vector.shape_cast %24 : vector<1x128x128xf32> to vector<128x128xf32>
    %cst_26 = arith.constant dense<0.000000e+00> : vector<32x128xf32>
    %26 = tpu.matmul %23, %25, %cst_26 {dimension_numbers = #tpu.dot_dimension_numbers<[1], [0], [0], [1], [0, 0, 1, 1], [], []>} : vector<32x128xf32>, vector<128x128xf32>, vector<32x128xf32> -> vector<32x128xf32>
    %c1_27 = arith.constant 1 : index
    %c0_28 = arith.constant 0 : index
    %c0_29 = arith.constant 0 : index
    %27 = vector.load %arg6[%c1_27, %c0_28, %c0_29] : memref<18x1x128xf32, #tpu.memory_space<vmem>>, vector<1x1x128xf32>
    %28 = vector.shape_cast %27 : vector<1x1x128xf32> to vector<1x128xf32>
    %29 = vector.broadcast %28 : vector<1x128xf32> to vector<32x128xf32>
    %30 = arith.addf %26, %29 : vector<32x128xf32>
    %c4 = arith.constant 4 : index
    %c0_30 = arith.constant 0 : index
    %c0_31 = arith.constant 0 : index
    %31 = vector.load %arg5[%c4, %c0_30, %c0_31] : memref<30x128x128xf32, #tpu.memory_space<vmem>>, vector<1x128x128xf32>
    %32 = vector.shape_cast %31 : vector<1x128x128xf32> to vector<128x128xf32>
    %cst_32 = arith.constant dense<0.000000e+00> : vector<32x128xf32>
    %33 = tpu.matmul %5, %32, %cst_32 {dimension_numbers = #tpu.dot_dimension_numbers<[1], [0], [0], [1], [0, 0, 1, 1], [], []>} : vector<32x128xf32>, vector<128x128xf32>, vector<32x128xf32> -> vector<32x128xf32>
    %c5 = arith.constant 5 : index
    %c0_33 = arith.constant 0 : index
    %c0_34 = arith.constant 0 : index
    %34 = vector.load %arg5[%c5, %c0_33, %c0_34] : memref<30x128x128xf32, #tpu.memory_space<vmem>>, vector<1x128x128xf32>
    %35 = vector.shape_cast %34 : vector<1x128x128xf32> to vector<128x128xf32>
    %cst_35 = arith.constant dense<0.000000e+00> : vector<32x128xf32>
    %36 = tpu.matmul %30, %35, %cst_35 {dimension_numbers = #tpu.dot_dimension_numbers<[1], [0], [0], [1], [0, 0, 1, 1], [], []>} : vector<32x128xf32>, vector<128x128xf32>, vector<32x128xf32> -> vector<32x128xf32>
    %37 = arith.addf %33, %36 : vector<32x128xf32>
    %c2_36 = arith.constant 2 : index
    %c0_37 = arith.constant 0 : index
    %c0_38 = arith.constant 0 : index
    %38 = vector.load %arg6[%c2_36, %c0_37, %c0_38] : memref<18x1x128xf32, #tpu.memory_space<vmem>>, vector<1x1x128xf32>
    %39 = vector.shape_cast %38 : vector<1x1x128xf32> to vector<1x128xf32>
    %40 = vector.broadcast %39 : vector<1x128xf32> to vector<32x128xf32>
    %41 = arith.addf %37, %40 : vector<32x128xf32>
    %cst_39 = arith.constant 0.000000e+00 : f32
    %42 = vector.broadcast %cst_39 : f32 to vector<32x128xf32>
    %43 = arith.maximumf %41, %42 : vector<32x128xf32>
    %c6 = arith.constant 6 : index
    %c0_40 = arith.constant 0 : index
    %c0_41 = arith.constant 0 : index
    %44 = vector.load %arg5[%c6, %c0_40, %c0_41] : memref<30x128x128xf32, #tpu.memory_space<vmem>>, vector<1x128x128xf32>
    %45 = vector.shape_cast %44 : vector<1x128x128xf32> to vector<128x128xf32>
    %cst_42 = arith.constant dense<0.000000e+00> : vector<32x128xf32>
    %46 = tpu.matmul %43, %45, %cst_42 {dimension_numbers = #tpu.dot_dimension_numbers<[1], [0], [0], [1], [0, 0, 1, 1], [], []>} : vector<32x128xf32>, vector<128x128xf32>, vector<32x128xf32> -> vector<32x128xf32>
    %c3_43 = arith.constant 3 : index
    %c0_44 = arith.constant 0 : index
    %c0_45 = arith.constant 0 : index
    %47 = vector.load %arg6[%c3_43, %c0_44, %c0_45] : memref<18x1x128xf32, #tpu.memory_space<vmem>>, vector<1x1x128xf32>
    %48 = vector.shape_cast %47 : vector<1x1x128xf32> to vector<1x128xf32>
    %49 = vector.broadcast %48 : vector<1x128xf32> to vector<32x128xf32>
    %50 = arith.addf %46, %49 : vector<32x128xf32>
    %cst_46 = arith.constant dense<0.000000e+00> : vector<16x128xf32>
    %51 = tpu.matmul %4, %50, %cst_46 {dimension_numbers = #tpu.dot_dimension_numbers<[1], [0], [0], [1], [0, 0, 1, 1], [], []>} : vector<16x32xf32>, vector<32x128xf32>, vector<16x128xf32> -> vector<16x128xf32>
    %c7 = arith.constant 7 : index
    %c0_47 = arith.constant 0 : index
    %c0_48 = arith.constant 0 : index
    %52 = vector.load %arg5[%c7, %c0_47, %c0_48] : memref<30x128x128xf32, #tpu.memory_space<vmem>>, vector<1x128x128xf32>
    %53 = vector.shape_cast %52 : vector<1x128x128xf32> to vector<128x128xf32>
    %cst_49 = arith.constant dense<0.000000e+00> : vector<16x128xf32>
    %54 = tpu.matmul %0, %53, %cst_49 {dimension_numbers = #tpu.dot_dimension_numbers<[1], [0], [0], [1], [0, 0, 1, 1], [], []>} : vector<16x128xf32>, vector<128x128xf32>, vector<16x128xf32> -> vector<16x128xf32>
    %c8 = arith.constant 8 : index
    %c0_50 = arith.constant 0 : index
    %c0_51 = arith.constant 0 : index
    %55 = vector.load %arg5[%c8, %c0_50, %c0_51] : memref<30x128x128xf32, #tpu.memory_space<vmem>>, vector<1x128x128xf32>
    %56 = vector.shape_cast %55 : vector<1x128x128xf32> to vector<128x128xf32>
    %cst_52 = arith.constant dense<0.000000e+00> : vector<16x128xf32>
    %57 = tpu.matmul %51, %56, %cst_52 {dimension_numbers = #tpu.dot_dimension_numbers<[1], [0], [0], [1], [0, 0, 1, 1], [], []>} : vector<16x128xf32>, vector<128x128xf32>, vector<16x128xf32> -> vector<16x128xf32>
    %58 = arith.addf %54, %57 : vector<16x128xf32>
    %c4_53 = arith.constant 4 : index
    %c0_54 = arith.constant 0 : index
    %c0_55 = arith.constant 0 : index
    %59 = vector.load %arg6[%c4_53, %c0_54, %c0_55] : memref<18x1x128xf32, #tpu.memory_space<vmem>>, vector<1x1x128xf32>
    %60 = vector.shape_cast %59 : vector<1x1x128xf32> to vector<1x128xf32>
    %61 = vector.broadcast %60 : vector<1x128xf32> to vector<16x128xf32>
    %62 = arith.addf %58, %61 : vector<16x128xf32>
    %cst_56 = arith.constant 0.000000e+00 : f32
    %63 = vector.broadcast %cst_56 : f32 to vector<16x128xf32>
    %64 = arith.maximumf %62, %63 : vector<16x128xf32>
    %c9 = arith.constant 9 : index
    %c0_57 = arith.constant 0 : index
    %c0_58 = arith.constant 0 : index
    %65 = vector.load %arg5[%c9, %c0_57, %c0_58] : memref<30x128x128xf32, #tpu.memory_space<vmem>>, vector<1x128x128xf32>
    %66 = vector.shape_cast %65 : vector<1x128x128xf32> to vector<128x128xf32>
    %cst_59 = arith.constant dense<0.000000e+00> : vector<16x128xf32>
    %67 = tpu.matmul %64, %66, %cst_59 {dimension_numbers = #tpu.dot_dimension_numbers<[1], [0], [0], [1], [0, 0, 1, 1], [], []>} : vector<16x128xf32>, vector<128x128xf32>, vector<16x128xf32> -> vector<16x128xf32>
    %c5_60 = arith.constant 5 : index
    %c0_61 = arith.constant 0 : index
    %c0_62 = arith.constant 0 : index
    %68 = vector.load %arg6[%c5_60, %c0_61, %c0_62] : memref<18x1x128xf32, #tpu.memory_space<vmem>>, vector<1x1x128xf32>
    %69 = vector.shape_cast %68 : vector<1x1x128xf32> to vector<1x128xf32>
    %70 = vector.broadcast %69 : vector<1x128xf32> to vector<16x128xf32>
    %71 = arith.addf %67, %70 : vector<16x128xf32>
    %cst_63 = arith.constant dense<0.000000e+00> : vector<32x128xf32>
    %72 = tpu.matmul %2, %71, %cst_63 {dimension_numbers = #tpu.dot_dimension_numbers<[1], [0], [0], [1], [0, 0, 1, 1], [], []>} : vector<32x16xf32>, vector<16x128xf32>, vector<32x128xf32> -> vector<32x128xf32>
    %cst_64 = arith.constant dense<0.000000e+00> : vector<32x128xf32>
    %73 = tpu.matmul %3, %71, %cst_64 {dimension_numbers = #tpu.dot_dimension_numbers<[1], [0], [0], [1], [0, 0, 1, 1], [], []>} : vector<32x16xf32>, vector<16x128xf32>, vector<32x128xf32> -> vector<32x128xf32>
    %c10 = arith.constant 10 : index
    %c0_65 = arith.constant 0 : index
    %c0_66 = arith.constant 0 : index
    %74 = vector.load %arg5[%c10, %c0_65, %c0_66] : memref<30x128x128xf32, #tpu.memory_space<vmem>>, vector<1x128x128xf32>
    %75 = vector.shape_cast %74 : vector<1x128x128xf32> to vector<128x128xf32>
    %cst_67 = arith.constant dense<0.000000e+00> : vector<32x128xf32>
    %76 = tpu.matmul %72, %75, %cst_67 {dimension_numbers = #tpu.dot_dimension_numbers<[1], [0], [0], [1], [0, 0, 1, 1], [], []>} : vector<32x128xf32>, vector<128x128xf32>, vector<32x128xf32> -> vector<32x128xf32>
    %c11 = arith.constant 11 : index
    %c0_68 = arith.constant 0 : index
    %c0_69 = arith.constant 0 : index
    %77 = vector.load %arg5[%c11, %c0_68, %c0_69] : memref<30x128x128xf32, #tpu.memory_space<vmem>>, vector<1x128x128xf32>
    %78 = vector.shape_cast %77 : vector<1x128x128xf32> to vector<128x128xf32>
    %cst_70 = arith.constant dense<0.000000e+00> : vector<32x128xf32>
    %79 = tpu.matmul %73, %78, %cst_70 {dimension_numbers = #tpu.dot_dimension_numbers<[1], [0], [0], [1], [0, 0, 1, 1], [], []>} : vector<32x128xf32>, vector<128x128xf32>, vector<32x128xf32> -> vector<32x128xf32>
    %80 = arith.addf %76, %79 : vector<32x128xf32>
    %c12 = arith.constant 12 : index
    %c0_71 = arith.constant 0 : index
    %c0_72 = arith.constant 0 : index
    %81 = vector.load %arg5[%c12, %c0_71, %c0_72] : memref<30x128x128xf32, #tpu.memory_space<vmem>>, vector<1x128x128xf32>
    %82 = vector.shape_cast %81 : vector<1x128x128xf32> to vector<128x128xf32>
    %cst_73 = arith.constant dense<0.000000e+00> : vector<32x128xf32>
    %83 = tpu.matmul %30, %82, %cst_73 {dimension_numbers = #tpu.dot_dimension_numbers<[1], [0], [0], [1], [0, 0, 1, 1], [], []>} : vector<32x128xf32>, vector<128x128xf32>, vector<32x128xf32> -> vector<32x128xf32>
    %84 = arith.addf %80, %83 : vector<32x128xf32>
    %c6_74 = arith.constant 6 : index
    %c0_75 = arith.constant 0 : index
    %c0_76 = arith.constant 0 : index
    %85 = vector.load %arg6[%c6_74, %c0_75, %c0_76] : memref<18x1x128xf32, #tpu.memory_space<vmem>>, vector<1x1x128xf32>
    %86 = vector.shape_cast %85 : vector<1x1x128xf32> to vector<1x128xf32>
    %87 = vector.broadcast %86 : vector<1x128xf32> to vector<32x128xf32>
    %88 = arith.addf %84, %87 : vector<32x128xf32>
    %cst_77 = arith.constant 0.000000e+00 : f32
    %89 = vector.broadcast %cst_77 : f32 to vector<32x128xf32>
    %90 = arith.maximumf %88, %89 : vector<32x128xf32>
    %c13 = arith.constant 13 : index
    %c0_78 = arith.constant 0 : index
    %c0_79 = arith.constant 0 : index
    %91 = vector.load %arg5[%c13, %c0_78, %c0_79] : memref<30x128x128xf32, #tpu.memory_space<vmem>>, vector<1x128x128xf32>
    %92 = vector.shape_cast %91 : vector<1x128x128xf32> to vector<128x128xf32>
    %cst_80 = arith.constant dense<0.000000e+00> : vector<32x128xf32>
    %93 = tpu.matmul %90, %92, %cst_80 {dimension_numbers = #tpu.dot_dimension_numbers<[1], [0], [0], [1], [0, 0, 1, 1], [], []>} : vector<32x128xf32>, vector<128x128xf32>, vector<32x128xf32> -> vector<32x128xf32>
    %c7_81 = arith.constant 7 : index
    %c0_82 = arith.constant 0 : index
    %c0_83 = arith.constant 0 : index
    %94 = vector.load %arg6[%c7_81, %c0_82, %c0_83] : memref<18x1x128xf32, #tpu.memory_space<vmem>>, vector<1x1x128xf32>
    %95 = vector.shape_cast %94 : vector<1x1x128xf32> to vector<1x128xf32>
    %96 = vector.broadcast %95 : vector<1x128xf32> to vector<32x128xf32>
    %97 = arith.addf %93, %96 : vector<32x128xf32>
    %c14 = arith.constant 14 : index
    %c0_84 = arith.constant 0 : index
    %c0_85 = arith.constant 0 : index
    %98 = vector.load %arg5[%c14, %c0_84, %c0_85] : memref<30x128x128xf32, #tpu.memory_space<vmem>>, vector<1x128x128xf32>
    %99 = vector.shape_cast %98 : vector<1x128x128xf32> to vector<128x128xf32>
    %cst_86 = arith.constant dense<0.000000e+00> : vector<32x128xf32>
    %100 = tpu.matmul %72, %99, %cst_86 {dimension_numbers = #tpu.dot_dimension_numbers<[1], [0], [0], [1], [0, 0, 1, 1], [], []>} : vector<32x128xf32>, vector<128x128xf32>, vector<32x128xf32> -> vector<32x128xf32>
    %c15 = arith.constant 15 : index
    %c0_87 = arith.constant 0 : index
    %c0_88 = arith.constant 0 : index
    %101 = vector.load %arg5[%c15, %c0_87, %c0_88] : memref<30x128x128xf32, #tpu.memory_space<vmem>>, vector<1x128x128xf32>
    %102 = vector.shape_cast %101 : vector<1x128x128xf32> to vector<128x128xf32>
    %cst_89 = arith.constant dense<0.000000e+00> : vector<32x128xf32>
    %103 = tpu.matmul %97, %102, %cst_89 {dimension_numbers = #tpu.dot_dimension_numbers<[1], [0], [0], [1], [0, 0, 1, 1], [], []>} : vector<32x128xf32>, vector<128x128xf32>, vector<32x128xf32> -> vector<32x128xf32>
    %104 = arith.addf %100, %103 : vector<32x128xf32>
    %c8_90 = arith.constant 8 : index
    %c0_91 = arith.constant 0 : index
    %c0_92 = arith.constant 0 : index
    %105 = vector.load %arg6[%c8_90, %c0_91, %c0_92] : memref<18x1x128xf32, #tpu.memory_space<vmem>>, vector<1x1x128xf32>
    %106 = vector.shape_cast %105 : vector<1x1x128xf32> to vector<1x128xf32>
    %107 = vector.broadcast %106 : vector<1x128xf32> to vector<32x128xf32>
    %108 = arith.addf %104, %107 : vector<32x128xf32>
    %cst_93 = arith.constant 0.000000e+00 : f32
    %109 = vector.broadcast %cst_93 : f32 to vector<32x128xf32>
    %110 = arith.maximumf %108, %109 : vector<32x128xf32>
    %c16 = arith.constant 16 : index
    %c0_94 = arith.constant 0 : index
    %c0_95 = arith.constant 0 : index
    %111 = vector.load %arg5[%c16, %c0_94, %c0_95] : memref<30x128x128xf32, #tpu.memory_space<vmem>>, vector<1x128x128xf32>
    %112 = vector.shape_cast %111 : vector<1x128x128xf32> to vector<128x128xf32>
    %cst_96 = arith.constant dense<0.000000e+00> : vector<32x128xf32>
    %113 = tpu.matmul %110, %112, %cst_96 {dimension_numbers = #tpu.dot_dimension_numbers<[1], [0], [0], [1], [0, 0, 1, 1], [], []>} : vector<32x128xf32>, vector<128x128xf32>, vector<32x128xf32> -> vector<32x128xf32>
    %c9_97 = arith.constant 9 : index
    %c0_98 = arith.constant 0 : index
    %c0_99 = arith.constant 0 : index
    %114 = vector.load %arg6[%c9_97, %c0_98, %c0_99] : memref<18x1x128xf32, #tpu.memory_space<vmem>>, vector<1x1x128xf32>
    %115 = vector.shape_cast %114 : vector<1x1x128xf32> to vector<1x128xf32>
    %116 = vector.broadcast %115 : vector<1x128xf32> to vector<32x128xf32>
    %117 = arith.addf %113, %116 : vector<32x128xf32>
    %cst_100 = arith.constant dense<0.000000e+00> : vector<16x128xf32>
    %118 = tpu.matmul %4, %117, %cst_100 {dimension_numbers = #tpu.dot_dimension_numbers<[1], [0], [0], [1], [0, 0, 1, 1], [], []>} : vector<16x32xf32>, vector<32x128xf32>, vector<16x128xf32> -> vector<16x128xf32>
    %c17 = arith.constant 17 : index
    %c0_101 = arith.constant 0 : index
    %c0_102 = arith.constant 0 : index
    %119 = vector.load %arg5[%c17, %c0_101, %c0_102] : memref<30x128x128xf32, #tpu.memory_space<vmem>>, vector<1x128x128xf32>
    %120 = vector.shape_cast %119 : vector<1x128x128xf32> to vector<128x128xf32>
    %cst_103 = arith.constant dense<0.000000e+00> : vector<16x128xf32>
    %121 = tpu.matmul %71, %120, %cst_103 {dimension_numbers = #tpu.dot_dimension_numbers<[1], [0], [0], [1], [0, 0, 1, 1], [], []>} : vector<16x128xf32>, vector<128x128xf32>, vector<16x128xf32> -> vector<16x128xf32>
    %c18 = arith.constant 18 : index
    %c0_104 = arith.constant 0 : index
    %c0_105 = arith.constant 0 : index
    %122 = vector.load %arg5[%c18, %c0_104, %c0_105] : memref<30x128x128xf32, #tpu.memory_space<vmem>>, vector<1x128x128xf32>
    %123 = vector.shape_cast %122 : vector<1x128x128xf32> to vector<128x128xf32>
    %cst_106 = arith.constant dense<0.000000e+00> : vector<16x128xf32>
    %124 = tpu.matmul %118, %123, %cst_106 {dimension_numbers = #tpu.dot_dimension_numbers<[1], [0], [0], [1], [0, 0, 1, 1], [], []>} : vector<16x128xf32>, vector<128x128xf32>, vector<16x128xf32> -> vector<16x128xf32>
    %125 = arith.addf %121, %124 : vector<16x128xf32>
    %c10_107 = arith.constant 10 : index
    %c0_108 = arith.constant 0 : index
    %c0_109 = arith.constant 0 : index
    %126 = vector.load %arg6[%c10_107, %c0_108, %c0_109] : memref<18x1x128xf32, #tpu.memory_space<vmem>>, vector<1x1x128xf32>
    %127 = vector.shape_cast %126 : vector<1x1x128xf32> to vector<1x128xf32>
    %128 = vector.broadcast %127 : vector<1x128xf32> to vector<16x128xf32>
    %129 = arith.addf %125, %128 : vector<16x128xf32>
    %cst_110 = arith.constant 0.000000e+00 : f32
    %130 = vector.broadcast %cst_110 : f32 to vector<16x128xf32>
    %131 = arith.maximumf %129, %130 : vector<16x128xf32>
    %c19 = arith.constant 19 : index
    %c0_111 = arith.constant 0 : index
    %c0_112 = arith.constant 0 : index
    %132 = vector.load %arg5[%c19, %c0_111, %c0_112] : memref<30x128x128xf32, #tpu.memory_space<vmem>>, vector<1x128x128xf32>
    %133 = vector.shape_cast %132 : vector<1x128x128xf32> to vector<128x128xf32>
    %cst_113 = arith.constant dense<0.000000e+00> : vector<16x128xf32>
    %134 = tpu.matmul %131, %133, %cst_113 {dimension_numbers = #tpu.dot_dimension_numbers<[1], [0], [0], [1], [0, 0, 1, 1], [], []>} : vector<16x128xf32>, vector<128x128xf32>, vector<16x128xf32> -> vector<16x128xf32>
    %c11_114 = arith.constant 11 : index
    %c0_115 = arith.constant 0 : index
    %c0_116 = arith.constant 0 : index
    %135 = vector.load %arg6[%c11_114, %c0_115, %c0_116] : memref<18x1x128xf32, #tpu.memory_space<vmem>>, vector<1x1x128xf32>
    %136 = vector.shape_cast %135 : vector<1x1x128xf32> to vector<1x128xf32>
    %137 = vector.broadcast %136 : vector<1x128xf32> to vector<16x128xf32>
    %138 = arith.addf %134, %137 : vector<16x128xf32>
    %cst_117 = arith.constant dense<0.000000e+00> : vector<32x128xf32>
    %139 = tpu.matmul %2, %138, %cst_117 {dimension_numbers = #tpu.dot_dimension_numbers<[1], [0], [0], [1], [0, 0, 1, 1], [], []>} : vector<32x16xf32>, vector<16x128xf32>, vector<32x128xf32> -> vector<32x128xf32>
    %cst_118 = arith.constant dense<0.000000e+00> : vector<32x128xf32>
    %140 = tpu.matmul %3, %138, %cst_118 {dimension_numbers = #tpu.dot_dimension_numbers<[1], [0], [0], [1], [0, 0, 1, 1], [], []>} : vector<32x16xf32>, vector<16x128xf32>, vector<32x128xf32> -> vector<32x128xf32>
    %c20 = arith.constant 20 : index
    %c0_119 = arith.constant 0 : index
    %c0_120 = arith.constant 0 : index
    %141 = vector.load %arg5[%c20, %c0_119, %c0_120] : memref<30x128x128xf32, #tpu.memory_space<vmem>>, vector<1x128x128xf32>
    %142 = vector.shape_cast %141 : vector<1x128x128xf32> to vector<128x128xf32>
    %cst_121 = arith.constant dense<0.000000e+00> : vector<32x128xf32>
    %143 = tpu.matmul %139, %142, %cst_121 {dimension_numbers = #tpu.dot_dimension_numbers<[1], [0], [0], [1], [0, 0, 1, 1], [], []>} : vector<32x128xf32>, vector<128x128xf32>, vector<32x128xf32> -> vector<32x128xf32>
    %c21 = arith.constant 21 : index
    %c0_122 = arith.constant 0 : index
    %c0_123 = arith.constant 0 : index
    %144 = vector.load %arg5[%c21, %c0_122, %c0_123] : memref<30x128x128xf32, #tpu.memory_space<vmem>>, vector<1x128x128xf32>
    %145 = vector.shape_cast %144 : vector<1x128x128xf32> to vector<128x128xf32>
    %cst_124 = arith.constant dense<0.000000e+00> : vector<32x128xf32>
    %146 = tpu.matmul %140, %145, %cst_124 {dimension_numbers = #tpu.dot_dimension_numbers<[1], [0], [0], [1], [0, 0, 1, 1], [], []>} : vector<32x128xf32>, vector<128x128xf32>, vector<32x128xf32> -> vector<32x128xf32>
    %147 = arith.addf %143, %146 : vector<32x128xf32>
    %c22 = arith.constant 22 : index
    %c0_125 = arith.constant 0 : index
    %c0_126 = arith.constant 0 : index
    %148 = vector.load %arg5[%c22, %c0_125, %c0_126] : memref<30x128x128xf32, #tpu.memory_space<vmem>>, vector<1x128x128xf32>
    %149 = vector.shape_cast %148 : vector<1x128x128xf32> to vector<128x128xf32>
    %cst_127 = arith.constant dense<0.000000e+00> : vector<32x128xf32>
    %150 = tpu.matmul %97, %149, %cst_127 {dimension_numbers = #tpu.dot_dimension_numbers<[1], [0], [0], [1], [0, 0, 1, 1], [], []>} : vector<32x128xf32>, vector<128x128xf32>, vector<32x128xf32> -> vector<32x128xf32>
    %151 = arith.addf %147, %150 : vector<32x128xf32>
    %c12_128 = arith.constant 12 : index
    %c0_129 = arith.constant 0 : index
    %c0_130 = arith.constant 0 : index
    %152 = vector.load %arg6[%c12_128, %c0_129, %c0_130] : memref<18x1x128xf32, #tpu.memory_space<vmem>>, vector<1x1x128xf32>
    %153 = vector.shape_cast %152 : vector<1x1x128xf32> to vector<1x128xf32>
    %154 = vector.broadcast %153 : vector<1x128xf32> to vector<32x128xf32>
    %155 = arith.addf %151, %154 : vector<32x128xf32>
    %cst_131 = arith.constant 0.000000e+00 : f32
    %156 = vector.broadcast %cst_131 : f32 to vector<32x128xf32>
    %157 = arith.maximumf %155, %156 : vector<32x128xf32>
    %c23 = arith.constant 23 : index
    %c0_132 = arith.constant 0 : index
    %c0_133 = arith.constant 0 : index
    %158 = vector.load %arg5[%c23, %c0_132, %c0_133] : memref<30x128x128xf32, #tpu.memory_space<vmem>>, vector<1x128x128xf32>
    %159 = vector.shape_cast %158 : vector<1x128x128xf32> to vector<128x128xf32>
    %cst_134 = arith.constant dense<0.000000e+00> : vector<32x128xf32>
    %160 = tpu.matmul %157, %159, %cst_134 {dimension_numbers = #tpu.dot_dimension_numbers<[1], [0], [0], [1], [0, 0, 1, 1], [], []>} : vector<32x128xf32>, vector<128x128xf32>, vector<32x128xf32> -> vector<32x128xf32>
    %c13_135 = arith.constant 13 : index
    %c0_136 = arith.constant 0 : index
    %c0_137 = arith.constant 0 : index
    %161 = vector.load %arg6[%c13_135, %c0_136, %c0_137] : memref<18x1x128xf32, #tpu.memory_space<vmem>>, vector<1x1x128xf32>
    %162 = vector.shape_cast %161 : vector<1x1x128xf32> to vector<1x128xf32>
    %163 = vector.broadcast %162 : vector<1x128xf32> to vector<32x128xf32>
    %164 = arith.addf %160, %163 : vector<32x128xf32>
    %c0_138 = arith.constant 0 : index
    %c0_139 = arith.constant 0 : index
    %165 = vector.load %arg7[%c0_138, %c0_139] : memref<32x128xf32, #tpu.memory_space<vmem>>, vector<32x128xf32>
    tpu.vector_store %arg7[%c0_138, %c0_139], %164 {strides = array<i32>} : memref<32x128xf32, #tpu.memory_space<vmem>>, vector<32x128xf32>,
    return
  }
}

</mosaic_0001>

<llo_original>
// kernel: tpu_custom_call.1
$region0: #{tpu_custom_call.1}
  #allocation0 [shape = 'u32[]', space=smem, size = 0x4, offset = 0x4, fixed_abs, tag = 'smem constant byte address 0x4 - core index']
  #allocation1 [shape = 'u32[144,128]{1,0:T(1,128)}', space=vmem, size = 0x12000, scoped, tag = 'internal scratch']
  %s0 = inlined_call_operand.hbm [shape: f32[16,128], index: 0, kind: input, shape index: {}]
  %s1 = inlined_call_operand.hbm [shape: f32[32,128], index: 1, kind: input, shape index: {}]
  %s2 = inlined_call_operand.vmem [shape: f32[32,16], index: 2, kind: input, shape index: {}]
  %s3 = inlined_call_operand.vmem [shape: f32[32,16], index: 3, kind: input, shape index: {}]
  %s4 = inlined_call_operand.hbm [shape: f32[16,32], index: 4, kind: input, shape index: {}]
  %s5 = inlined_call_operand.hbm [shape: f32[30,128,128], index: 5, kind: input, shape index: {}]
  %s6 = inlined_call_operand.hbm [shape: f32[18,1,128], index: 6, kind: input, shape index: {}]
  %s7 = inlined_call_operand.hbm [shape: f32[32,128], index: 7, kind: output, shape index: {}]
  %s8 = sld [smem:[#allocation0]]
  $region58: #{tpu_custom_call.1} parent=0
    _
  %s10 = ssub.s32 1, %s8
  %s11 = scalar_select 0, %s10, %s8
  $region1: #{tpu_custom_call.1} parent=0
    #allocation2 [shape = 'u8[8192]{0}', space=vmem, size = 0x2000, scoped, tag = 'input window, operand 0, single buffered']
    #allocation3 [shape = 's32[1]{0}', space=sflag, size = 0x4, scoped, tag = 'scoped memory for tpu_custom_call.1']
    #allocation4 [shape = 's32[1]{0}', space=sflag, size = 0x4, scoped, tag = 'scoped memory for tpu_custom_call.1']
    #allocation5 [shape = 'u8[16384]{0}', space=vmem, size = 0x4000, scoped, tag = 'input window, operand 1, single buffered']
    #allocation6 [shape = 's32[1]{0}', space=sflag, size = 0x4, scoped, tag = 'scoped memory for tpu_custom_call.1']
    #allocation7 [shape = 'u8[8192]{0}', space=vmem, size = 0x2000, scoped, tag = 'input window, operand 4, single buffered']
    #allocation8 [shape = 'u8[1966080]{0}', space=vmem, size = 0x1e0000, scoped, tag = 'input window, operand 5, single buffered']
    #allocation9 [shape = 's32[1]{0}', space=sflag, size = 0x4, scoped, tag = 'scoped memory for tpu_custom_call.1']
    #allocation10 [shape = 'u8[9216]{0}', space=vmem, size = 0x2400, scoped, tag = 'input window, operand 6, single buffered']
    #allocation11 [shape = 'u8[16384]{0}', space=vmem, size = 0x4000, scoped, tag = 'output window, operand 0, single buffered']
    %12 = vsyncpa [#allocation3], 0
    %13 = vsyncpa [#allocation6], 0
    %14 = vsyncpa [#allocation9], 0
    %15 = vsyncpa [#allocation4], 0
    // Predicated region
    $region2: #{tpu_custom_call.1} parent=1 // pred_check
      _
    $region3: #{tpu_custom_call.1} parent=1 // pred_check_branch
      %17 = sbr.rel (0) target = $region5
    $region4: #{tpu_custom_call.1} parent=1 // pred_region
      %s19 = ssub.s32 256, 256
      %20 = vsyncadd [#allocation3], %s19
      %s21 = sshll.u32 [#allocation2], 4
      %s22 = int_to_ptr.vmem [resolvable:$true] %s21
      %27 = dma.hbm_to_vmem [thread:$0]  %s0, 256, %s22, [#allocation3], 128, 128, 8
    $region5: #{tpu_custom_call.1} parent=1 // pred_fallthru
      _
    // Predicated region
    $region6: #{tpu_custom_call.1} parent=1 // pred_check
      _
    $region7: #{tpu_custom_call.1} parent=1 // pred_check_branch
      %29 = sbr.rel (0) target = $region9
    $region8: #{tpu_custom_call.1} parent=1 // pred_region
      %s31 = ssub.s32 512, 512
      %32 = vsyncadd [#allocation6], %s31
      %s33 = sshll.u32 [#allocation5], 4
      %s34 = int_to_ptr.vmem [resolvable:$true] %s33
      %39 = dma.hbm_to_vmem [thread:$0]  %s1, 512, %s34, [#allocation6], 128, 128, 8
    $region9: #{tpu_custom_call.1} parent=1 // pred_fallthru
      _
    // Predicated region
    $region10: #{tpu_custom_call.1} parent=1 // pred_check
      _
    $region11: #{tpu_custom_call.1} parent=1 // pred_check_branch
      %41 = sbr.rel (0) target = $region13
    $region12: #{tpu_custom_call.1} parent=1 // pred_region
      _
    $region13: #{tpu_custom_call.1} parent=1 // pred_fallthru
      _
    // Predicated region
    $region14: #{tpu_custom_call.1} parent=1 // pred_check
      _
    $region15: #{tpu_custom_call.1} parent=1 // pred_check_branch
      %43 = sbr.rel (0) target = $region17
    $region16: #{tpu_custom_call.1} parent=1 // pred_region
      _
    $region17: #{tpu_custom_call.1} parent=1 // pred_fallthru
      _
    // Predicated region
    $region18: #{tpu_custom_call.1} parent=1 // pred_check
      _
    $region19: #{tpu_custom_call.1} parent=1 // pred_check_branch
      %45 = sbr.rel (0) target = $region21
    $region20: #{tpu_custom_call.1} parent=1 // pred_region
      %s47 = ssub.s32 256, 256
      %48 = vsyncadd [#allocation6], %s47
      %s49 = sshll.u32 [#allocation7], 4
      %s50 = int_to_ptr.vmem [resolvable:$true] %s49
      %55 = dma.hbm_to_vmem [thread:$0]  %s4, 256, %s50, [#allocation6], 128, 128, 8
    $region21: #{tpu_custom_call.1} parent=1 // pred_fallthru
      _
    // Predicated region
    $region22: #{tpu_custom_call.1} parent=1 // pred_check
      _
    $region23: #{tpu_custom_call.1} parent=1 // pred_check_branch
      %57 = sbr.rel (0) target = $region25
    $region24: #{tpu_custom_call.1} parent=1 // pred_region
      %s59 = ssub.s32 61440, 61440
      %60 = vsyncadd [#allocation9], %s59
      %s61 = sshll.u32 [#allocation8], 4
      %s62 = int_to_ptr.vmem [resolvable:$true] %s61
      %67 = dma.hbm_to_vmem [thread:$0]  %s5, 61440, %s62, [#allocation9], 128, 128, 8
    $region25: #{tpu_custom_call.1} parent=1 // pred_fallthru
      _
    // Predicated region
    $region26: #{tpu_custom_call.1} parent=1 // pred_check
      _
    $region27: #{tpu_custom_call.1} parent=1 // pred_check_branch
      %69 = sbr.rel (0) target = $region29
    $region28: #{tpu_custom_call.1} parent=1 // pred_region
      %s71 = ssub.s32 288, 288
      %72 = vsyncadd [#allocation9], %s71
      %s73 = sshll.u32 [#allocation10], 4
      %s74 = int_to_ptr.vmem [resolvable:$true] %s73
      %79 = dma.hbm_to_vmem [thread:$0]  %s6, 288, %s74, [#allocation9], 16, 16, 1
    $region29: #{tpu_custom_call.1} parent=1 // pred_fallthru
      _
    // Predicated region
    $region30: #{tpu_custom_call.1} parent=1 // pred_check
      _
    $region31: #{tpu_custom_call.1} parent=1 // pred_check_branch
      %81 = sbr.rel (0) target = $region33
    $region32: #{tpu_custom_call.1} parent=1 // pred_region
      %82 = dma.done [#allocation3], 256
    $region33: #{tpu_custom_call.1} parent=1 // pred_fallthru
      _
    // Predicated region
    $region34: #{tpu_custom_call.1} parent=1 // pred_check
      _
    $region35: #{tpu_custom_call.1} parent=1 // pred_check_branch
      %84 = sbr.rel (0) target = $region37
    $region36: #{tpu_custom_call.1} parent=1 // pred_region
      %85 = dma.done [#allocation6], 512
    $region37: #{tpu_custom_call.1} parent=1 // pred_fallthru
      _
    // Predicated region
    $region38: #{tpu_custom_call.1} parent=1 // pred_check
      _
    $region39: #{tpu_custom_call.1} parent=1 // pred_check_branch
      %87 = sbr.rel (0) target = $region41
    $region40: #{tpu_custom_call.1} parent=1 // pred_region
      %88 = dma.done [#allocation6], 256
    $region41: #{tpu_custom_call.1} parent=1 // pred_fallthru
      _
    // Predicated region
    $region42: #{tpu_custom_call.1} parent=1 // pred_check
      _
    $region43: #{tpu_custom_call.1} parent=1 // pred_check_branch
      %90 = sbr.rel (0) target = $region45
    $region44: #{tpu_custom_call.1} parent=1 // pred_region
      %91 = dma.done [#allocation9], 61440
    $region45: #{tpu_custom_call.1} parent=1 // pred_fallthru
      _
    // Predicated region
    $region46: #{tpu_custom_call.1} parent=1 // pred_check
      _
    $region47: #{tpu_custom_call.1} parent=1 // pred_check_branch
      %93 = sbr.rel (0) target = $region49
    $region48: #{tpu_custom_call.1} parent=1 // pred_region
      %94 = dma.done [#allocation9], 288
    $region49: #{tpu_custom_call.1} parent=1 // pred_fallthru
      _
    %v95 = vld [vmem:[#allocation2] sm:$0xff]
    %v96 = vld [vmem:[#allocation2 + $0x8] sm:$0xff]
    %v97 = vld [vmem:[#allocation5] sm:$0xff]
    %v98 = vld [vmem:[#allocation5 + $0x8] sm:$0xff]
    %v99 = vld [vmem:[#allocation5 + $0x10] sm:$0xff]
    %v100 = vld [vmem:[#allocation5 + $0x18] sm:$0xff]
    %v101 = vld [vmem:[%s2] sm:$0xff]
    %v102 = vld [vmem:[%s2 + $0x8] sm:$0xff]
    %v103 = vld [vmem:[%s2 + $0x10] sm:$0xff]
    %v104 = vld [vmem:[%s2 + $0x18] sm:$0xff]
    %v105 = vld [vmem:[%s3] sm:$0xff]
    %v106 = vld [vmem:[%s3 + $0x8] sm:$0xff]
    %v107 = vld [vmem:[%s3 + $0x10] sm:$0xff]
    %v108 = vld [vmem:[%s3 + $0x18] sm:$0xff]
    %v109 = vld [vmem:[#allocation7] sm:$0xff]
    %v110 = vld [vmem:[#allocation7 + $0x8] sm:$0xff]
    %vm111 = vcmask 130048
    %v113 = vsel %vm111, %v101, 0
    %v116 = vsel %vm111, %v102, 0
    %v119 = vsel %vm111, %v103, 0
    %v122 = vsel %vm111, %v104, 0
    %124 = vmatprep.subr.mxu0 0.0
    %125 = vmatpush1.msra.mxu0 %v95
    %126 = vmatprep.subr.mxu0 0.0
    %127 = vmatpush1.msra.mxu0 %v96
    %128 = vmatprep.subr.mxu0 0.0
    %129 = vmatpush1.msra.mxu0 0.0
    %130 = vmatprep.subr.mxu0 0.0
    %131 = vmatpush1.msra.mxu0 0.0
    %132 = vmatprep.subr.mxu0 0.0
    %133 = vmatpush1.msra.mxu0 0.0
    %134 = vmatprep.subr.mxu0 0.0
    %135 = vmatpush1.msra.mxu0 0.0
    %136 = vmatprep.subr.mxu0 0.0
    %137 = vmatpush1.msra.mxu0 0.0
    %138 = vmatprep.subr.mxu0 0.0
    %139 = vmatpush1.msra.mxu0 0.0
    %140 = vmatprep.subr.mxu0 0.0
    %141 = vmatpush1.msra.mxu0 0.0
    %142 = vmatprep.subr.mxu0 0.0
    %143 = vmatpush1.msra.mxu0 0.0
    %144 = vmatprep.subr.mxu0 0.0
    %145 = vmatpush1.msra.mxu0 0.0
    %146 = vmatprep.subr.mxu0 0.0
    %147 = vmatpush1.msra.mxu0 0.0
    %148 = vmatprep.subr.mxu0 0.0
    %149 = vmatpush1.msra.mxu0 0.0
    %150 = vmatprep.subr.mxu0 0.0
    %151 = vmatpush1.msra.mxu0 0.0
    %152 = vmatprep.subr.mxu0 0.0
    %153 = vmatpush1.msra.mxu0 0.0
    %154 = vmatprep.subr.mxu0 0.0
    %155 = vmatpush1.msra.mxu0 0.0
    %156 = vmatprep.subr.mxu0 0.0
    %157 = vmatpush1.msra.mxu0 0.0
    %158 = vmatprep.subr.mxu0 0.0
    %159 = vmatpush1.msra.mxu0 0.0
    %160 = vmatprep.subr.mxu0 0.0
    %161 = vmatpush1.msra.mxu0 0.0
    %162 = vmatprep.subr.mxu0 0.0
    %163 = vmatpush1.msra.mxu0 0.0
    %164 = vmatprep.subr.mxu0 0.0
    %165 = vmatpush1.msra.mxu0 0.0
    %166 = vmatprep.subr.mxu0 0.0
    %167 = vmatpush1.msra.mxu0 0.0
    %168 = vmatprep.subr.mxu0 0.0
    %169 = vmatpush1.msra.mxu0 0.0
    %170 = vmatprep.subr.mxu0 0.0
    %171 = vmatpush1.msra.mxu0 0.0
    %172 = vmatprep.subr.mxu0 0.0
    %173 = vmatpush1.msra.mxu0 0.0
    %174 = vmatprep.subr.mxu0 0.0
    %175 = vmatpush1.msra.mxu0 0.0
    %176 = vmatprep.subr.mxu0 0.0
    %177 = vmatpush1.msra.mxu0 0.0
    %178 = vmatprep.subr.mxu0 0.0
    %179 = vmatpush1.msra.mxu0 0.0
    %180 = vmatprep.subr.mxu0 0.0
    %181 = vmatpush1.msra.mxu0 0.0
    %182 = vmatprep.subr.mxu0 0.0
    %183 = vmatpush1.msra.mxu0 0.0
    %184 = vmatprep.subr.mxu0 0.0
    %185 = vmatpush1.msra.mxu0 0.0
    %186 = vmatprep.subr.mxu0 0.0
    %187 = vmatpush1.msra.mxu0 0.0
    %188 = vmatprep.mubr.f32.mxu0 0.0
    %189 = vmatmul.mubr.f32.gmra.mrb[0].mxu0 %v113
    %v190 = vpop.f32.mrb[0].mxu0
    %v191 = vadd.f32 0.0, %v190
    %v192 = vpop.f32.mrb[0].mxu0
    %193 = vmatprep.mubr.f32.mxu0 0.0
    %194 = vmatmul.mubr.f32.gmra.mrb[0].mxu0 %v116
    %v195 = vpop.f32.mrb[0].mxu0
    %v196 = vadd.f32 0.0, %v195
    %v197 = vpop.f32.mrb[0].mxu0
    %198 = vmatprep.mubr.f32.mxu0 0.0
    %199 = vmatmul.mubr.f32.gmra.mrb[0].mxu0 %v119
    %v200 = vpop.f32.mrb[0].mxu0
    %v201 = vadd.f32 0.0, %v200
    %v202 = vpop.f32.mrb[0].mxu0
    %203 = vmatprep.mubr.f32.mxu0 0.0
    %204 = vmatmul.mubr.f32.gmra.mrb[0].mxu0 %v122
    %v205 = vpop.f32.mrb[0].mxu0
    %v206 = vadd.f32 0.0, %v205
    %v207 = vpop.f32.mrb[0].mxu0
    %208 = vdwg.mxu0
    %v210 = vsel %vm111, %v105, 0
    %v213 = vsel %vm111, %v106, 0
    %v216 = vsel %vm111, %v107, 0
    %v219 = vsel %vm111, %v108, 0
    %221 = vmatprep.subr.mxu0 0.0
    %222 = vmatpush1.msra.mxu0 %v95
    %223 = vmatprep.subr.mxu0 0.0
    %224 = vmatpush1.msra.mxu0 %v96
    %225 = vmatprep.subr.mxu0 0.0
    %226 = vmatpush1.msra.mxu0 0.0
    %227 = vmatprep.subr.mxu0 0.0
    %228 = vmatpush1.msra.mxu0 0.0
    %229 = vmatprep.subr.mxu0 0.0
    %230 = vmatpush1.msra.mxu0 0.0
    %231 = vmatprep.subr.mxu0 0.0
    %232 = vmatpush1.msra.mxu0 0.0
    %233 = vmatprep.subr.mxu0 0.0
    %234 = vmatpush1.msra.mxu0 0.0
    %235 = vmatprep.subr.mxu0 0.0
    %236 = vmatpush1.msra.mxu0 0.0
    %237 = vmatprep.subr.mxu0 0.0
    %238 = vmatpush1.msra.mxu0 0.0
    %239 = vmatprep.subr.mxu0 0.0
    %240 = vmatpush1.msra.mxu0 0.0
    %241 = vmatprep.subr.mxu0 0.0
    %242 = vmatpush1.msra.mxu0 0.0
    %243 = vmatprep.subr.mxu0 0.0
    %244 = vmatpush1.msra.mxu0 0.0
    %245 = vmatprep.subr.mxu0 0.0
    %246 = vmatpush1.msra.mxu0 0.0
    %247 = vmatprep.subr.mxu0 0.0
    %248 = vmatpush1.msra.mxu0 0.0
    %249 = vmatprep.subr.mxu0 0.0
    %250 = vmatpush1.msra.mxu0 0.0
    %251 = vmatprep.subr.mxu0 0.0
    %252 = vmatpush1.msra.mxu0 0.0
    %253 = vmatprep.subr.mxu0 0.0
    %254 = vmatpush1.msra.mxu0 0.0
    %255 = vmatprep.subr.mxu0 0.0
    %256 = vmatpush1.msra.mxu0 0.0
    %257 = vmatprep.subr.mxu0 0.0
    %258 = vmatpush1.msra.mxu0 0.0
    %259 = vmatprep.subr.mxu0 0.0
    %260 = vmatpush1.msra.mxu0 0.0
    %261 = vmatprep.subr.mxu0 0.0
    %262 = vmatpush1.msra.mxu0 0.0
    %263 = vmatprep.subr.mxu0 0.0
    %264 = vmatpush1.msra.mxu0 0.0
    %265 = vmatprep.subr.mxu0 0.0
    %266 = vmatpush1.msra.mxu0 0.0
    %267 = vmatprep.subr.mxu0 0.0
    %268 = vmatpush1.msra.mxu0 0.0
    %269 = vmatprep.subr.mxu0 0.0
    %270 = vmatpush1.msra.mxu0 0.0
    %271 = vmatprep.subr.mxu0 0.0
    %272 = vmatpush1.msra.mxu0 0.0
    %273 = vmatprep.subr.mxu0 0.0
    %274 = vmatpush1.msra.mxu0 0.0
    %275 = vmatprep.subr.mxu0 0.0
    %276 = vmatpush1.msra.mxu0 0.0
    %277 = vmatprep.subr.mxu0 0.0
    %278 = vmatpush1.msra.mxu0 0.0
    %279 = vmatprep.subr.mxu0 0.0
    %280 = vmatpush1.msra.mxu0 0.0
    %281 = vmatprep.subr.mxu0 0.0
    %282 = vmatpush1.msra.mxu0 0.0
    %283 = vmatprep.subr.mxu0 0.0
    %284 = vmatpush1.msra.mxu0 0.0
    %285 = vmatprep.mubr.f32.mxu0 0.0
    %286 = vmatmul.mubr.f32.gmra.mrb[0].mxu0 %v210
    %v287 = vpop.f32.mrb[0].mxu0
    %v288 = vadd.f32 0.0, %v287
    %v289 = vpop.f32.mrb[0].mxu0
    %290 = vmatprep.mubr.f32.mxu0 0.0
    %291 = vmatmul.mubr.f32.gmra.mrb[0].mxu0 %v213
    %v292 = vpop.f32.mrb[0].mxu0
    %v293 = vadd.f32 0.0, %v292
    %v294 = vpop.f32.mrb[0].mxu0
    %295 = vmatprep.mubr.f32.mxu0 0.0
    %296 = vmatmul.mubr.f32.gmra.mrb[0].mxu0 %v216
    %v297 = vpop.f32.mrb[0].mxu0
    %v298 = vadd.f32 0.0, %v297
    %v299 = vpop.f32.mrb[0].mxu0
    %300 = vmatprep.mubr.f32.mxu0 0.0
    %301 = vmatmul.mubr.f32.gmra.mrb[0].mxu0 %v219
    %v302 = vpop.f32.mrb[0].mxu0
    %v303 = vadd.f32 0.0, %v302
    %v304 = vpop.f32.mrb[0].mxu0
    %305 = vdwg.mxu0
    %v306 = vld [vmem:[#allocation8] sm:$0xff]
    %v307 = vld [vmem:[#allocation8 + $0x8] sm:$0xff]
    %v308 = vld [vmem:[#allocation8 + $0x10] sm:$0xff]
    %v309 = vld [vmem:[#allocation8 + $0x18] sm:$0xff]
    %v310 = vld [vmem:[#allocation8 + $0x20] sm:$0xff]
    %v311 = vld [vmem:[#allocation8 + $0x28] sm:$0xff]
    %v312 = vld [vmem:[#allocation8 + $0x30] sm:$0xff]
    %v313 = vld [vmem:[#allocation8 + $0x38] sm:$0xff]
    %v314 = vld [vmem:[#allocation8 + $0x40] sm:$0xff]
    %v315 = vld [vmem:[#allocation8 + $0x48] sm:$0xff]
    %v316 = vld [vmem:[#allocation8 + $0x50] sm:$0xff]
    %v317 = vld [vmem:[#allocation8 + $0x58] sm:$0xff]
    %v318 = vld [vmem:[#allocation8 + $0x60] sm:$0xff]
    %v319 = vld [vmem:[#allocation8 + $0x68] sm:$0xff]
    %v320 = vld [vmem:[#allocation8 + $0x70] sm:$0xff]
    %v321 = vld [vmem:[#allocation8 + $0x78] sm:$0xff]
    %s322 = scalar_lea.vmem [#allocation8], 128
    %v323 = vld [vmem:[%s322] sm:$0xff]
    %v324 = vld [vmem:[%s322 + $0x8] sm:$0xff]
    %v325 = vld [vmem:[%s322 + $0x10] sm:$0xff]
    %v326 = vld [vmem:[%s322 + $0x18] sm:$0xff]
    %v327 = vld [vmem:[%s322 + $0x20] sm:$0xff]
    %v328 = vld [vmem:[%s322 + $0x28] sm:$0xff]
    %v329 = vld [vmem:[%s322 + $0x30] sm:$0xff]
    %v330 = vld [vmem:[%s322 + $0x38] sm:$0xff]
    %v331 = vld [vmem:[%s322 + $0x40] sm:$0xff]
    %v332 = vld [vmem:[%s322 + $0x48] sm:$0xff]
    %v333 = vld [vmem:[%s322 + $0x50] sm:$0xff]
    %v334 = vld [vmem:[%s322 + $0x58] sm:$0xff]
    %v335 = vld [vmem:[%s322 + $0x60] sm:$0xff]
    %v336 = vld [vmem:[%s322 + $0x68] sm:$0xff]
    %v337 = vld [vmem:[%s322 + $0x70] sm:$0xff]
    %v338 = vld [vmem:[%s322 + $0x78] sm:$0xff]
    %339 = vmatprep.subr.mxu0 0.0
    %340 = vmatpush1.msra.mxu0 %v323
    %341 = vmatprep.subr.mxu0 0.0
    %342 = vmatpush1.msra.mxu0 %v324
    %343 = vmatprep.subr.mxu0 0.0
    %344 = vmatpush1.msra.mxu0 %v325
    %345 = vmatprep.subr.mxu0 0.0
    %346 = vmatpush1.msra.mxu0 %v326
    %347 = vmatprep.subr.mxu0 0.0
    %348 = vmatpush1.msra.mxu0 %v327
    %349 = vmatprep.subr.mxu0 0.0
    %350 = vmatpush1.msra.mxu0 %v328
    %351 = vmatprep.subr.mxu0 0.0
    %352 = vmatpush1.msra.mxu0 %v329
    %353 = vmatprep.subr.mxu0 0.0
    %354 = vmatpush1.msra.mxu0 %v330
    %355 = vmatprep.subr.mxu0 0.0
    %356 = vmatpush1.msra.mxu0 %v331
    %357 = vmatprep.subr.mxu0 0.0
    %358 = vmatpush1.msra.mxu0 %v332
    %359 = vmatprep.subr.mxu0 0.0
    %360 = vmatpush1.msra.mxu0 %v333
    %361 = vmatprep.subr.mxu0 0.0
    %362 = vmatpush1.msra.mxu0 %v334
    %363 = vmatprep.subr.mxu0 0.0
    %364 = vmatpush1.msra.mxu0 %v335
    %365 = vmatprep.subr.mxu0 0.0
    %366 = vmatpush1.msra.mxu0 %v336
    %367 = vmatprep.subr.mxu0 0.0
    %368 = vmatpush1.msra.mxu0 %v337
    %369 = vmatprep.subr.mxu0 0.0
    %370 = vmatpush1.msra.mxu0 %v338
    %371 = vmatprep.subr.mxu0 0.0
    %372 = vmatpush1.msra.mxu0 0.0
    %373 = vmatprep.subr.mxu0 0.0
    %374 = vmatpush1.msra.mxu0 0.0
    %375 = vmatprep.subr.mxu0 0.0
    %376 = vmatpush1.msra.mxu0 0.0
    %377 = vmatprep.subr.mxu0 0.0
    %378 = vmatpush1.msra.mxu0 0.0
    %379 = vmatprep.subr.mxu0 0.0
    %380 = vmatpush1.msra.mxu0 0.0
    %381 = vmatprep.subr.mxu0 0.0
    %382 = vmatpush1.msra.mxu0 0.0
    %383 = vmatprep.subr.mxu0 0.0
    %384 = vmatpush1.msra.mxu0 0.0
    %385 = vmatprep.subr.mxu0 0.0
    %386 = vmatpush1.msra.mxu0 0.0
    %387 = vmatprep.subr.mxu0 0.0
    %388 = vmatpush1.msra.mxu0 0.0
    %389 = vmatprep.subr.mxu0 0.0
    %390 = vmatpush1.msra.mxu0 0.0
    %391 = vmatprep.subr.mxu0 0.0
    %392 = vmatpush1.msra.mxu0 0.0
    %393 = vmatprep.subr.mxu0 0.0
    %394 = vmatpush1.msra.mxu0 0.0
    %395 = vmatprep.subr.mxu0 0.0
    %396 = vmatpush1.msra.mxu0 0.0
    %397 = vmatprep.subr.mxu0 0.0
    %398 = vmatpush1.msra.mxu0 0.0
    %399 = vmatprep.subr.mxu0 0.0
    %400 = vmatpush1.msra.mxu0 0.0
    %401 = vmatprep.subr.mxu0 0.0
    %402 = vmatpush1.msra.mxu0 0.0
    %403 = vmatprep.mubr.f32.mxu0 0.0
    %404 = vmatmul.mubr.f32.gmra.mrb[0].mxu0 %v288
    %v405 = vpop.f32.mrb[0].mxu0
    %v406 = vadd.f32 0.0, %v405
    %v407 = vpop.f32.mrb[0].mxu0
    %408 = vmatprep.mubr.f32.mxu0 0.0
    %409 = vmatmul.mubr.f32.gmra.mrb[0].mxu0 %v293
    %v410 = vpop.f32.mrb[0].mxu0
    %v411 = vadd.f32 0.0, %v410
    %v412 = vpop.f32.mrb[0].mxu0
    %413 = vmatprep.mubr.f32.mxu0 0.0
    %414 = vmatmul.mubr.f32.gmra.mrb[0].mxu0 %v298
    %v415 = vpop.f32.mrb[0].mxu0
    %v416 = vadd.f32 0.0, %v415
    %v417 = vpop.f32.mrb[0].mxu0
    %418 = vmatprep.mubr.f32.mxu0 0.0
    %419 = vmatmul.mubr.f32.gmra.mrb[0].mxu0 %v303
    %v420 = vpop.f32.mrb[0].mxu0
    %v421 = vadd.f32 0.0, %v420
    %v422 = vpop.f32.mrb[0].mxu0
    %423 = vdwg.mxu0
    %424 = vmatprep.subr.mxu0 0.0
    %425 = vmatpush1.msra.mxu0 %v306
    %426 = vmatprep.subr.mxu0 0.0
    %427 = vmatpush1.msra.mxu0 %v307
    %428 = vmatprep.subr.mxu0 0.0
    %429 = vmatpush1.msra.mxu0 %v308
    %430 = vmatprep.subr.mxu0 0.0
    %431 = vmatpush1.msra.mxu0 %v309
    %432 = vmatprep.subr.mxu0 0.0
    %433 = vmatpush1.msra.mxu0 %v310
    %434 = vmatprep.subr.mxu0 0.0
    %435 = vmatpush1.msra.mxu0 %v311
    %436 = vmatprep.subr.mxu0 0.0
    %437 = vmatpush1.msra.mxu0 %v312
    %438 = vmatprep.subr.mxu0 0.0
    %439 = vmatpush1.msra.mxu0 %v313
    %440 = vmatprep.subr.mxu0 0.0
    %441 = vmatpush1.msra.mxu0 %v314
    %442 = vmatprep.subr.mxu0 0.0
    %443 = vmatpush1.msra.mxu0 %v315
    %444 = vmatprep.subr.mxu0 0.0
    %445 = vmatpush1.msra.mxu0 %v316
    %446 = vmatprep.subr.mxu0 0.0
    %447 = vmatpush1.msra.mxu0 %v317
    %448 = vmatprep.subr.mxu0 0.0
    %449 = vmatpush1.msra.mxu0 %v318
    %450 = vmatprep.subr.mxu0 0.0
    %451 = vmatpush1.msra.mxu0 %v319
    %452 = vmatprep.subr.mxu0 0.0
    %453 = vmatpush1.msra.mxu0 %v320
    %454 = vmatprep.subr.mxu0 0.0
    %455 = vmatpush1.msra.mxu0 %v321
    %456 = vmatprep.subr.mxu0 0.0
    %457 = vmatpush1.msra.mxu0 0.0
    %458 = vmatprep.subr.mxu0 0.0
    %459 = vmatpush1.msra.mxu0 0.0
    %460 = vmatprep.subr.mxu0 0.0
    %461 = vmatpush1.msra.mxu0 0.0
    %462 = vmatprep.subr.mxu0 0.0
    %463 = vmatpush1.msra.mxu0 0.0
    %464 = vmatprep.subr.mxu0 0.0
    %465 = vmatpush1.msra.mxu0 0.0
    %466 = vmatprep.subr.mxu0 0.0
    %467 = vmatpush1.msra.mxu0 0.0
    %468 = vmatprep.subr.mxu0 0.0
    %469 = vmatpush1.msra.mxu0 0.0
    %470 = vmatprep.subr.mxu0 0.0
    %471 = vmatpush1.msra.mxu0 0.0
    %472 = vmatprep.subr.mxu0 0.0
    %473 = vmatpush1.msra.mxu0 0.0
    %474 = vmatprep.subr.mxu0 0.0
    %475 = vmatpush1.msra.mxu0 0.0
    %476 = vmatprep.subr.mxu0 0.0
    %477 = vmatpush1.msra.mxu0 0.0
    %478 = vmatprep.subr.mxu0 0.0
    %479 = vmatpush1.msra.mxu0 0.0
    %480 = vmatprep.subr.mxu0 0.0
    %481 = vmatpush1.msra.mxu0 0.0
    %482 = vmatprep.subr.mxu0 0.0
    %483 = vmatpush1.msra.mxu0 0.0
    %484 = vmatprep.subr.mxu0 0.0
    %485 = vmatpush1.msra.mxu0 0.0
    %486 = vmatprep.subr.mxu0 0.0
    %487 = vmatpush1.msra.mxu0 0.0
    %488 = vmatprep.mubr.f32.mxu0 0.0
    %489 = vmatmul.mubr.f32.gmra.mrb[0].mxu0 %v191
    %v490 = vpop.f32.mrb[0].mxu0
    %v491 = vadd.f32 %v406, %v490
    %v492 = vpop.f32.mrb[0].mxu0
    %493 = vmatprep.mubr.f32.mxu0 0.0
    %494 = vmatmul.mubr.f32.gmra.mrb[0].mxu0 %v196
    %v495 = vpop.f32.mrb[0].mxu0
    %v496 = vadd.f32 %v411, %v495
    %v497 = vpop.f32.mrb[0].mxu0
    %498 = vmatprep.mubr.f32.mxu0 0.0
    %499 = vmatmul.mubr.f32.gmra.mrb[0].mxu0 %v201
    %v500 = vpop.f32.mrb[0].mxu0
    %v501 = vadd.f32 %v416, %v500
    %v502 = vpop.f32.mrb[0].mxu0
    %503 = vmatprep.mubr.f32.mxu0 0.0
    %504 = vmatmul.mubr.f32.gmra.mrb[0].mxu0 %v206
    %v505 = vpop.f32.mrb[0].mxu0
    %v506 = vadd.f32 %v421, %v505
    %v507 = vpop.f32.mrb[0].mxu0
    %508 = vdwg.mxu0
    %s509 = scalar_lea.vmem [#allocation8], 256
    %v510 = vld [vmem:[%s509] sm:$0xff]
    %v511 = vld [vmem:[%s509 + $0x8] sm:$0xff]
    %v512 = vld [vmem:[%s509 + $0x10] sm:$0xff]
    %v513 = vld [vmem:[%s509 + $0x18] sm:$0xff]
    %v514 = vld [vmem:[%s509 + $0x20] sm:$0xff]
    %v515 = vld [vmem:[%s509 + $0x28] sm:$0xff]
    %v516 = vld [vmem:[%s509 + $0x30] sm:$0xff]
    %v517 = vld [vmem:[%s509 + $0x38] sm:$0xff]
    %v518 = vld [vmem:[%s509 + $0x40] sm:$0xff]
    %v519 = vld [vmem:[%s509 + $0x48] sm:$0xff]
    %v520 = vld [vmem:[%s509 + $0x50] sm:$0xff]
    %v521 = vld [vmem:[%s509 + $0x58] sm:$0xff]
    %v522 = vld [vmem:[%s509 + $0x60] sm:$0xff]
    %v523 = vld [vmem:[%s509 + $0x68] sm:$0xff]
    %v524 = vld [vmem:[%s509 + $0x70] sm:$0xff]
    %v525 = vld [vmem:[%s509 + $0x78] sm:$0xff]
    %526 = vmatprep.subr.mxu0 0.0
    %527 = vmatpush1.msra.mxu0 %v510
    %528 = vmatprep.subr.mxu0 0.0
    %529 = vmatpush1.msra.mxu0 %v511
    %530 = vmatprep.subr.mxu0 0.0
    %531 = vmatpush1.msra.mxu0 %v512
    %532 = vmatprep.subr.mxu0 0.0
    %533 = vmatpush1.msra.mxu0 %v513
    %534 = vmatprep.subr.mxu0 0.0
    %535 = vmatpush1.msra.mxu0 %v514
    %536 = vmatprep.subr.mxu0 0.0
    %537 = vmatpush1.msra.mxu0 %v515
    %538 = vmatprep.subr.mxu0 0.0
    %539 = vmatpush1.msra.mxu0 %v516
    %540 = vmatprep.subr.mxu0 0.0
    %541 = vmatpush1.msra.mxu0 %v517
    %542 = vmatprep.subr.mxu0 0.0
    %543 = vmatpush1.msra.mxu0 %v518
    %544 = vmatprep.subr.mxu0 0.0
    %545 = vmatpush1.msra.mxu0 %v519
    %546 = vmatprep.subr.mxu0 0.0
    %547 = vmatpush1.msra.mxu0 %v520
    %548 = vmatprep.subr.mxu0 0.0
    %549 = vmatpush1.msra.mxu0 %v521
    %550 = vmatprep.subr.mxu0 0.0
    %551 = vmatpush1.msra.mxu0 %v522
    %552 = vmatprep.subr.mxu0 0.0
    %553 = vmatpush1.msra.mxu0 %v523
    %554 = vmatprep.subr.mxu0 0.0
    %555 = vmatpush1.msra.mxu0 %v524
    %556 = vmatprep.subr.mxu0 0.0
    %557 = vmatpush1.msra.mxu0 %v525
    %558 = vmatprep.subr.mxu0 0.0
    %559 = vmatpush1.msra.mxu0 0.0
    %560 = vmatprep.subr.mxu0 0.0
    %561 = vmatpush1.msra.mxu0 0.0
    %562 = vmatprep.subr.mxu0 0.0
    %563 = vmatpush1.msra.mxu0 0.0
    %564 = vmatprep.subr.mxu0 0.0
    %565 = vmatpush1.msra.mxu0 0.0
    %566 = vmatprep.subr.mxu0 0.0
    %567 = vmatpush1.msra.mxu0 0.0
    %568 = vmatprep.subr.mxu0 0.0
    %569 = vmatpush1.msra.mxu0 0.0
    %570 = vmatprep.subr.mxu0 0.0
    %571 = vmatpush1.msra.mxu0 0.0
    %572 = vmatprep.subr.mxu0 0.0
    %573 = vmatpush1.msra.mxu0 0.0
    %574 = vmatprep.subr.mxu0 0.0
    %575 = vmatpush1.msra.mxu0 0.0
    %576 = vmatprep.subr.mxu0 0.0
    %577 = vmatpush1.msra.mxu0 0.0
    %578 = vmatprep.subr.mxu0 0.0
    %579 = vmatpush1.msra.mxu0 0.0
    %580 = vmatprep.subr.mxu0 0.0
    %581 = vmatpush1.msra.mxu0 0.0
    %582 = vmatprep.subr.mxu0 0.0
    %583 = vmatpush1.msra.mxu0 0.0
    %584 = vmatprep.subr.mxu0 0.0
    %585 = vmatpush1.msra.mxu0 0.0
    %586 = vmatprep.subr.mxu0 0.0
    %587 = vmatpush1.msra.mxu0 0.0
    %588 = vmatprep.subr.mxu0 0.0
    %589 = vmatpush1.msra.mxu0 0.0
    %590 = vmatprep.mubr.f32.mxu0 0.0
    %591 = vmatmul.mubr.f32.gmra.mrb[0].mxu0 %v97
    %v592 = vpop.f32.mrb[0].mxu0
    %v593 = vadd.f32 0.0, %v592
    %v594 = vpop.f32.mrb[0].mxu0
    %595 = vmatprep.mubr.f32.mxu0 0.0
    %596 = vmatmul.mubr.f32.gmra.mrb[0].mxu0 %v98
    %v597 = vpop.f32.mrb[0].mxu0
    %v598 = vadd.f32 0.0, %v597
    %v599 = vpop.f32.mrb[0].mxu0
    %600 = vmatprep.mubr.f32.mxu0 0.0
    %601 = vmatmul.mubr.f32.gmra.mrb[0].mxu0 %v99
    %v602 = vpop.f32.mrb[0].mxu0
    %v603 = vadd.f32 0.0, %v602
    %v604 = vpop.f32.mrb[0].mxu0
    %605 = vmatprep.mubr.f32.mxu0 0.0
    %606 = vmatmul.mubr.f32.gmra.mrb[0].mxu0 %v100
    %v607 = vpop.f32.mrb[0].mxu0
    %v608 = vadd.f32 0.0, %v607
    %v609 = vpop.f32.mrb[0].mxu0
    %610 = vdwg.mxu0
    %v611 = vadd.f32 %v491, %v593
    %v612 = vadd.f32 %v496, %v598
    %v613 = vadd.f32 %v501, %v603
    %v614 = vadd.f32 %v506, %v608
    %v615 = vld [vmem:[#allocation10] sm:$0x1]
    %v617 = vlaneseq
    %v618 = vshrl.u32 %v617, 7
    %v619 = vsub.s32 0, %v618
    %v620 = vrot.slane %v615, %v619
    %v622 = vadd.f32 %v611, %v620
    %v623 = vadd.f32 %v612, %v620
    %v624 = vadd.f32 %v613, %v620
    %v625 = vadd.f32 %v614, %v620
    %v626 = vmax.f32 %v622, 0.0
    %v627 = vmax.f32 %v623, 0.0
    %v628 = vmax.f32 %v624, 0.0
    %v629 = vmax.f32 %v625, 0.0
    %s630 = scalar_lea.vmem [#allocation8], 384
    %v631 = vld [vmem:[%s630] sm:$0xff]
    %v632 = vld [vmem:[%s630 + $0x8] sm:$0xff]
    %v633 = vld [vmem:[%s630 + $0x10] sm:$0xff]
    %v634 = vld [vmem:[%s630 + $0x18] sm:$0xff]
    %v635 = vld [vmem:[%s630 + $0x20] sm:$0xff]
    %v636 = vld [vmem:[%s630 + $0x28] sm:$0xff]
    %v637 = vld [vmem:[%s630 + $0x30] sm:$0xff]
    %v638 = vld [vmem:[%s630 + $0x38] sm:$0xff]
    %v639 = vld [vmem:[%s630 + $0x40] sm:$0xff]
    %v640 = vld [vmem:[%s630 + $0x48] sm:$0xff]
    %v641 = vld [vmem:[%s630 + $0x50] sm:$0xff]
    %v642 = vld [vmem:[%s630 + $0x58] sm:$0xff]
    %v643 = vld [vmem:[%s630 + $0x60] sm:$0xff]
    %v644 = vld [vmem:[%s630 + $0x68] sm:$0xff]
    %v645 = vld [vmem:[%s630 + $0x70] sm:$0xff]
    %v646 = vld [vmem:[%s630 + $0x78] sm:$0xff]
    %s647 = scalar_lea.vmem [#allocation10], 1
    %v648 = vld [vmem:[%s647] sm:$0x1]
    %v650 = vlaneseq
    %v651 = vshrl.u32 %v650, 7
    %v652 = vsub.s32 0, %v651
    %v653 = vrot.slane %v648, %v652
    %655 = vmatprep.subr.mxu0 0.0
    %656 = vmatpush1.msra.mxu0 %v631
    %657 = vmatprep.subr.mxu0 0.0
    %658 = vmatpush1.msra.mxu0 %v632
    %659 = vmatprep.subr.mxu0 0.0
    %660 = vmatpush1.msra.mxu0 %v633
    %661 = vmatprep.subr.mxu0 0.0
    %662 = vmatpush1.msra.mxu0 %v634
    %663 = vmatprep.subr.mxu0 0.0
    %664 = vmatpush1.msra.mxu0 %v635
    %665 = vmatprep.subr.mxu0 0.0
    %666 = vmatpush1.msra.mxu0 %v636
    %667 = vmatprep.subr.mxu0 0.0
    %668 = vmatpush1.msra.mxu0 %v637
    %669 = vmatprep.subr.mxu0 0.0
    %670 = vmatpush1.msra.mxu0 %v638
    %671 = vmatprep.subr.mxu0 0.0
    %672 = vmatpush1.msra.mxu0 %v639
    %673 = vmatprep.subr.mxu0 0.0
    %674 = vmatpush1.msra.mxu0 %v640
    %675 = vmatprep.subr.mxu0 0.0
    %676 = vmatpush1.msra.mxu0 %v641
    %677 = vmatprep.subr.mxu0 0.0
    %678 = vmatpush1.msra.mxu0 %v642
    %679 = vmatprep.subr.mxu0 0.0
    %680 = vmatpush1.msra.mxu0 %v643
    %681 = vmatprep.subr.mxu0 0.0
    %682 = vmatpush1.msra.mxu0 %v644
    %683 = vmatprep.subr.mxu0 0.0
    %684 = vmatpush1.msra.mxu0 %v645
    %685 = vmatprep.subr.mxu0 0.0
    %686 = vmatpush1.msra.mxu0 %v646
    %687 = vmatprep.subr.mxu0 0.0
    %688 = vmatpush1.msra.mxu0 0.0
    %689 = vmatprep.subr.mxu0 0.0
    %690 = vmatpush1.msra.mxu0 0.0
    %691 = vmatprep.subr.mxu0 0.0
    %692 = vmatpush1.msra.mxu0 0.0
    %693 = vmatprep.subr.mxu0 0.0
    %694 = vmatpush1.msra.mxu0 0.0
    %695 = vmatprep.subr.mxu0 0.0
    %696 = vmatpush1.msra.mxu0 0.0
    %697 = vmatprep.subr.mxu0 0.0
    %698 = vmatpush1.msra.mxu0 0.0
    %699 = vmatprep.subr.mxu0 0.0
    %700 = vmatpush1.msra.mxu0 0.0
    %701 = vmatprep.subr.mxu0 0.0
    %702 = vmatpush1.msra.mxu0 0.0
    %703 = vmatprep.subr.mxu0 0.0
    %704 = vmatpush1.msra.mxu0 0.0
    %705 = vmatprep.subr.mxu0 0.0
    %706 = vmatpush1.msra.mxu0 0.0
    %707 = vmatprep.subr.mxu0 0.0
    %708 = vmatpush1.msra.mxu0 0.0
    %709 = vmatprep.subr.mxu0 0.0
    %710 = vmatpush1.msra.mxu0 0.0
    %711 = vmatprep.subr.mxu0 0.0
    %712 = vmatpush1.msra.mxu0 0.0
    %713 = vmatprep.subr.mxu0 0.0
    %714 = vmatpush1.msra.mxu0 0.0
    %715 = vmatprep.subr.mxu0 0.0
    %716 = vmatpush1.msra.mxu0 0.0
    %717 = vmatprep.subr.mxu0 0.0
    %718 = vmatpush1.msra.mxu0 0.0
    %719 = vmatprep.mubr.f32.mxu0 0.0
    %720 = vmatmul.mubr.f32.gmra.mrb[0].mxu0 %v626
    %v721 = vpop.f32.mrb[0].mxu0
    %v722 = vadd.f32 %v653, %v721
    %v723 = vpop.f32.mrb[0].mxu0
    %724 = vmatprep.mubr.f32.mxu0 0.0
    %725 = vmatmul.mubr.f32.gmra.mrb[0].mxu0 %v627
    %v726 = vpop.f32.mrb[0].mxu0
    %v727 = vadd.f32 %v653, %v726
    %v728 = vpop.f32.mrb[0].mxu0
    %729 = vmatprep.mubr.f32.mxu0 0.0
    %730 = vmatmul.mubr.f32.gmra.mrb[0].mxu0 %v628
    %v731 = vpop.f32.mrb[0].mxu0
    %v732 = vadd.f32 %v653, %v731
    %v733 = vpop.f32.mrb[0].mxu0
    %734 = vmatprep.mubr.f32.mxu0 0.0
    %735 = vmatmul.mubr.f32.gmra.mrb[0].mxu0 %v629
    %v736 = vpop.f32.mrb[0].mxu0
    %v737 = vadd.f32 %v653, %v736
    %v738 = vpop.f32.mrb[0].mxu0
    %739 = vdwg.mxu0
    %s740 = scalar_lea.vmem [#allocation8], 512
    %v741 = vld [vmem:[%s740] sm:$0xff]
    %v742 = vld [vmem:[%s740 + $0x8] sm:$0xff]
    %v743 = vld [vmem:[%s740 + $0x10] sm:$0xff]
    %v744 = vld [vmem:[%s740 + $0x18] sm:$0xff]
    %v745 = vld [vmem:[%s740 + $0x20] sm:$0xff]
    %v746 = vld [vmem:[%s740 + $0x28] sm:$0xff]
    %v747 = vld [vmem:[%s740 + $0x30] sm:$0xff]
    %v748 = vld [vmem:[%s740 + $0x38] sm:$0xff]
    %v749 = vld [vmem:[%s740 + $0x40] sm:$0xff]
    %v750 = vld [vmem:[%s740 + $0x48] sm:$0xff]
    %v751 = vld [vmem:[%s740 + $0x50] sm:$0xff]
    %v752 = vld [vmem:[%s740 + $0x58] sm:$0xff]
    %v753 = vld [vmem:[%s740 + $0x60] sm:$0xff]
    %v754 = vld [vmem:[%s740 + $0x68] sm:$0xff]
    %v755 = vld [vmem:[%s740 + $0x70] sm:$0xff]
    %v756 = vld [vmem:[%s740 + $0x78] sm:$0xff]
    %s757 = scalar_lea.vmem [#allocation8], 640
    %v758 = vld [vmem:[%s757] sm:$0xff]
    %v759 = vld [vmem:[%s757 + $0x8] sm:$0xff]
    %v760 = vld [vmem:[%s757 + $0x10] sm:$0xff]
    %v761 = vld [vmem:[%s757 + $0x18] sm:$0xff]
    %v762 = vld [vmem:[%s757 + $0x20] sm:$0xff]
    %v763 = vld [vmem:[%s757 + $0x28] sm:$0xff]
    %v764 = vld [vmem:[%s757 + $0x30] sm:$0xff]
    %v765 = vld [vmem:[%s757 + $0x38] sm:$0xff]
    %v766 = vld [vmem:[%s757 + $0x40] sm:$0xff]
    %v767 = vld [vmem:[%s757 + $0x48] sm:$0xff]
    %v768 = vld [vmem:[%s757 + $0x50] sm:$0xff]
    %v769 = vld [vmem:[%s757 + $0x58] sm:$0xff]
    %v770 = vld [vmem:[%s757 + $0x60] sm:$0xff]
    %v771 = vld [vmem:[%s757 + $0x68] sm:$0xff]
    %v772 = vld [vmem:[%s757 + $0x70] sm:$0xff]
    %v773 = vld [vmem:[%s757 + $0x78] sm:$0xff]
    %774 = vmatprep.subr.mxu0 0.0
    %775 = vmatpush1.msra.mxu0 %v758
    %776 = vmatprep.subr.mxu0 0.0
    %777 = vmatpush1.msra.mxu0 %v759
    %778 = vmatprep.subr.mxu0 0.0
    %779 = vmatpush1.msra.mxu0 %v760
    %780 = vmatprep.subr.mxu0 0.0
    %781 = vmatpush1.msra.mxu0 %v761
    %782 = vmatprep.subr.mxu0 0.0
    %783 = vmatpush1.msra.mxu0 %v762
    %784 = vmatprep.subr.mxu0 0.0
    %785 = vmatpush1.msra.mxu0 %v763
    %786 = vmatprep.subr.mxu0 0.0
    %787 = vmatpush1.msra.mxu0 %v764
    %788 = vmatprep.subr.mxu0 0.0
    %789 = vmatpush1.msra.mxu0 %v765
    %790 = vmatprep.subr.mxu0 0.0
    %791 = vmatpush1.msra.mxu0 %v766
    %792 = vmatprep.subr.mxu0 0.0
    %793 = vmatpush1.msra.mxu0 %v767
    %794 = vmatprep.subr.mxu0 0.0
    %795 = vmatpush1.msra.mxu0 %v768
    %796 = vmatprep.subr.mxu0 0.0
    %797 = vmatpush1.msra.mxu0 %v769
    %798 = vmatprep.subr.mxu0 0.0
    %799 = vmatpush1.msra.mxu0 %v770
    %800 = vmatprep.subr.mxu0 0.0
    %801 = vmatpush1.msra.mxu0 %v771
    %802 = vmatprep.subr.mxu0 0.0
    %803 = vmatpush1.msra.mxu0 %v772
    %804 = vmatprep.subr.mxu0 0.0
    %805 = vmatpush1.msra.mxu0 %v773
    %806 = vmatprep.subr.mxu0 0.0
    %807 = vmatpush1.msra.mxu0 0.0
    %808 = vmatprep.subr.mxu0 0.0
    %809 = vmatpush1.msra.mxu0 0.0
    %810 = vmatprep.subr.mxu0 0.0
    %811 = vmatpush1.msra.mxu0 0.0
    %812 = vmatprep.subr.mxu0 0.0
    %813 = vmatpush1.msra.mxu0 0.0
    %814 = vmatprep.subr.mxu0 0.0
    %815 = vmatpush1.msra.mxu0 0.0
    %816 = vmatprep.subr.mxu0 0.0
    %817 = vmatpush1.msra.mxu0 0.0
    %818 = vmatprep.subr.mxu0 0.0
    %819 = vmatpush1.msra.mxu0 0.0
    %820 = vmatprep.subr.mxu0 0.0
    %821 = vmatpush1.msra.mxu0 0.0
    %822 = vmatprep.subr.mxu0 0.0
    %823 = vmatpush1.msra.mxu0 0.0
    %824 = vmatprep.subr.mxu0 0.0
    %825 = vmatpush1.msra.mxu0 0.0
    %826 = vmatprep.subr.mxu0 0.0
    %827 = vmatpush1.msra.mxu0 0.0
    %828 = vmatprep.subr.mxu0 0.0
    %829 = vmatpush1.msra.mxu0 0.0
    %830 = vmatprep.subr.mxu0 0.0
    %831 = vmatpush1.msra.mxu0 0.0
    %832 = vmatprep.subr.mxu0 0.0
    %833 = vmatpush1.msra.mxu0 0.0
    %834 = vmatprep.subr.mxu0 0.0
    %835 = vmatpush1.msra.mxu0 0.0
    %836 = vmatprep.subr.mxu0 0.0
    %837 = vmatpush1.msra.mxu0 0.0
    %838 = vmatprep.mubr.f32.mxu0 0.0
    %839 = vmatmul.mubr.f32.gmra.mrb[0].mxu0 %v722
    %v840 = vpop.f32.mrb[0].mxu0
    %v841 = vadd.f32 0.0, %v840
    %v842 = vpop.f32.mrb[0].mxu0
    %843 = vmatprep.mubr.f32.mxu0 0.0
    %844 = vmatmul.mubr.f32.gmra.mrb[0].mxu0 %v727
    %v845 = vpop.f32.mrb[0].mxu0
    %v846 = vadd.f32 0.0, %v845
    %v847 = vpop.f32.mrb[0].mxu0
    %848 = vmatprep.mubr.f32.mxu0 0.0
    %849 = vmatmul.mubr.f32.gmra.mrb[0].mxu0 %v732
    %v850 = vpop.f32.mrb[0].mxu0
    %v851 = vadd.f32 0.0, %v850
    %v852 = vpop.f32.mrb[0].mxu0
    %853 = vmatprep.mubr.f32.mxu0 0.0
    %854 = vmatmul.mubr.f32.gmra.mrb[0].mxu0 %v737
    %v855 = vpop.f32.mrb[0].mxu0
    %v856 = vadd.f32 0.0, %v855
    %v857 = vpop.f32.mrb[0].mxu0
    %858 = vdwg.mxu0
    %859 = vmatprep.subr.mxu0 0.0
    %860 = vmatpush1.msra.mxu0 %v741
    %861 = vmatprep.subr.mxu0 0.0
    %862 = vmatpush1.msra.mxu0 %v742
    %863 = vmatprep.subr.mxu0 0.0
    %864 = vmatpush1.msra.mxu0 %v743
    %865 = vmatprep.subr.mxu0 0.0
    %866 = vmatpush1.msra.mxu0 %v744
    %867 = vmatprep.subr.mxu0 0.0
    %868 = vmatpush1.msra.mxu0 %v745
    %869 = vmatprep.subr.mxu0 0.0
    %870 = vmatpush1.msra.mxu0 %v746
    %871 = vmatprep.subr.mxu0 0.0
    %872 = vmatpush1.msra.mxu0 %v747
    %873 = vmatprep.subr.mxu0 0.0
    %874 = vmatpush1.msra.mxu0 %v748
    %875 = vmatprep.subr.mxu0 0.0
    %876 = vmatpush1.msra.mxu0 %v749
    %877 = vmatprep.subr.mxu0 0.0
    %878 = vmatpush1.msra.mxu0 %v750
    %879 = vmatprep.subr.mxu0 0.0
    %880 = vmatpush1.msra.mxu0 %v751
    %881 = vmatprep.subr.mxu0 0.0
    %882 = vmatpush1.msra.mxu0 %v752
    %883 = vmatprep.subr.mxu0 0.0
    %884 = vmatpush1.msra.mxu0 %v753
    %885 = vmatprep.subr.mxu0 0.0
    %886 = vmatpush1.msra.mxu0 %v754
    %887 = vmatprep.subr.mxu0 0.0
    %888 = vmatpush1.msra.mxu0 %v755
    %889 = vmatprep.subr.mxu0 0.0
    %890 = vmatpush1.msra.mxu0 %v756
    %891 = vmatprep.subr.mxu0 0.0
    %892 = vmatpush1.msra.mxu0 0.0
    %893 = vmatprep.subr.mxu0 0.0
    %894 = vmatpush1.msra.mxu0 0.0
    %895 = vmatprep.subr.mxu0 0.0
    %896 = vmatpush1.msra.mxu0 0.0
    %897 = vmatprep.subr.mxu0 0.0
    %898 = vmatpush1.msra.mxu0 0.0
    %899 = vmatprep.subr.mxu0 0.0
    %900 = vmatpush1.msra.mxu0 0.0
    %901 = vmatprep.subr.mxu0 0.0
    %902 = vmatpush1.msra.mxu0 0.0
    %903 = vmatprep.subr.mxu0 0.0
    %904 = vmatpush1.msra.mxu0 0.0
    %905 = vmatprep.subr.mxu0 0.0
    %906 = vmatpush1.msra.mxu0 0.0
    %907 = vmatprep.subr.mxu0 0.0
    %908 = vmatpush1.msra.mxu0 0.0
    %909 = vmatprep.subr.mxu0 0.0
    %910 = vmatpush1.msra.mxu0 0.0
    %911 = vmatprep.subr.mxu0 0.0
    %912 = vmatpush1.msra.mxu0 0.0
    %913 = vmatprep.subr.mxu0 0.0
    %914 = vmatpush1.msra.mxu0 0.0
    %915 = vmatprep.subr.mxu0 0.0
    %916 = vmatpush1.msra.mxu0 0.0
    %917 = vmatprep.subr.mxu0 0.0
    %918 = vmatpush1.msra.mxu0 0.0
    %919 = vmatprep.subr.mxu0 0.0
    %920 = vmatpush1.msra.mxu0 0.0
    %921 = vmatprep.subr.mxu0 0.0
    %922 = vmatpush1.msra.mxu0 0.0
    %923 = vmatprep.mubr.f32.mxu0 0.0
    %924 = vmatmul.mubr.f32.gmra.mrb[0].mxu0 %v191
    %v925 = vpop.f32.mrb[0].mxu0
    %v926 = vadd.f32 %v841, %v925
    %v927 = vpop.f32.mrb[0].mxu0
    %928 = vmatprep.mubr.f32.mxu0 0.0
    %929 = vmatmul.mubr.f32.gmra.mrb[0].mxu0 %v196
    %v930 = vpop.f32.mrb[0].mxu0
    %v931 = vadd.f32 %v846, %v930
    %v932 = vpop.f32.mrb[0].mxu0
    %933 = vmatprep.mubr.f32.mxu0 0.0
    %934 = vmatmul.mubr.f32.gmra.mrb[0].mxu0 %v201
    %v935 = vpop.f32.mrb[0].mxu0
    %v936 = vadd.f32 %v851, %v935
    %v937 = vpop.f32.mrb[0].mxu0
    %938 = vmatprep.mubr.f32.mxu0 0.0
    %939 = vmatmul.mubr.f32.gmra.mrb[0].mxu0 %v206
    %v940 = vpop.f32.mrb[0].mxu0
    %v941 = vadd.f32 %v856, %v940
    %v942 = vpop.f32.mrb[0].mxu0
    %943 = vdwg.mxu0
    %s944 = scalar_lea.vmem [#allocation10], 2
    %v945 = vld [vmem:[%s944] sm:$0x1]
    %v947 = vlaneseq
    %v948 = vshrl.u32 %v947, 7
    %v949 = vsub.s32 0, %v948
    %v950 = vrot.slane %v945, %v949
    %v952 = vadd.f32 %v926, %v950
    %v953 = vadd.f32 %v931, %v950
    %v954 = vadd.f32 %v936, %v950
    %v955 = vadd.f32 %v941, %v950
    %v956 = vmax.f32 %v952, 0.0
    %v957 = vmax.f32 %v953, 0.0
    %v958 = vmax.f32 %v954, 0.0
    %v959 = vmax.f32 %v955, 0.0
    %s960 = scalar_lea.vmem [#allocation8], 768
    %v961 = vld [vmem:[%s960] sm:$0xff]
    %v962 = vld [vmem:[%s960 + $0x8] sm:$0xff]
    %v963 = vld [vmem:[%s960 + $0x10] sm:$0xff]
    %v964 = vld [vmem:[%s960 + $0x18] sm:$0xff]
    %v965 = vld [vmem:[%s960 + $0x20] sm:$0xff]
    %v966 = vld [vmem:[%s960 + $0x28] sm:$0xff]
    %v967 = vld [vmem:[%s960 + $0x30] sm:$0xff]
    %v968 = vld [vmem:[%s960 + $0x38] sm:$0xff]
    %v969 = vld [vmem:[%s960 + $0x40] sm:$0xff]
    %v970 = vld [vmem:[%s960 + $0x48] sm:$0xff]
    %v971 = vld [vmem:[%s960 + $0x50] sm:$0xff]
    %v972 = vld [vmem:[%s960 + $0x58] sm:$0xff]
    %v973 = vld [vmem:[%s960 + $0x60] sm:$0xff]
    %v974 = vld [vmem:[%s960 + $0x68] sm:$0xff]
    %v975 = vld [vmem:[%s960 + $0x70] sm:$0xff]
    %v976 = vld [vmem:[%s960 + $0x78] sm:$0xff]
    %s977 = scalar_lea.vmem [#allocation10], 3
    %v978 = vld [vmem:[%s977] sm:$0x1]
    %v980 = vlaneseq
    %v981 = vshrl.u32 %v980, 7
    %v982 = vsub.s32 0, %v981
    %v983 = vrot.slane %v978, %v982
    %985 = vmatprep.subr.mxu0 0.0
    %986 = vmatpush1.msra.mxu0 %v961
    %987 = vmatprep.subr.mxu0 0.0
    %988 = vmatpush1.msra.mxu0 %v962
    %989 = vmatprep.subr.mxu0 0.0
    %990 = vmatpush1.msra.mxu0 %v963
    %991 = vmatprep.subr.mxu0 0.0
    %992 = vmatpush1.msra.mxu0 %v964
    %993 = vmatprep.subr.mxu0 0.0
    %994 = vmatpush1.msra.mxu0 %v965
    %995 = vmatprep.subr.mxu0 0.0
    %996 = vmatpush1.msra.mxu0 %v966
    %997 = vmatprep.subr.mxu0 0.0
    %998 = vmatpush1.msra.mxu0 %v967
    %999 = vmatprep.subr.mxu0 0.0
    %1000 = vmatpush1.msra.mxu0 %v968
    %1001 = vmatprep.subr.mxu0 0.0
    %1002 = vmatpush1.msra.mxu0 %v969
    %1003 = vmatprep.subr.mxu0 0.0
    %1004 = vmatpush1.msra.mxu0 %v970
    %1005 = vmatprep.subr.mxu0 0.0
    %1006 = vmatpush1.msra.mxu0 %v971
    %1007 = vmatprep.subr.mxu0 0.0
    %1008 = vmatpush1.msra.mxu0 %v972
    %1009 = vmatprep.subr.mxu0 0.0
    %1010 = vmatpush1.msra.mxu0 %v973
    %1011 = vmatprep.subr.mxu0 0.0
    %1012 = vmatpush1.msra.mxu0 %v974
    %1013 = vmatprep.subr.mxu0 0.0
    %1014 = vmatpush1.msra.mxu0 %v975
    %1015 = vmatprep.subr.mxu0 0.0
    %1016 = vmatpush1.msra.mxu0 %v976
    %1017 = vmatprep.subr.mxu0 0.0
    %1018 = vmatpush1.msra.mxu0 0.0
    %1019 = vmatprep.subr.mxu0 0.0
    %1020 = vmatpush1.msra.mxu0 0.0
    %1021 = vmatprep.subr.mxu0 0.0
    %1022 = vmatpush1.msra.mxu0 0.0
    %1023 = vmatprep.subr.mxu0 0.0
    %1024 = vmatpush1.msra.mxu0 0.0
    %1025 = vmatprep.subr.mxu0 0.0
    %1026 = vmatpush1.msra.mxu0 0.0
    %1027 = vmatprep.subr.mxu0 0.0
    %1028 = vmatpush1.msra.mxu0 0.0
    %1029 = vmatprep.subr.mxu0 0.0
    %1030 = vmatpush1.msra.mxu0 0.0
    %1031 = vmatprep.subr.mxu0 0.0
    %1032 = vmatpush1.msra.mxu0 0.0
    %1033 = vmatprep.subr.mxu0 0.0
    %1034 = vmatpush1.msra.mxu0 0.0
    %1035 = vmatprep.subr.mxu0 0.0
    %1036 = vmatpush1.msra.mxu0 0.0
    %1037 = vmatprep.subr.mxu0 0.0
    %1038 = vmatpush1.msra.mxu0 0.0
    %1039 = vmatprep.subr.mxu0 0.0
    %1040 = vmatpush1.msra.mxu0 0.0
    %1041 = vmatprep.subr.mxu0 0.0
    %1042 = vmatpush1.msra.mxu0 0.0
    %1043 = vmatprep.subr.mxu0 0.0
    %1044 = vmatpush1.msra.mxu0 0.0
    %1045 = vmatprep.subr.mxu0 0.0
    %1046 = vmatpush1.msra.mxu0 0.0
    %1047 = vmatprep.subr.mxu0 0.0
    %1048 = vmatpush1.msra.mxu0 0.0
    %1049 = vmatprep.mubr.f32.mxu0 0.0
    %1050 = vmatmul.mubr.f32.gmra.mrb[0].mxu0 %v956
    %v1051 = vpop.f32.mrb[0].mxu0
    %v1052 = vadd.f32 %v983, %v1051
    %v1053 = vpop.f32.mrb[0].mxu0
    %1054 = vmatprep.mubr.f32.mxu0 0.0
    %1055 = vmatmul.mubr.f32.gmra.mrb[0].mxu0 %v957
    %v1056 = vpop.f32.mrb[0].mxu0
    %v1057 = vadd.f32 %v983, %v1056
    %v1058 = vpop.f32.mrb[0].mxu0
    %1059 = vmatprep.mubr.f32.mxu0 0.0
    %1060 = vmatmul.mubr.f32.gmra.mrb[0].mxu0 %v958
    %v1061 = vpop.f32.mrb[0].mxu0
    %v1062 = vadd.f32 %v983, %v1061
    %v1063 = vpop.f32.mrb[0].mxu0
    %1064 = vmatprep.mubr.f32.mxu0 0.0
    %1065 = vmatmul.mubr.f32.gmra.mrb[0].mxu0 %v959
    %v1066 = vpop.f32.mrb[0].mxu0
    %v1067 = vadd.f32 %v983, %v1066
    %v1068 = vpop.f32.mrb[0].mxu0
    %1069 = vdwg.mxu0
    %vm1070 = vcmask 261120
    %v1072 = vsel %vm1070, %v109, 0
    %v1075 = vsel %vm1070, %v110, 0
    %1077 = vmatprep.subr.mxu0 0.0
    %1078 = vmatpush1.msra.mxu0 %v1052
    %1079 = vmatprep.subr.mxu0 0.0
    %1080 = vmatpush1.msra.mxu0 %v1057
    %1081 = vmatprep.subr.mxu0 0.0
    %1082 = vmatpush1.msra.mxu0 %v1062
    %1083 = vmatprep.subr.mxu0 0.0
    %1084 = vmatpush1.msra.mxu0 %v1067
    %1085 = vmatprep.subr.mxu0 0.0
    %1086 = vmatpush1.msra.mxu0 0.0
    %1087 = vmatprep.subr.mxu0 0.0
    %1088 = vmatpush1.msra.mxu0 0.0
    %1089 = vmatprep.subr.mxu0 0.0
    %1090 = vmatpush1.msra.mxu0 0.0
    %1091 = vmatprep.subr.mxu0 0.0
    %1092 = vmatpush1.msra.mxu0 0.0
    %1093 = vmatprep.subr.mxu0 0.0
    %1094 = vmatpush1.msra.mxu0 0.0
    %1095 = vmatprep.subr.mxu0 0.0
    %1096 = vmatpush1.msra.mxu0 0.0
    %1097 = vmatprep.subr.mxu0 0.0
    %1098 = vmatpush1.msra.mxu0 0.0
    %1099 = vmatprep.subr.mxu0 0.0
    %1100 = vmatpush1.msra.mxu0 0.0
    %1101 = vmatprep.subr.mxu0 0.0
    %1102 = vmatpush1.msra.mxu0 0.0
    %1103 = vmatprep.subr.mxu0 0.0
    %1104 = vmatpush1.msra.mxu0 0.0
    %1105 = vmatprep.subr.mxu0 0.0
    %1106 = vmatpush1.msra.mxu0 0.0
    %1107 = vmatprep.subr.mxu0 0.0
    %1108 = vmatpush1.msra.mxu0 0.0
    %1109 = vmatprep.subr.mxu0 0.0
    %1110 = vmatpush1.msra.mxu0 0.0
    %1111 = vmatprep.subr.mxu0 0.0
    %1112 = vmatpush1.msra.mxu0 0.0
    %1113 = vmatprep.subr.mxu0 0.0
    %1114 = vmatpush1.msra.mxu0 0.0
    %1115 = vmatprep.subr.mxu0 0.0
    %1116 = vmatpush1.msra.mxu0 0.0
    %1117 = vmatprep.subr.mxu0 0.0
    %1118 = vmatpush1.msra.mxu0 0.0
    %1119 = vmatprep.subr.mxu0 0.0
    %1120 = vmatpush1.msra.mxu0 0.0
    %1121 = vmatprep.subr.mxu0 0.0
    %1122 = vmatpush1.msra.mxu0 0.0
    %1123 = vmatprep.subr.mxu0 0.0
    %1124 = vmatpush1.msra.mxu0 0.0
    %1125 = vmatprep.subr.mxu0 0.0
    %1126 = vmatpush1.msra.mxu0 0.0
    %1127 = vmatprep.subr.mxu0 0.0
    %1128 = vmatpush1.msra.mxu0 0.0
    %1129 = vmatprep.subr.mxu0 0.0
    %1130 = vmatpush1.msra.mxu0 0.0
    %1131 = vmatprep.subr.mxu0 0.0
    %1132 = vmatpush1.msra.mxu0 0.0
    %1133 = vmatprep.subr.mxu0 0.0
    %1134 = vmatpush1.msra.mxu0 0.0
    %1135 = vmatprep.subr.mxu0 0.0
    %1136 = vmatpush1.msra.mxu0 0.0
    %1137 = vmatprep.subr.mxu0 0.0
    %1138 = vmatpush1.msra.mxu0 0.0
    %1139 = vmatprep.subr.mxu0 0.0
    %1140 = vmatpush1.msra.mxu0 0.0
    %1141 = vmatprep.mubr.f32.mxu0 0.0
    %1142 = vmatmul.mubr.f32.gmra.mrb[0].mxu0 %v1072
    %v1143 = vpop.f32.mrb[0].mxu0
    %v1144 = vadd.f32 0.0, %v1143
    %v1145 = vpop.f32.mrb[0].mxu0
    %1146 = vmatprep.mubr.f32.mxu0 0.0
    %1147 = vmatmul.mubr.f32.gmra.mrb[0].mxu0 %v1075
    %v1148 = vpop.f32.mrb[0].mxu0
    %v1149 = vadd.f32 0.0, %v1148
    %v1150 = vpop.f32.mrb[0].mxu0
    %1151 = vdwg.mxu0
    %s1152 = scalar_lea.vmem [#allocation8], 896
    %v1153 = vld [vmem:[%s1152] sm:$0xff]
    %v1154 = vld [vmem:[%s1152 + $0x8] sm:$0xff]
    %v1155 = vld [vmem:[%s1152 + $0x10] sm:$0xff]
    %v1156 = vld [vmem:[%s1152 + $0x18] sm:$0xff]
    %v1157 = vld [vmem:[%s1152 + $0x20] sm:$0xff]
    %v1158 = vld [vmem:[%s1152 + $0x28] sm:$0xff]
    %v1159 = vld [vmem:[%s1152 + $0x30] sm:$0xff]
    %v1160 = vld [vmem:[%s1152 + $0x38] sm:$0xff]
    %v1161 = vld [vmem:[%s1152 + $0x40] sm:$0xff]
    %v1162 = vld [vmem:[%s1152 + $0x48] sm:$0xff]
    %v1163 = vld [vmem:[%s1152 + $0x50] sm:$0xff]
    %v1164 = vld [vmem:[%s1152 + $0x58] sm:$0xff]
    %v1165 = vld [vmem:[%s1152 + $0x60] sm:$0xff]
    %v1166 = vld [vmem:[%s1152 + $0x68] sm:$0xff]
    %v1167 = vld [vmem:[%s1152 + $0x70] sm:$0xff]
    %v1168 = vld [vmem:[%s1152 + $0x78] sm:$0xff]
    %s1169 = scalar_lea.vmem [#allocation8], 1024
    %v1170 = vld [vmem:[%s1169] sm:$0xff]
    %v1171 = vld [vmem:[%s1169 + $0x8] sm:$0xff]
    %v1172 = vld [vmem:[%s1169 + $0x10] sm:$0xff]
    %v1173 = vld [vmem:[%s1169 + $0x18] sm:$0xff]
    %v1174 = vld [vmem:[%s1169 + $0x20] sm:$0xff]
    %v1175 = vld [vmem:[%s1169 + $0x28] sm:$0xff]
    %v1176 = vld [vmem:[%s1169 + $0x30] sm:$0xff]
    %v1177 = vld [vmem:[%s1169 + $0x38] sm:$0xff]
    %v1178 = vld [vmem:[%s1169 + $0x40] sm:$0xff]
    %v1179 = vld [vmem:[%s1169 + $0x48] sm:$0xff]
    %v1180 = vld [vmem:[%s1169 + $0x50] sm:$0xff]
    %v1181 = vld [vmem:[%s1169 + $0x58] sm:$0xff]
    %v1182 = vld [vmem:[%s1169 + $0x60] sm:$0xff]
    %v1183 = vld [vmem:[%s1169 + $0x68] sm:$0xff]
    %v1184 = vld [vmem:[%s1169 + $0x70] sm:$0xff]
    %v1185 = vld [vmem:[%s1169 + $0x78] sm:$0xff]
    %1186 = vmatprep.subr.mxu0 0.0
    %1187 = vmatpush1.msra.mxu0 %v1170
    %1188 = vmatprep.subr.mxu0 0.0
    %1189 = vmatpush1.msra.mxu0 %v1171
    %1190 = vmatprep.subr.mxu0 0.0
    %1191 = vmatpush1.msra.mxu0 %v1172
    %1192 = vmatprep.subr.mxu0 0.0
    %1193 = vmatpush1.msra.mxu0 %v1173
    %1194 = vmatprep.subr.mxu0 0.0
    %1195 = vmatpush1.msra.mxu0 %v1174
    %1196 = vmatprep.subr.mxu0 0.0
    %1197 = vmatpush1.msra.mxu0 %v1175
    %1198 = vmatprep.subr.mxu0 0.0
    %1199 = vmatpush1.msra.mxu0 %v1176
    %1200 = vmatprep.subr.mxu0 0.0
    %1201 = vmatpush1.msra.mxu0 %v1177
    %1202 = vmatprep.subr.mxu0 0.0
    %1203 = vmatpush1.msra.mxu0 %v1178
    %1204 = vmatprep.subr.mxu0 0.0
    %1205 = vmatpush1.msra.mxu0 %v1179
    %1206 = vmatprep.subr.mxu0 0.0
    %1207 = vmatpush1.msra.mxu0 %v1180
    %1208 = vmatprep.subr.mxu0 0.0
    %1209 = vmatpush1.msra.mxu0 %v1181
    %1210 = vmatprep.subr.mxu0 0.0
    %1211 = vmatpush1.msra.mxu0 %v1182
    %1212 = vmatprep.subr.mxu0 0.0
    %1213 = vmatpush1.msra.mxu0 %v1183
    %1214 = vmatprep.subr.mxu0 0.0
    %1215 = vmatpush1.msra.mxu0 %v1184
    %1216 = vmatprep.subr.mxu0 0.0
    %1217 = vmatpush1.msra.mxu0 %v1185
    %1218 = vmatprep.subr.mxu0 0.0
    %1219 = vmatpush1.msra.mxu0 0.0
    %1220 = vmatprep.subr.mxu0 0.0
    %1221 = vmatpush1.msra.mxu0 0.0
    %1222 = vmatprep.subr.mxu0 0.0
    %1223 = vmatpush1.msra.mxu0 0.0
    %1224 = vmatprep.subr.mxu0 0.0
    %1225 = vmatpush1.msra.mxu0 0.0
    %1226 = vmatprep.subr.mxu0 0.0
    %1227 = vmatpush1.msra.mxu0 0.0
    %1228 = vmatprep.subr.mxu0 0.0
    %1229 = vmatpush1.msra.mxu0 0.0
    %1230 = vmatprep.subr.mxu0 0.0
    %1231 = vmatpush1.msra.mxu0 0.0
    %1232 = vmatprep.subr.mxu0 0.0
    %1233 = vmatpush1.msra.mxu0 0.0
    %1234 = vmatprep.subr.mxu0 0.0
    %1235 = vmatpush1.msra.mxu0 0.0
    %1236 = vmatprep.subr.mxu0 0.0
    %1237 = vmatpush1.msra.mxu0 0.0
    %1238 = vmatprep.subr.mxu0 0.0
    %1239 = vmatpush1.msra.mxu0 0.0
    %1240 = vmatprep.subr.mxu0 0.0
    %1241 = vmatpush1.msra.mxu0 0.0
    %1242 = vmatprep.subr.mxu0 0.0
    %1243 = vmatpush1.msra.mxu0 0.0
    %1244 = vmatprep.subr.mxu0 0.0
    %1245 = vmatpush1.msra.mxu0 0.0
    %1246 = vmatprep.subr.mxu0 0.0
    %1247 = vmatpush1.msra.mxu0 0.0
    %1248 = vmatprep.subr.mxu0 0.0
    %1249 = vmatpush1.msra.mxu0 0.0
    %1250 = vmatprep.mubr.f32.mxu0 0.0
    %1251 = vmatmul.mubr.f32.gmra.mrb[0].mxu0 %v1144
    %v1252 = vpop.f32.mrb[0].mxu0
    %v1253 = vadd.f32 0.0, %v1252
    %v1254 = vpop.f32.mrb[0].mxu0
    %1255 = vmatprep.mubr.f32.mxu0 0.0
    %1256 = vmatmul.mubr.f32.gmra.mrb[0].mxu0 %v1149
    %v1257 = vpop.f32.mrb[0].mxu0
    %v1258 = vadd.f32 0.0, %v1257
    %v1259 = vpop.f32.mrb[0].mxu0
    %1260 = vdwg.mxu0
    %1261 = vmatprep.subr.mxu0 0.0
    %1262 = vmatpush1.msra.mxu0 %v1153
    %1263 = vmatprep.subr.mxu0 0.0
    %1264 = vmatpush1.msra.mxu0 %v1154
    %1265 = vmatprep.subr.mxu0 0.0
    %1266 = vmatpush1.msra.mxu0 %v1155
    %1267 = vmatprep.subr.mxu0 0.0
    %1268 = vmatpush1.msra.mxu0 %v1156
    %1269 = vmatprep.subr.mxu0 0.0
    %1270 = vmatpush1.msra.mxu0 %v1157
    %1271 = vmatprep.subr.mxu0 0.0
    %1272 = vmatpush1.msra.mxu0 %v1158
    %1273 = vmatprep.subr.mxu0 0.0
    %1274 = vmatpush1.msra.mxu0 %v1159
    %1275 = vmatprep.subr.mxu0 0.0
    %1276 = vmatpush1.msra.mxu0 %v1160
    %1277 = vmatprep.subr.mxu0 0.0
    %1278 = vmatpush1.msra.mxu0 %v1161
    %1279 = vmatprep.subr.mxu0 0.0
    %1280 = vmatpush1.msra.mxu0 %v1162
    %1281 = vmatprep.subr.mxu0 0.0
    %1282 = vmatpush1.msra.mxu0 %v1163
    %1283 = vmatprep.subr.mxu0 0.0
    %1284 = vmatpush1.msra.mxu0 %v1164
    %1285 = vmatprep.subr.mxu0 0.0
    %1286 = vmatpush1.msra.mxu0 %v1165
    %1287 = vmatprep.subr.mxu0 0.0
    %1288 = vmatpush1.msra.mxu0 %v1166
    %1289 = vmatprep.subr.mxu0 0.0
    %1290 = vmatpush1.msra.mxu0 %v1167
    %1291 = vmatprep.subr.mxu0 0.0
    %1292 = vmatpush1.msra.mxu0 %v1168
    %1293 = vmatprep.subr.mxu0 0.0
    %1294 = vmatpush1.msra.mxu0 0.0
    %1295 = vmatprep.subr.mxu0 0.0
    %1296 = vmatpush1.msra.mxu0 0.0
    %1297 = vmatprep.subr.mxu0 0.0
    %1298 = vmatpush1.msra.mxu0 0.0
    %1299 = vmatprep.subr.mxu0 0.0
    %1300 = vmatpush1.msra.mxu0 0.0
    %1301 = vmatprep.subr.mxu0 0.0
    %1302 = vmatpush1.msra.mxu0 0.0
    %1303 = vmatprep.subr.mxu0 0.0
    %1304 = vmatpush1.msra.mxu0 0.0
    %1305 = vmatprep.subr.mxu0 0.0
    %1306 = vmatpush1.msra.mxu0 0.0
    %1307 = vmatprep.subr.mxu0 0.0
    %1308 = vmatpush1.msra.mxu0 0.0
    %1309 = vmatprep.subr.mxu0 0.0
    %1310 = vmatpush1.msra.mxu0 0.0
    %1311 = vmatprep.subr.mxu0 0.0
    %1312 = vmatpush1.msra.mxu0 0.0
    %1313 = vmatprep.subr.mxu0 0.0
    %1314 = vmatpush1.msra.mxu0 0.0
    %1315 = vmatprep.subr.mxu0 0.0
    %1316 = vmatpush1.msra.mxu0 0.0
    %1317 = vmatprep.subr.mxu0 0.0
    %1318 = vmatpush1.msra.mxu0 0.0
    %1319 = vmatprep.subr.mxu0 0.0
    %1320 = vmatpush1.msra.mxu0 0.0
    %1321 = vmatprep.subr.mxu0 0.0
    %1322 = vmatpush1.msra.mxu0 0.0
    %1323 = vmatprep.subr.mxu0 0.0
    %1324 = vmatpush1.msra.mxu0 0.0
    %1325 = vmatprep.mubr.f32.mxu0 0.0
    %1326 = vmatmul.mubr.f32.gmra.mrb[0].mxu0 %v95
    %v1327 = vpop.f32.mrb[0].mxu0
    %v1328 = vadd.f32 %v1253, %v1327
    %v1329 = vpop.f32.mrb[0].mxu0
    %1330 = vmatprep.mubr.f32.mxu0 0.0
    %1331 = vmatmul.mubr.f32.gmra.mrb[0].mxu0 %v96
    %v1332 = vpop.f32.mrb[0].mxu0
    %v1333 = vadd.f32 %v1258, %v1332
    %v1334 = vpop.f32.mrb[0].mxu0
    %1335 = vdwg.mxu0
    %s1336 = scalar_lea.vmem [#allocation10], 4
    %v1337 = vld [vmem:[%s1336] sm:$0x1]
    %v1339 = vlaneseq
    %v1340 = vshrl.u32 %v1339, 7
    %v1341 = vsub.s32 0, %v1340
    %v1342 = vrot.slane %v1337, %v1341
    %v1344 = vadd.f32 %v1328, %v1342
    %v1345 = vadd.f32 %v1333, %v1342
    %v1346 = vmax.f32 %v1344, 0.0
    %v1347 = vmax.f32 %v1345, 0.0
    %s1348 = scalar_lea.vmem [#allocation8], 1152
    %v1349 = vld [vmem:[%s1348] sm:$0xff]
    %v1350 = vld [vmem:[%s1348 + $0x8] sm:$0xff]
    %v1351 = vld [vmem:[%s1348 + $0x10] sm:$0xff]
    %v1352 = vld [vmem:[%s1348 + $0x18] sm:$0xff]
    %v1353 = vld [vmem:[%s1348 + $0x20] sm:$0xff]
    %v1354 = vld [vmem:[%s1348 + $0x28] sm:$0xff]
    %v1355 = vld [vmem:[%s1348 + $0x30] sm:$0xff]
    %v1356 = vld [vmem:[%s1348 + $0x38] sm:$0xff]
    %v1357 = vld [vmem:[%s1348 + $0x40] sm:$0xff]
    %v1358 = vld [vmem:[%s1348 + $0x48] sm:$0xff]
    %v1359 = vld [vmem:[%s1348 + $0x50] sm:$0xff]
    %v1360 = vld [vmem:[%s1348 + $0x58] sm:$0xff]
    %v1361 = vld [vmem:[%s1348 + $0x60] sm:$0xff]
    %v1362 = vld [vmem:[%s1348 + $0x68] sm:$0xff]
    %v1363 = vld [vmem:[%s1348 + $0x70] sm:$0xff]
    %v1364 = vld [vmem:[%s1348 + $0x78] sm:$0xff]
    %s1365 = scalar_lea.vmem [#allocation10], 5
    %v1366 = vld [vmem:[%s1365] sm:$0x1]
    %v1368 = vlaneseq
    %v1369 = vshrl.u32 %v1368, 7
    %v1370 = vsub.s32 0, %v1369
    %v1371 = vrot.slane %v1366, %v1370
    %1373 = vmatprep.subr.mxu0 0.0
    %1374 = vmatpush1.msra.mxu0 %v1349
    %1375 = vmatprep.subr.mxu0 0.0
    %1376 = vmatpush1.msra.mxu0 %v1350
    %1377 = vmatprep.subr.mxu0 0.0
    %1378 = vmatpush1.msra.mxu0 %v1351
    %1379 = vmatprep.subr.mxu0 0.0
    %1380 = vmatpush1.msra.mxu0 %v1352
    %1381 = vmatprep.subr.mxu0 0.0
    %1382 = vmatpush1.msra.mxu0 %v1353
    %1383 = vmatprep.subr.mxu0 0.0
    %1384 = vmatpush1.msra.mxu0 %v1354
    %1385 = vmatprep.subr.mxu0 0.0
    %1386 = vmatpush1.msra.mxu0 %v1355
    %1387 = vmatprep.subr.mxu0 0.0
    %1388 = vmatpush1.msra.mxu0 %v1356
    %1389 = vmatprep.subr.mxu0 0.0
    %1390 = vmatpush1.msra.mxu0 %v1357
    %1391 = vmatprep.subr.mxu0 0.0
    %1392 = vmatpush1.msra.mxu0 %v1358
    %1393 = vmatprep.subr.mxu0 0.0
    %1394 = vmatpush1.msra.mxu0 %v1359
    %1395 = vmatprep.subr.mxu0 0.0
    %1396 = vmatpush1.msra.mxu0 %v1360
    %1397 = vmatprep.subr.mxu0 0.0
    %1398 = vmatpush1.msra.mxu0 %v1361
    %1399 = vmatprep.subr.mxu0 0.0
    %1400 = vmatpush1.msra.mxu0 %v1362
    %1401 = vmatprep.subr.mxu0 0.0
    %1402 = vmatpush1.msra.mxu0 %v1363
    %1403 = vmatprep.subr.mxu0 0.0
    %1404 = vmatpush1.msra.mxu0 %v1364
    %1405 = vmatprep.subr.mxu0 0.0
    %1406 = vmatpush1.msra.mxu0 0.0
    %1407 = vmatprep.subr.mxu0 0.0
    %1408 = vmatpush1.msra.mxu0 0.0
    %1409 = vmatprep.subr.mxu0 0.0
    %1410 = vmatpush1.msra.mxu0 0.0
    %1411 = vmatprep.subr.mxu0 0.0
    %1412 = vmatpush1.msra.mxu0 0.0
    %1413 = vmatprep.subr.mxu0 0.0
    %1414 = vmatpush1.msra.mxu0 0.0
    %1415 = vmatprep.subr.mxu0 0.0
    %1416 = vmatpush1.msra.mxu0 0.0
    %1417 = vmatprep.subr.mxu0 0.0
    %1418 = vmatpush1.msra.mxu0 0.0
    %1419 = vmatprep.subr.mxu0 0.0
    %1420 = vmatpush1.msra.mxu0 0.0
    %1421 = vmatprep.subr.mxu0 0.0
    %1422 = vmatpush1.msra.mxu0 0.0
    %1423 = vmatprep.subr.mxu0 0.0
    %1424 = vmatpush1.msra.mxu0 0.0
    %1425 = vmatprep.subr.mxu0 0.0
    %1426 = vmatpush1.msra.mxu0 0.0
    %1427 = vmatprep.subr.mxu0 0.0
    %1428 = vmatpush1.msra.mxu0 0.0
    %1429 = vmatprep.subr.mxu0 0.0
    %1430 = vmatpush1.msra.mxu0 0.0
    %1431 = vmatprep.subr.mxu0 0.0
    %1432 = vmatpush1.msra.mxu0 0.0
    %1433 = vmatprep.subr.mxu0 0.0
    %1434 = vmatpush1.msra.mxu0 0.0
    %1435 = vmatprep.subr.mxu0 0.0
    %1436 = vmatpush1.msra.mxu0 0.0
    %1437 = vmatprep.mubr.f32.mxu0 0.0
    %1438 = vmatmul.mubr.f32.gmra.mrb[0].mxu0 %v1346
    %v1439 = vpop.f32.mrb[0].mxu0
    %v1440 = vadd.f32 %v1371, %v1439
    %v1441 = vpop.f32.mrb[0].mxu0
    %1442 = vmatprep.mubr.f32.mxu0 0.0
    %1443 = vmatmul.mubr.f32.gmra.mrb[0].mxu0 %v1347
    %v1444 = vpop.f32.mrb[0].mxu0
    %v1445 = vadd.f32 %v1371, %v1444
    %v1446 = vpop.f32.mrb[0].mxu0
    %1447 = vdwg.mxu0
    %1448 = vmatprep.subr.mxu0 0.0
    %1449 = vmatpush1.msra.mxu0 %v1440
    %1450 = vmatprep.subr.mxu0 0.0
    %1451 = vmatpush1.msra.mxu0 %v1445
    %1452 = vmatprep.subr.mxu0 0.0
    %1453 = vmatpush1.msra.mxu0 0.0
    %1454 = vmatprep.subr.mxu0 0.0
    %1455 = vmatpush1.msra.mxu0 0.0
    %1456 = vmatprep.subr.mxu0 0.0
    %1457 = vmatpush1.msra.mxu0 0.0
    %1458 = vmatprep.subr.mxu0 0.0
    %1459 = vmatpush1.msra.mxu0 0.0
    %1460 = vmatprep.subr.mxu0 0.0
    %1461 = vmatpush1.msra.mxu0 0.0
    %1462 = vmatprep.subr.mxu0 0.0
    %1463 = vmatpush1.msra.mxu0 0.0
    %1464 = vmatprep.subr.mxu0 0.0
    %1465 = vmatpush1.msra.mxu0 0.0
    %1466 = vmatprep.subr.mxu0 0.0
    %1467 = vmatpush1.msra.mxu0 0.0
    %1468 = vmatprep.subr.mxu0 0.0
    %1469 = vmatpush1.msra.mxu0 0.0
    %1470 = vmatprep.subr.mxu0 0.0
    %1471 = vmatpush1.msra.mxu0 0.0
    %1472 = vmatprep.subr.mxu0 0.0
    %1473 = vmatpush1.msra.mxu0 0.0
    %1474 = vmatprep.subr.mxu0 0.0
    %1475 = vmatpush1.msra.mxu0 0.0
    %1476 = vmatprep.subr.mxu0 0.0
    %1477 = vmatpush1.msra.mxu0 0.0
    %1478 = vmatprep.subr.mxu0 0.0
    %1479 = vmatpush1.msra.mxu0 0.0
    %1480 = vmatprep.subr.mxu0 0.0
    %1481 = vmatpush1.msra.mxu0 0.0
    %1482 = vmatprep.subr.mxu0 0.0
    %1483 = vmatpush1.msra.mxu0 0.0
    %1484 = vmatprep.subr.mxu0 0.0
    %1485 = vmatpush1.msra.mxu0 0.0
    %1486 = vmatprep.subr.mxu0 0.0
    %1487 = vmatpush1.msra.mxu0 0.0
    %1488 = vmatprep.subr.mxu0 0.0
    %1489 = vmatpush1.msra.mxu0 0.0
    %1490 = vmatprep.subr.mxu0 0.0
    %1491 = vmatpush1.msra.mxu0 0.0
    %1492 = vmatprep.subr.mxu0 0.0
    %1493 = vmatpush1.msra.mxu0 0.0
    %1494 = vmatprep.subr.mxu0 0.0
    %1495 = vmatpush1.msra.mxu0 0.0
    %1496 = vmatprep.subr.mxu0 0.0
    %1497 = vmatpush1.msra.mxu0 0.0
    %1498 = vmatprep.subr.mxu0 0.0
    %1499 = vmatpush1.msra.mxu0 0.0
    %1500 = vmatprep.subr.mxu0 0.0
    %1501 = vmatpush1.msra.mxu0 0.0
    %1502 = vmatprep.subr.mxu0 0.0
    %1503 = vmatpush1.msra.mxu0 0.0
    %1504 = vmatprep.subr.mxu0 0.0
    %1505 = vmatpush1.msra.mxu0 0.0
    %1506 = vmatprep.subr.mxu0 0.0
    %1507 = vmatpush1.msra.mxu0 0.0
    %1508 = vmatprep.subr.mxu0 0.0
    %1509 = vmatpush1.msra.mxu0 0.0
    %1510 = vmatprep.subr.mxu0 0.0
    %1511 = vmatpush1.msra.mxu0 0.0
    %1512 = vmatprep.mubr.f32.mxu0 0.0
    %1513 = vmatmul.mubr.f32.gmra.mrb[0].mxu0 %v113
    %v1514 = vpop.f32.mrb[0].mxu0
    %v1515 = vadd.f32 0.0, %v1514
    %v1516 = vpop.f32.mrb[0].mxu0
    %1517 = vmatprep.mubr.f32.mxu0 0.0
    %1518 = vmatmul.mubr.f32.gmra.mrb[0].mxu0 %v116
    %v1519 = vpop.f32.mrb[0].mxu0
    %v1520 = vadd.f32 0.0, %v1519
    %v1521 = vpop.f32.mrb[0].mxu0
    %1522 = vmatprep.mubr.f32.mxu0 0.0
    %1523 = vmatmul.mubr.f32.gmra.mrb[0].mxu0 %v119
    %v1524 = vpop.f32.mrb[0].mxu0
    %v1525 = vadd.f32 0.0, %v1524
    %v1526 = vpop.f32.mrb[0].mxu0
    %1527 = vmatprep.mubr.f32.mxu0 0.0
    %1528 = vmatmul.mubr.f32.gmra.mrb[0].mxu0 %v122
    %v1529 = vpop.f32.mrb[0].mxu0
    %v1530 = vadd.f32 0.0, %v1529
    %v1531 = vpop.f32.mrb[0].mxu0
    %1532 = vdwg.mxu0
    %1533 = vmatprep.subr.mxu0 0.0
    %1534 = vmatpush1.msra.mxu0 %v1440
    %1535 = vmatprep.subr.mxu0 0.0
    %1536 = vmatpush1.msra.mxu0 %v1445
    %1537 = vmatprep.subr.mxu0 0.0
    %1538 = vmatpush1.msra.mxu0 0.0
    %1539 = vmatprep.subr.mxu0 0.0
    %1540 = vmatpush1.msra.mxu0 0.0
    %1541 = vmatprep.subr.mxu0 0.0
    %1542 = vmatpush1.msra.mxu0 0.0
    %1543 = vmatprep.subr.mxu0 0.0
    %1544 = vmatpush1.msra.mxu0 0.0
    %1545 = vmatprep.subr.mxu0 0.0
    %1546 = vmatpush1.msra.mxu0 0.0
    %1547 = vmatprep.subr.mxu0 0.0
    %1548 = vmatpush1.msra.mxu0 0.0
    %1549 = vmatprep.subr.mxu0 0.0
    %1550 = vmatpush1.msra.mxu0 0.0
    %1551 = vmatprep.subr.mxu0 0.0
    %1552 = vmatpush1.msra.mxu0 0.0
    %1553 = vmatprep.subr.mxu0 0.0
    %1554 = vmatpush1.msra.mxu0 0.0
    %1555 = vmatprep.subr.mxu0 0.0
    %1556 = vmatpush1.msra.mxu0 0.0
    %1557 = vmatprep.subr.mxu0 0.0
    %1558 = vmatpush1.msra.mxu0 0.0
    %1559 = vmatprep.subr.mxu0 0.0
    %1560 = vmatpush1.msra.mxu0 0.0
    %1561 = vmatprep.subr.mxu0 0.0
    %1562 = vmatpush1.msra.mxu0 0.0
    %1563 = vmatprep.subr.mxu0 0.0
    %1564 = vmatpush1.msra.mxu0 0.0
    %1565 = vmatprep.subr.mxu0 0.0
    %1566 = vmatpush1.msra.mxu0 0.0
    %1567 = vmatprep.subr.mxu0 0.0
    %1568 = vmatpush1.msra.mxu0 0.0
    %1569 = vmatprep.subr.mxu0 0.0
    %1570 = vmatpush1.msra.mxu0 0.0
    %1571 = vmatprep.subr.mxu0 0.0
    %1572 = vmatpush1.msra.mxu0 0.0
    %1573 = vmatprep.subr.mxu0 0.0
    %1574 = vmatpush1.msra.mxu0 0.0
    %1575 = vmatprep.subr.mxu0 0.0
    %1576 = vmatpush1.msra.mxu0 0.0
    %1577 = vmatprep.subr.mxu0 0.0
    %1578 = vmatpush1.msra.mxu0 0.0
    %1579 = vmatprep.subr.mxu0 0.0
    %1580 = vmatpush1.msra.mxu0 0.0
    %1581 = vmatprep.subr.mxu0 0.0
    %1582 = vmatpush1.msra.mxu0 0.0
    %1583 = vmatprep.subr.mxu0 0.0
    %1584 = vmatpush1.msra.mxu0 0.0
    %1585 = vmatprep.subr.mxu0 0.0
    %1586 = vmatpush1.msra.mxu0 0.0
    %1587 = vmatprep.subr.mxu0 0.0
    %1588 = vmatpush1.msra.mxu0 0.0
    %1589 = vmatprep.subr.mxu0 0.0
    %1590 = vmatpush1.msra.mxu0 0.0
    %1591 = vmatprep.subr.mxu0 0.0
    %1592 = vmatpush1.msra.mxu0 0.0
    %1593 = vmatprep.subr.mxu0 0.0
    %1594 = vmatpush1.msra.mxu0 0.0
    %1595 = vmatprep.subr.mxu0 0.0
    %1596 = vmatpush1.msra.mxu0 0.0
    %1597 = vmatprep.mubr.f32.mxu0 0.0
    %1598 = vmatmul.mubr.f32.gmra.mrb[0].mxu0 %v210
    %v1599 = vpop.f32.mrb[0].mxu0
    %v1600 = vadd.f32 0.0, %v1599
    %v1601 = vpop.f32.mrb[0].mxu0
    %1602 = vmatprep.mubr.f32.mxu0 0.0
    %1603 = vmatmul.mubr.f32.gmra.mrb[0].mxu0 %v213
    %v1604 = vpop.f32.mrb[0].mxu0
    %v1605 = vadd.f32 0.0, %v1604
    %v1606 = vpop.f32.mrb[0].mxu0
    %1607 = vmatprep.mubr.f32.mxu0 0.0
    %1608 = vmatmul.mubr.f32.gmra.mrb[0].mxu0 %v216
    %v1609 = vpop.f32.mrb[0].mxu0
    %v1610 = vadd.f32 0.0, %v1609
    %v1611 = vpop.f32.mrb[0].mxu0
    %1612 = vmatprep.mubr.f32.mxu0 0.0
    %1613 = vmatmul.mubr.f32.gmra.mrb[0].mxu0 %v219
    %v1614 = vpop.f32.mrb[0].mxu0
    %v1615 = vadd.f32 0.0, %v1614
    %v1616 = vpop.f32.mrb[0].mxu0
    %1617 = vdwg.mxu0
    %s1618 = scalar_lea.vmem [#allocation8], 1280
    %v1619 = vld [vmem:[%s1618] sm:$0xff]
    %v1620 = vld [vmem:[%s1618 + $0x8] sm:$0xff]
    %v1621 = vld [vmem:[%s1618 + $0x10] sm:$0xff]
    %v1622 = vld [vmem:[%s1618 + $0x18] sm:$0xff]
    %v1623 = vld [vmem:[%s1618 + $0x20] sm:$0xff]
    %v1624 = vld [vmem:[%s1618 + $0x28] sm:$0xff]
    %v1625 = vld [vmem:[%s1618 + $0x30] sm:$0xff]
    %v1626 = vld [vmem:[%s1618 + $0x38] sm:$0xff]
    %v1627 = vld [vmem:[%s1618 + $0x40] sm:$0xff]
    %v1628 = vld [vmem:[%s1618 + $0x48] sm:$0xff]
    %v1629 = vld [vmem:[%s1618 + $0x50] sm:$0xff]
    %v1630 = vld [vmem:[%s1618 + $0x58] sm:$0xff]
    %v1631 = vld [vmem:[%s1618 + $0x60] sm:$0xff]
    %v1632 = vld [vmem:[%s1618 + $0x68] sm:$0xff]
    %v1633 = vld [vmem:[%s1618 + $0x70] sm:$0xff]
    %v1634 = vld [vmem:[%s1618 + $0x78] sm:$0xff]
    %s1635 = scalar_lea.vmem [#allocation8], 1408
    %v1636 = vld [vmem:[%s1635] sm:$0xff]
    %v1637 = vld [vmem:[%s1635 + $0x8] sm:$0xff]
    %v1638 = vld [vmem:[%s1635 + $0x10] sm:$0xff]
    %v1639 = vld [vmem:[%s1635 + $0x18] sm:$0xff]
    %v1640 = vld [vmem:[%s1635 + $0x20] sm:$0xff]
    %v1641 = vld [vmem:[%s1635 + $0x28] sm:$0xff]
    %v1642 = vld [vmem:[%s1635 + $0x30] sm:$0xff]
    %v1643 = vld [vmem:[%s1635 + $0x38] sm:$0xff]
    %v1644 = vld [vmem:[%s1635 + $0x40] sm:$0xff]
    %v1645 = vld [vmem:[%s1635 + $0x48] sm:$0xff]
    %v1646 = vld [vmem:[%s1635 + $0x50] sm:$0xff]
    %v1647 = vld [vmem:[%s1635 + $0x58] sm:$0xff]
    %v1648 = vld [vmem:[%s1635 + $0x60] sm:$0xff]
    %v1649 = vld [vmem:[%s1635 + $0x68] sm:$0xff]
    %v1650 = vld [vmem:[%s1635 + $0x70] sm:$0xff]
    %v1651 = vld [vmem:[%s1635 + $0x78] sm:$0xff]
    %1652 = vmatprep.subr.mxu0 0.0
    %1653 = vmatpush1.msra.mxu0 %v1636
    %1654 = vmatprep.subr.mxu0 0.0
    %1655 = vmatpush1.msra.mxu0 %v1637
    %1656 = vmatprep.subr.mxu0 0.0
    %1657 = vmatpush1.msra.mxu0 %v1638
    %1658 = vmatprep.subr.mxu0 0.0
    %1659 = vmatpush1.msra.mxu0 %v1639
    %1660 = vmatprep.subr.mxu0 0.0
    %1661 = vmatpush1.msra.mxu0 %v1640
    %1662 = vmatprep.subr.mxu0 0.0
    %1663 = vmatpush1.msra.mxu0 %v1641
    %1664 = vmatprep.subr.mxu0 0.0
    %1665 = vmatpush1.msra.mxu0 %v1642
    %1666 = vmatprep.subr.mxu0 0.0
    %1667 = vmatpush1.msra.mxu0 %v1643
    %1668 = vmatprep.subr.mxu0 0.0
    %1669 = vmatpush1.msra.mxu0 %v1644
    %1670 = vmatprep.subr.mxu0 0.0
    %1671 = vmatpush1.msra.mxu0 %v1645
    %1672 = vmatprep.subr.mxu0 0.0
    %1673 = vmatpush1.msra.mxu0 %v1646
    %1674 = vmatprep.subr.mxu0 0.0
    %1675 = vmatpush1.msra.mxu0 %v1647
    %1676 = vmatprep.subr.mxu0 0.0
    %1677 = vmatpush1.msra.mxu0 %v1648
    %1678 = vmatprep.subr.mxu0 0.0
    %1679 = vmatpush1.msra.mxu0 %v1649
    %1680 = vmatprep.subr.mxu0 0.0
    %1681 = vmatpush1.msra.mxu0 %v1650
    %1682 = vmatprep.subr.mxu0 0.0
    %1683 = vmatpush1.msra.mxu0 %v1651
    %1684 = vmatprep.subr.mxu0 0.0
    %1685 = vmatpush1.msra.mxu0 0.0
    %1686 = vmatprep.subr.mxu0 0.0
    %1687 = vmatpush1.msra.mxu0 0.0
    %1688 = vmatprep.subr.mxu0 0.0
    %1689 = vmatpush1.msra.mxu0 0.0
    %1690 = vmatprep.subr.mxu0 0.0
    %1691 = vmatpush1.msra.mxu0 0.0
    %1692 = vmatprep.subr.mxu0 0.0
    %1693 = vmatpush1.msra.mxu0 0.0
    %1694 = vmatprep.subr.mxu0 0.0
    %1695 = vmatpush1.msra.mxu0 0.0
    %1696 = vmatprep.subr.mxu0 0.0
    %1697 = vmatpush1.msra.mxu0 0.0
    %1698 = vmatprep.subr.mxu0 0.0
    %1699 = vmatpush1.msra.mxu0 0.0
    %1700 = vmatprep.subr.mxu0 0.0
    %1701 = vmatpush1.msra.mxu0 0.0
    %1702 = vmatprep.subr.mxu0 0.0
    %1703 = vmatpush1.msra.mxu0 0.0
    %1704 = vmatprep.subr.mxu0 0.0
    %1705 = vmatpush1.msra.mxu0 0.0
    %1706 = vmatprep.subr.mxu0 0.0
    %1707 = vmatpush1.msra.mxu0 0.0
    %1708 = vmatprep.subr.mxu0 0.0
    %1709 = vmatpush1.msra.mxu0 0.0
    %1710 = vmatprep.subr.mxu0 0.0
    %1711 = vmatpush1.msra.mxu0 0.0
    %1712 = vmatprep.subr.mxu0 0.0
    %1713 = vmatpush1.msra.mxu0 0.0
    %1714 = vmatprep.subr.mxu0 0.0
    %1715 = vmatpush1.msra.mxu0 0.0
    %1716 = vmatprep.mubr.f32.mxu0 0.0
    %1717 = vmatmul.mubr.f32.gmra.mrb[0].mxu0 %v1600
    %v1718 = vpop.f32.mrb[0].mxu0
    %v1719 = vadd.f32 0.0, %v1718
    %v1720 = vpop.f32.mrb[0].mxu0
    %1721 = vmatprep.mubr.f32.mxu0 0.0
    %1722 = vmatmul.mubr.f32.gmra.mrb[0].mxu0 %v1605
    %v1723 = vpop.f32.mrb[0].mxu0
    %v1724 = vadd.f32 0.0, %v1723
    %v1725 = vpop.f32.mrb[0].mxu0
    %1726 = vmatprep.mubr.f32.mxu0 0.0
    %1727 = vmatmul.mubr.f32.gmra.mrb[0].mxu0 %v1610
    %v1728 = vpop.f32.mrb[0].mxu0
    %v1729 = vadd.f32 0.0, %v1728
    %v1730 = vpop.f32.mrb[0].mxu0
    %1731 = vmatprep.mubr.f32.mxu0 0.0
    %1732 = vmatmul.mubr.f32.gmra.mrb[0].mxu0 %v1615
    %v1733 = vpop.f32.mrb[0].mxu0
    %v1734 = vadd.f32 0.0, %v1733
    %v1735 = vpop.f32.mrb[0].mxu0
    %1736 = vdwg.mxu0
    %1737 = vmatprep.subr.mxu0 0.0
    %1738 = vmatpush1.msra.mxu0 %v1619
    %1739 = vmatprep.subr.mxu0 0.0
    %1740 = vmatpush1.msra.mxu0 %v1620
    %1741 = vmatprep.subr.mxu0 0.0
    %1742 = vmatpush1.msra.mxu0 %v1621
    %1743 = vmatprep.subr.mxu0 0.0
    %1744 = vmatpush1.msra.mxu0 %v1622
    %1745 = vmatprep.subr.mxu0 0.0
    %1746 = vmatpush1.msra.mxu0 %v1623
    %1747 = vmatprep.subr.mxu0 0.0
    %1748 = vmatpush1.msra.mxu0 %v1624
    %1749 = vmatprep.subr.mxu0 0.0
    %1750 = vmatpush1.msra.mxu0 %v1625
    %1751 = vmatprep.subr.mxu0 0.0
    %1752 = vmatpush1.msra.mxu0 %v1626
    %1753 = vmatprep.subr.mxu0 0.0
    %1754 = vmatpush1.msra.mxu0 %v1627
    %1755 = vmatprep.subr.mxu0 0.0
    %1756 = vmatpush1.msra.mxu0 %v1628
    %1757 = vmatprep.subr.mxu0 0.0
    %1758 = vmatpush1.msra.mxu0 %v1629
    %1759 = vmatprep.subr.mxu0 0.0
    %1760 = vmatpush1.msra.mxu0 %v1630
    %1761 = vmatprep.subr.mxu0 0.0
    %1762 = vmatpush1.msra.mxu0 %v1631
    %1763 = vmatprep.subr.mxu0 0.0
    %1764 = vmatpush1.msra.mxu0 %v1632
    %1765 = vmatprep.subr.mxu0 0.0
    %1766 = vmatpush1.msra.mxu0 %v1633
    %1767 = vmatprep.subr.mxu0 0.0
    %1768 = vmatpush1.msra.mxu0 %v1634
    %1769 = vmatprep.subr.mxu0 0.0
    %1770 = vmatpush1.msra.mxu0 0.0
    %1771 = vmatprep.subr.mxu0 0.0
    %1772 = vmatpush1.msra.mxu0 0.0
    %1773 = vmatprep.subr.mxu0 0.0
    %1774 = vmatpush1.msra.mxu0 0.0
    %1775 = vmatprep.subr.mxu0 0.0
    %1776 = vmatpush1.msra.mxu0 0.0
    %1777 = vmatprep.subr.mxu0 0.0
    %1778 = vmatpush1.msra.mxu0 0.0
    %1779 = vmatprep.subr.mxu0 0.0
    %1780 = vmatpush1.msra.mxu0 0.0
    %1781 = vmatprep.subr.mxu0 0.0
    %1782 = vmatpush1.msra.mxu0 0.0
    %1783 = vmatprep.subr.mxu0 0.0
    %1784 = vmatpush1.msra.mxu0 0.0
    %1785 = vmatprep.subr.mxu0 0.0
    %1786 = vmatpush1.msra.mxu0 0.0
    %1787 = vmatprep.subr.mxu0 0.0
    %1788 = vmatpush1.msra.mxu0 0.0
    %1789 = vmatprep.subr.mxu0 0.0
    %1790 = vmatpush1.msra.mxu0 0.0
    %1791 = vmatprep.subr.mxu0 0.0
    %1792 = vmatpush1.msra.mxu0 0.0
    %1793 = vmatprep.subr.mxu0 0.0
    %1794 = vmatpush1.msra.mxu0 0.0
    %1795 = vmatprep.subr.mxu0 0.0
    %1796 = vmatpush1.msra.mxu0 0.0
    %1797 = vmatprep.subr.mxu0 0.0
    %1798 = vmatpush1.msra.mxu0 0.0
    %1799 = vmatprep.subr.mxu0 0.0
    %1800 = vmatpush1.msra.mxu0 0.0
    %1801 = vmatprep.mubr.f32.mxu0 0.0
    %1802 = vmatmul.mubr.f32.gmra.mrb[0].mxu0 %v1515
    %v1803 = vpop.f32.mrb[0].mxu0
    %v1804 = vadd.f32 %v1719, %v1803
    %v1805 = vpop.f32.mrb[0].mxu0
    %1806 = vmatprep.mubr.f32.mxu0 0.0
    %1807 = vmatmul.mubr.f32.gmra.mrb[0].mxu0 %v1520
    %v1808 = vpop.f32.mrb[0].mxu0
    %v1809 = vadd.f32 %v1724, %v1808
    %v1810 = vpop.f32.mrb[0].mxu0
    %1811 = vmatprep.mubr.f32.mxu0 0.0
    %1812 = vmatmul.mubr.f32.gmra.mrb[0].mxu0 %v1525
    %v1813 = vpop.f32.mrb[0].mxu0
    %v1814 = vadd.f32 %v1729, %v1813
    %v1815 = vpop.f32.mrb[0].mxu0
    %1816 = vmatprep.mubr.f32.mxu0 0.0
    %1817 = vmatmul.mubr.f32.gmra.mrb[0].mxu0 %v1530
    %v1818 = vpop.f32.mrb[0].mxu0
    %v1819 = vadd.f32 %v1734, %v1818
    %v1820 = vpop.f32.mrb[0].mxu0
    %1821 = vdwg.mxu0
    %s1822 = scalar_lea.vmem [#allocation8], 1536
    %v1823 = vld [vmem:[%s1822] sm:$0xff]
    %v1824 = vld [vmem:[%s1822 + $0x8] sm:$0xff]
    %v1825 = vld [vmem:[%s1822 + $0x10] sm:$0xff]
    %v1826 = vld [vmem:[%s1822 + $0x18] sm:$0xff]
    %v1827 = vld [vmem:[%s1822 + $0x20] sm:$0xff]
    %v1828 = vld [vmem:[%s1822 + $0x28] sm:$0xff]
    %v1829 = vld [vmem:[%s1822 + $0x30] sm:$0xff]
    %v1830 = vld [vmem:[%s1822 + $0x38] sm:$0xff]
    %v1831 = vld [vmem:[%s1822 + $0x40] sm:$0xff]
    %v1832 = vld [vmem:[%s1822 + $0x48] sm:$0xff]
    %v1833 = vld [vmem:[%s1822 + $0x50] sm:$0xff]
    %v1834 = vld [vmem:[%s1822 + $0x58] sm:$0xff]
    %v1835 = vld [vmem:[%s1822 + $0x60] sm:$0xff]
    %v1836 = vld [vmem:[%s1822 + $0x68] sm:$0xff]
    %v1837 = vld [vmem:[%s1822 + $0x70] sm:$0xff]
    %v1838 = vld [vmem:[%s1822 + $0x78] sm:$0xff]
    %1839 = vmatprep.subr.mxu0 0.0
    %1840 = vmatpush1.msra.mxu0 %v1823
    %1841 = vmatprep.subr.mxu0 0.0
    %1842 = vmatpush1.msra.mxu0 %v1824
    %1843 = vmatprep.subr.mxu0 0.0
    %1844 = vmatpush1.msra.mxu0 %v1825
    %1845 = vmatprep.subr.mxu0 0.0
    %1846 = vmatpush1.msra.mxu0 %v1826
    %1847 = vmatprep.subr.mxu0 0.0
    %1848 = vmatpush1.msra.mxu0 %v1827
    %1849 = vmatprep.subr.mxu0 0.0
    %1850 = vmatpush1.msra.mxu0 %v1828
    %1851 = vmatprep.subr.mxu0 0.0
    %1852 = vmatpush1.msra.mxu0 %v1829
    %1853 = vmatprep.subr.mxu0 0.0
    %1854 = vmatpush1.msra.mxu0 %v1830
    %1855 = vmatprep.subr.mxu0 0.0
    %1856 = vmatpush1.msra.mxu0 %v1831
    %1857 = vmatprep.subr.mxu0 0.0
    %1858 = vmatpush1.msra.mxu0 %v1832
    %1859 = vmatprep.subr.mxu0 0.0
    %1860 = vmatpush1.msra.mxu0 %v1833
    %1861 = vmatprep.subr.mxu0 0.0
    %1862 = vmatpush1.msra.mxu0 %v1834
    %1863 = vmatprep.subr.mxu0 0.0
    %1864 = vmatpush1.msra.mxu0 %v1835
    %1865 = vmatprep.subr.mxu0 0.0
    %1866 = vmatpush1.msra.mxu0 %v1836
    %1867 = vmatprep.subr.mxu0 0.0
    %1868 = vmatpush1.msra.mxu0 %v1837
    %1869 = vmatprep.subr.mxu0 0.0
    %1870 = vmatpush1.msra.mxu0 %v1838
    %1871 = vmatprep.subr.mxu0 0.0
    %1872 = vmatpush1.msra.mxu0 0.0
    %1873 = vmatprep.subr.mxu0 0.0
    %1874 = vmatpush1.msra.mxu0 0.0
    %1875 = vmatprep.subr.mxu0 0.0
    %1876 = vmatpush1.msra.mxu0 0.0
    %1877 = vmatprep.subr.mxu0 0.0
    %1878 = vmatpush1.msra.mxu0 0.0
    %1879 = vmatprep.subr.mxu0 0.0
    %1880 = vmatpush1.msra.mxu0 0.0
    %1881 = vmatprep.subr.mxu0 0.0
    %1882 = vmatpush1.msra.mxu0 0.0
    %1883 = vmatprep.subr.mxu0 0.0
    %1884 = vmatpush1.msra.mxu0 0.0
    %1885 = vmatprep.subr.mxu0 0.0
    %1886 = vmatpush1.msra.mxu0 0.0
    %1887 = vmatprep.subr.mxu0 0.0
    %1888 = vmatpush1.msra.mxu0 0.0
    %1889 = vmatprep.subr.mxu0 0.0
    %1890 = vmatpush1.msra.mxu0 0.0
    %1891 = vmatprep.subr.mxu0 0.0
    %1892 = vmatpush1.msra.mxu0 0.0
    %1893 = vmatprep.subr.mxu0 0.0
    %1894 = vmatpush1.msra.mxu0 0.0
    %1895 = vmatprep.subr.mxu0 0.0
    %1896 = vmatpush1.msra.mxu0 0.0
    %1897 = vmatprep.subr.mxu0 0.0
    %1898 = vmatpush1.msra.mxu0 0.0
    %1899 = vmatprep.subr.mxu0 0.0
    %1900 = vmatpush1.msra.mxu0 0.0
    %1901 = vmatprep.subr.mxu0 0.0
    %1902 = vmatpush1.msra.mxu0 0.0
    %1903 = vmatprep.mubr.f32.mxu0 0.0
    %1904 = vmatmul.mubr.f32.gmra.mrb[0].mxu0 %v722
    %v1905 = vpop.f32.mrb[0].mxu0
    %v1906 = vadd.f32 0.0, %v1905
    %v1907 = vpop.f32.mrb[0].mxu0
    %1908 = vmatprep.mubr.f32.mxu0 0.0
    %1909 = vmatmul.mubr.f32.gmra.mrb[0].mxu0 %v727
    %v1910 = vpop.f32.mrb[0].mxu0
    %v1911 = vadd.f32 0.0, %v1910
    %v1912 = vpop.f32.mrb[0].mxu0
    %1913 = vmatprep.mubr.f32.mxu0 0.0
    %1914 = vmatmul.mubr.f32.gmra.mrb[0].mxu0 %v732
    %v1915 = vpop.f32.mrb[0].mxu0
    %v1916 = vadd.f32 0.0, %v1915
    %v1917 = vpop.f32.mrb[0].mxu0
    %1918 = vmatprep.mubr.f32.mxu0 0.0
    %1919 = vmatmul.mubr.f32.gmra.mrb[0].mxu0 %v737
    %v1920 = vpop.f32.mrb[0].mxu0
    %v1921 = vadd.f32 0.0, %v1920
    %v1922 = vpop.f32.mrb[0].mxu0
    %1923 = vdwg.mxu0
    %v1924 = vadd.f32 %v1804, %v1906
    %v1925 = vadd.f32 %v1809, %v1911
    %v1926 = vadd.f32 %v1814, %v1916
    %v1927 = vadd.f32 %v1819, %v1921
    %s1928 = scalar_lea.vmem [#allocation10], 6
    %v1929 = vld [vmem:[%s1928] sm:$0x1]
    %v1931 = vlaneseq
    %v1932 = vshrl.u32 %v1931, 7
    %v1933 = vsub.s32 0, %v1932
    %v1934 = vrot.slane %v1929, %v1933
    %v1936 = vadd.f32 %v1924, %v1934
    %v1937 = vadd.f32 %v1925, %v1934
    %v1938 = vadd.f32 %v1926, %v1934
    %v1939 = vadd.f32 %v1927, %v1934
    %v1940 = vmax.f32 %v1936, 0.0
    %v1941 = vmax.f32 %v1937, 0.0
    %v1942 = vmax.f32 %v1938, 0.0
    %v1943 = vmax.f32 %v1939, 0.0
    %s1944 = scalar_lea.vmem [#allocation8], 1664
    %v1945 = vld [vmem:[%s1944] sm:$0xff]
    %v1946 = vld [vmem:[%s1944 + $0x8] sm:$0xff]
    %v1947 = vld [vmem:[%s1944 + $0x10] sm:$0xff]
    %v1948 = vld [vmem:[%s1944 + $0x18] sm:$0xff]
    %v1949 = vld [vmem:[%s1944 + $0x20] sm:$0xff]
    %v1950 = vld [vmem:[%s1944 + $0x28] sm:$0xff]
    %v1951 = vld [vmem:[%s1944 + $0x30] sm:$0xff]
    %v1952 = vld [vmem:[%s1944 + $0x38] sm:$0xff]
    %v1953 = vld [vmem:[%s1944 + $0x40] sm:$0xff]
    %v1954 = vld [vmem:[%s1944 + $0x48] sm:$0xff]
    %v1955 = vld [vmem:[%s1944 + $0x50] sm:$0xff]
    %v1956 = vld [vmem:[%s1944 + $0x58] sm:$0xff]
    %v1957 = vld [vmem:[%s1944 + $0x60] sm:$0xff]
    %v1958 = vld [vmem:[%s1944 + $0x68] sm:$0xff]
    %v1959 = vld [vmem:[%s1944 + $0x70] sm:$0xff]
    %v1960 = vld [vmem:[%s1944 + $0x78] sm:$0xff]
    %s1961 = scalar_lea.vmem [#allocation10], 7
    %v1962 = vld [vmem:[%s1961] sm:$0x1]
    %v1964 = vlaneseq
    %v1965 = vshrl.u32 %v1964, 7
    %v1966 = vsub.s32 0, %v1965
    %v1967 = vrot.slane %v1962, %v1966
    %1969 = vmatprep.subr.mxu0 0.0
    %1970 = vmatpush1.msra.mxu0 %v1945
    %1971 = vmatprep.subr.mxu0 0.0
    %1972 = vmatpush1.msra.mxu0 %v1946
    %1973 = vmatprep.subr.mxu0 0.0
    %1974 = vmatpush1.msra.mxu0 %v1947
    %1975 = vmatprep.subr.mxu0 0.0
    %1976 = vmatpush1.msra.mxu0 %v1948
    %1977 = vmatprep.subr.mxu0 0.0
    %1978 = vmatpush1.msra.mxu0 %v1949
    %1979 = vmatprep.subr.mxu0 0.0
    %1980 = vmatpush1.msra.mxu0 %v1950
    %1981 = vmatprep.subr.mxu0 0.0
    %1982 = vmatpush1.msra.mxu0 %v1951
    %1983 = vmatprep.subr.mxu0 0.0
    %1984 = vmatpush1.msra.mxu0 %v1952
    %1985 = vmatprep.subr.mxu0 0.0
    %1986 = vmatpush1.msra.mxu0 %v1953
    %1987 = vmatprep.subr.mxu0 0.0
    %1988 = vmatpush1.msra.mxu0 %v1954
    %1989 = vmatprep.subr.mxu0 0.0
    %1990 = vmatpush1.msra.mxu0 %v1955
    %1991 = vmatprep.subr.mxu0 0.0
    %1992 = vmatpush1.msra.mxu0 %v1956
    %1993 = vmatprep.subr.mxu0 0.0
    %1994 = vmatpush1.msra.mxu0 %v1957
    %1995 = vmatprep.subr.mxu0 0.0
    %1996 = vmatpush1.msra.mxu0 %v1958
    %1997 = vmatprep.subr.mxu0 0.0
    %1998 = vmatpush1.msra.mxu0 %v1959
    %1999 = vmatprep.subr.mxu0 0.0
    %2000 = vmatpush1.msra.mxu0 %v1960
    %2001 = vmatprep.subr.mxu0 0.0
    %2002 = vmatpush1.msra.mxu0 0.0
    %2003 = vmatprep.subr.mxu0 0.0
    %2004 = vmatpush1.msra.mxu0 0.0
    %2005 = vmatprep.subr.mxu0 0.0
    %2006 = vmatpush1.msra.mxu0 0.0
    %2007 = vmatprep.subr.mxu0 0.0
    %2008 = vmatpush1.msra.mxu0 0.0
    %2009 = vmatprep.subr.mxu0 0.0
    %2010 = vmatpush1.msra.mxu0 0.0
    %2011 = vmatprep.subr.mxu0 0.0
    %2012 = vmatpush1.msra.mxu0 0.0
    %2013 = vmatprep.subr.mxu0 0.0
    %2014 = vmatpush1.msra.mxu0 0.0
    %2015 = vmatprep.subr.mxu0 0.0
    %2016 = vmatpush1.msra.mxu0 0.0
    %2017 = vmatprep.subr.mxu0 0.0
    %2018 = vmatpush1.msra.mxu0 0.0
    %2019 = vmatprep.subr.mxu0 0.0
    %2020 = vmatpush1.msra.mxu0 0.0
    %2021 = vmatprep.subr.mxu0 0.0
    %2022 = vmatpush1.msra.mxu0 0.0
    %2023 = vmatprep.subr.mxu0 0.0
    %2024 = vmatpush1.msra.mxu0 0.0
    %2025 = vmatprep.subr.mxu0 0.0
    %2026 = vmatpush1.msra.mxu0 0.0
    %2027 = vmatprep.subr.mxu0 0.0
    %2028 = vmatpush1.msra.mxu0 0.0
    %2029 = vmatprep.subr.mxu0 0.0
    %2030 = vmatpush1.msra.mxu0 0.0
    %2031 = vmatprep.subr.mxu0 0.0
    %2032 = vmatpush1.msra.mxu0 0.0
    %2033 = vmatprep.mubr.f32.mxu0 0.0
    %2034 = vmatmul.mubr.f32.gmra.mrb[0].mxu0 %v1940
    %v2035 = vpop.f32.mrb[0].mxu0
    %v2036 = vadd.f32 %v1967, %v2035
    %v2037 = vpop.f32.mrb[0].mxu0
    %2038 = vmatprep.mubr.f32.mxu0 0.0
    %2039 = vmatmul.mubr.f32.gmra.mrb[0].mxu0 %v1941
    %v2040 = vpop.f32.mrb[0].mxu0
    %v2041 = vadd.f32 %v1967, %v2040
    %v2042 = vpop.f32.mrb[0].mxu0
    %2043 = vmatprep.mubr.f32.mxu0 0.0
    %2044 = vmatmul.mubr.f32.gmra.mrb[0].mxu0 %v1942
    %v2045 = vpop.f32.mrb[0].mxu0
    %v2046 = vadd.f32 %v1967, %v2045
    %v2047 = vpop.f32.mrb[0].mxu0
    %2048 = vmatprep.mubr.f32.mxu0 0.0
    %2049 = vmatmul.mubr.f32.gmra.mrb[0].mxu0 %v1943
    %v2050 = vpop.f32.mrb[0].mxu0
    %v2051 = vadd.f32 %v1967, %v2050
    %v2052 = vpop.f32.mrb[0].mxu0
    %2053 = vdwg.mxu0
    %s2054 = scalar_lea.vmem [#allocation8], 1792
    %v2055 = vld [vmem:[%s2054] sm:$0xff]
    %v2056 = vld [vmem:[%s2054 + $0x8] sm:$0xff]
    %v2057 = vld [vmem:[%s2054 + $0x10] sm:$0xff]
    %v2058 = vld [vmem:[%s2054 + $0x18] sm:$0xff]
    %v2059 = vld [vmem:[%s2054 + $0x20] sm:$0xff]
    %v2060 = vld [vmem:[%s2054 + $0x28] sm:$0xff]
    %v2061 = vld [vmem:[%s2054 + $0x30] sm:$0xff]
    %v2062 = vld [vmem:[%s2054 + $0x38] sm:$0xff]
    %v2063 = vld [vmem:[%s2054 + $0x40] sm:$0xff]
    %v2064 = vld [vmem:[%s2054 + $0x48] sm:$0xff]
    %v2065 = vld [vmem:[%s2054 + $0x50] sm:$0xff]
    %v2066 = vld [vmem:[%s2054 + $0x58] sm:$0xff]
    %v2067 = vld [vmem:[%s2054 + $0x60] sm:$0xff]
    %v2068 = vld [vmem:[%s2054 + $0x68] sm:$0xff]
    %v2069 = vld [vmem:[%s2054 + $0x70] sm:$0xff]
    %v2070 = vld [vmem:[%s2054 + $0x78] sm:$0xff]
    %s2071 = scalar_lea.vmem [#allocation8], 1920
    %v2072 = vld [vmem:[%s2071] sm:$0xff]
    %v2073 = vld [vmem:[%s2071 + $0x8] sm:$0xff]
    %v2074 = vld [vmem:[%s2071 + $0x10] sm:$0xff]
    %v2075 = vld [vmem:[%s2071 + $0x18] sm:$0xff]
    %v2076 = vld [vmem:[%s2071 + $0x20] sm:$0xff]
    %v2077 = vld [vmem:[%s2071 + $0x28] sm:$0xff]
    %v2078 = vld [vmem:[%s2071 + $0x30] sm:$0xff]
    %v2079 = vld [vmem:[%s2071 + $0x38] sm:$0xff]
    %v2080 = vld [vmem:[%s2071 + $0x40] sm:$0xff]
    %v2081 = vld [vmem:[%s2071 + $0x48] sm:$0xff]
    %v2082 = vld [vmem:[%s2071 + $0x50] sm:$0xff]
    %v2083 = vld [vmem:[%s2071 + $0x58] sm:$0xff]
    %v2084 = vld [vmem:[%s2071 + $0x60] sm:$0xff]
    %v2085 = vld [vmem:[%s2071 + $0x68] sm:$0xff]
    %v2086 = vld [vmem:[%s2071 + $0x70] sm:$0xff]
    %v2087 = vld [vmem:[%s2071 + $0x78] sm:$0xff]
    %2088 = vmatprep.subr.mxu0 0.0
    %2089 = vmatpush1.msra.mxu0 %v2072
    %2090 = vmatprep.subr.mxu0 0.0
    %2091 = vmatpush1.msra.mxu0 %v2073
    %2092 = vmatprep.subr.mxu0 0.0
    %2093 = vmatpush1.msra.mxu0 %v2074
    %2094 = vmatprep.subr.mxu0 0.0
    %2095 = vmatpush1.msra.mxu0 %v2075
    %2096 = vmatprep.subr.mxu0 0.0
    %2097 = vmatpush1.msra.mxu0 %v2076
    %2098 = vmatprep.subr.mxu0 0.0
    %2099 = vmatpush1.msra.mxu0 %v2077
    %2100 = vmatprep.subr.mxu0 0.0
    %2101 = vmatpush1.msra.mxu0 %v2078
    %2102 = vmatprep.subr.mxu0 0.0
    %2103 = vmatpush1.msra.mxu0 %v2079
    %2104 = vmatprep.subr.mxu0 0.0
    %2105 = vmatpush1.msra.mxu0 %v2080
    %2106 = vmatprep.subr.mxu0 0.0
    %2107 = vmatpush1.msra.mxu0 %v2081
    %2108 = vmatprep.subr.mxu0 0.0
    %2109 = vmatpush1.msra.mxu0 %v2082
    %2110 = vmatprep.subr.mxu0 0.0
    %2111 = vmatpush1.msra.mxu0 %v2083
    %2112 = vmatprep.subr.mxu0 0.0
    %2113 = vmatpush1.msra.mxu0 %v2084
    %2114 = vmatprep.subr.mxu0 0.0
    %2115 = vmatpush1.msra.mxu0 %v2085
    %2116 = vmatprep.subr.mxu0 0.0
    %2117 = vmatpush1.msra.mxu0 %v2086
    %2118 = vmatprep.subr.mxu0 0.0
    %2119 = vmatpush1.msra.mxu0 %v2087
    %2120 = vmatprep.subr.mxu0 0.0
    %2121 = vmatpush1.msra.mxu0 0.0
    %2122 = vmatprep.subr.mxu0 0.0
    %2123 = vmatpush1.msra.mxu0 0.0
    %2124 = vmatprep.subr.mxu0 0.0
    %2125 = vmatpush1.msra.mxu0 0.0
    %2126 = vmatprep.subr.mxu0 0.0
    %2127 = vmatpush1.msra.mxu0 0.0
    %2128 = vmatprep.subr.mxu0 0.0
    %2129 = vmatpush1.msra.mxu0 0.0
    %2130 = vmatprep.subr.mxu0 0.0
    %2131 = vmatpush1.msra.mxu0 0.0
    %2132 = vmatprep.subr.mxu0 0.0
    %2133 = vmatpush1.msra.mxu0 0.0
    %2134 = vmatprep.subr.mxu0 0.0
    %2135 = vmatpush1.msra.mxu0 0.0
    %2136 = vmatprep.subr.mxu0 0.0
    %2137 = vmatpush1.msra.mxu0 0.0
    %2138 = vmatprep.subr.mxu0 0.0
    %2139 = vmatpush1.msra.mxu0 0.0
    %2140 = vmatprep.subr.mxu0 0.0
    %2141 = vmatpush1.msra.mxu0 0.0
    %2142 = vmatprep.subr.mxu0 0.0
    %2143 = vmatpush1.msra.mxu0 0.0
    %2144 = vmatprep.subr.mxu0 0.0
    %2145 = vmatpush1.msra.mxu0 0.0
    %2146 = vmatprep.subr.mxu0 0.0
    %2147 = vmatpush1.msra.mxu0 0.0
    %2148 = vmatprep.subr.mxu0 0.0
    %2149 = vmatpush1.msra.mxu0 0.0
    %2150 = vmatprep.subr.mxu0 0.0
    %2151 = vmatpush1.msra.mxu0 0.0
    %2152 = vmatprep.mubr.f32.mxu0 0.0
    %2153 = vmatmul.mubr.f32.gmra.mrb[0].mxu0 %v2036
    %v2154 = vpop.f32.mrb[0].mxu0
    %v2155 = vadd.f32 0.0, %v2154
    %v2156 = vpop.f32.mrb[0].mxu0
    %2157 = vmatprep.mubr.f32.mxu0 0.0
    %2158 = vmatmul.mubr.f32.gmra.mrb[0].mxu0 %v2041
    %v2159 = vpop.f32.mrb[0].mxu0
    %v2160 = vadd.f32 0.0, %v2159
    %v2161 = vpop.f32.mrb[0].mxu0
    %2162 = vmatprep.mubr.f32.mxu0 0.0
    %2163 = vmatmul.mubr.f32.gmra.mrb[0].mxu0 %v2046
    %v2164 = vpop.f32.mrb[0].mxu0
    %v2165 = vadd.f32 0.0, %v2164
    %v2166 = vpop.f32.mrb[0].mxu0
    %2167 = vmatprep.mubr.f32.mxu0 0.0
    %2168 = vmatmul.mubr.f32.gmra.mrb[0].mxu0 %v2051
    %v2169 = vpop.f32.mrb[0].mxu0
    %v2170 = vadd.f32 0.0, %v2169
    %v2171 = vpop.f32.mrb[0].mxu0
    %2172 = vdwg.mxu0
    %2173 = vmatprep.subr.mxu0 0.0
    %2174 = vmatpush1.msra.mxu0 %v2055
    %2175 = vmatprep.subr.mxu0 0.0
    %2176 = vmatpush1.msra.mxu0 %v2056
    %2177 = vmatprep.subr.mxu0 0.0
    %2178 = vmatpush1.msra.mxu0 %v2057
    %2179 = vmatprep.subr.mxu0 0.0
    %2180 = vmatpush1.msra.mxu0 %v2058
    %2181 = vmatprep.subr.mxu0 0.0
    %2182 = vmatpush1.msra.mxu0 %v2059
    %2183 = vmatprep.subr.mxu0 0.0
    %2184 = vmatpush1.msra.mxu0 %v2060
    %2185 = vmatprep.subr.mxu0 0.0
    %2186 = vmatpush1.msra.mxu0 %v2061
    %2187 = vmatprep.subr.mxu0 0.0
    %2188 = vmatpush1.msra.mxu0 %v2062
    %2189 = vmatprep.subr.mxu0 0.0
    %2190 = vmatpush1.msra.mxu0 %v2063
    %2191 = vmatprep.subr.mxu0 0.0
    %2192 = vmatpush1.msra.mxu0 %v2064
    %2193 = vmatprep.subr.mxu0 0.0
    %2194 = vmatpush1.msra.mxu0 %v2065
    %2195 = vmatprep.subr.mxu0 0.0
    %2196 = vmatpush1.msra.mxu0 %v2066
    %2197 = vmatprep.subr.mxu0 0.0
    %2198 = vmatpush1.msra.mxu0 %v2067
    %2199 = vmatprep.subr.mxu0 0.0
    %2200 = vmatpush1.msra.mxu0 %v2068
    %2201 = vmatprep.subr.mxu0 0.0
    %2202 = vmatpush1.msra.mxu0 %v2069
    %2203 = vmatprep.subr.mxu0 0.0
    %2204 = vmatpush1.msra.mxu0 %v2070
    %2205 = vmatprep.subr.mxu0 0.0
    %2206 = vmatpush1.msra.mxu0 0.0
    %2207 = vmatprep.subr.mxu0 0.0
    %2208 = vmatpush1.msra.mxu0 0.0
    %2209 = vmatprep.subr.mxu0 0.0
    %2210 = vmatpush1.msra.mxu0 0.0
    %2211 = vmatprep.subr.mxu0 0.0
    %2212 = vmatpush1.msra.mxu0 0.0
    %2213 = vmatprep.subr.mxu0 0.0
    %2214 = vmatpush1.msra.mxu0 0.0
    %2215 = vmatprep.subr.mxu0 0.0
    %2216 = vmatpush1.msra.mxu0 0.0
    %2217 = vmatprep.subr.mxu0 0.0
    %2218 = vmatpush1.msra.mxu0 0.0
    %2219 = vmatprep.subr.mxu0 0.0
    %2220 = vmatpush1.msra.mxu0 0.0
    %2221 = vmatprep.subr.mxu0 0.0
    %2222 = vmatpush1.msra.mxu0 0.0
    %2223 = vmatprep.subr.mxu0 0.0
    %2224 = vmatpush1.msra.mxu0 0.0
    %2225 = vmatprep.subr.mxu0 0.0
    %2226 = vmatpush1.msra.mxu0 0.0
    %2227 = vmatprep.subr.mxu0 0.0
    %2228 = vmatpush1.msra.mxu0 0.0
    %2229 = vmatprep.subr.mxu0 0.0
    %2230 = vmatpush1.msra.mxu0 0.0
    %2231 = vmatprep.subr.mxu0 0.0
    %2232 = vmatpush1.msra.mxu0 0.0
    %2233 = vmatprep.subr.mxu0 0.0
    %2234 = vmatpush1.msra.mxu0 0.0
    %2235 = vmatprep.subr.mxu0 0.0
    %2236 = vmatpush1.msra.mxu0 0.0
    %2237 = vmatprep.mubr.f32.mxu0 0.0
    %2238 = vmatmul.mubr.f32.gmra.mrb[0].mxu0 %v1515
    %v2239 = vpop.f32.mrb[0].mxu0
    %v2240 = vadd.f32 %v2155, %v2239
    %v2241 = vpop.f32.mrb[0].mxu0
    %2242 = vmatprep.mubr.f32.mxu0 0.0
    %2243 = vmatmul.mubr.f32.gmra.mrb[0].mxu0 %v1520
    %v2244 = vpop.f32.mrb[0].mxu0
    %v2245 = vadd.f32 %v2160, %v2244
    %v2246 = vpop.f32.mrb[0].mxu0
    %2247 = vmatprep.mubr.f32.mxu0 0.0
    %2248 = vmatmul.mubr.f32.gmra.mrb[0].mxu0 %v1525
    %v2249 = vpop.f32.mrb[0].mxu0
    %v2250 = vadd.f32 %v2165, %v2249
    %v2251 = vpop.f32.mrb[0].mxu0
    %2252 = vmatprep.mubr.f32.mxu0 0.0
    %2253 = vmatmul.mubr.f32.gmra.mrb[0].mxu0 %v1530
    %v2254 = vpop.f32.mrb[0].mxu0
    %v2255 = vadd.f32 %v2170, %v2254
    %v2256 = vpop.f32.mrb[0].mxu0
    %2257 = vdwg.mxu0
    %s2258 = scalar_lea.vmem [#allocation10], 8
    %v2259 = vld [vmem:[%s2258] sm:$0x1]
    %v2261 = vlaneseq
    %v2262 = vshrl.u32 %v2261, 7
    %v2263 = vsub.s32 0, %v2262
    %v2264 = vrot.slane %v2259, %v2263
    %v2266 = vadd.f32 %v2240, %v2264
    %v2267 = vadd.f32 %v2245, %v2264
    %v2268 = vadd.f32 %v2250, %v2264
    %v2269 = vadd.f32 %v2255, %v2264
    %v2270 = vmax.f32 %v2266, 0.0
    %v2271 = vmax.f32 %v2267, 0.0
    %v2272 = vmax.f32 %v2268, 0.0
    %v2273 = vmax.f32 %v2269, 0.0
    %s2274 = scalar_lea.vmem [#allocation8], 2048
    %v2275 = vld [vmem:[%s2274] sm:$0xff]
    %v2276 = vld [vmem:[%s2274 + $0x8] sm:$0xff]
    %v2277 = vld [vmem:[%s2274 + $0x10] sm:$0xff]
    %v2278 = vld [vmem:[%s2274 + $0x18] sm:$0xff]
    %v2279 = vld [vmem:[%s2274 + $0x20] sm:$0xff]
    %v2280 = vld [vmem:[%s2274 + $0x28] sm:$0xff]
    %v2281 = vld [vmem:[%s2274 + $0x30] sm:$0xff]
    %v2282 = vld [vmem:[%s2274 + $0x38] sm:$0xff]
    %v2283 = vld [vmem:[%s2274 + $0x40] sm:$0xff]
    %v2284 = vld [vmem:[%s2274 + $0x48] sm:$0xff]
    %v2285 = vld [vmem:[%s2274 + $0x50] sm:$0xff]
    %v2286 = vld [vmem:[%s2274 + $0x58] sm:$0xff]
    %v2287 = vld [vmem:[%s2274 + $0x60] sm:$0xff]
    %v2288 = vld [vmem:[%s2274 + $0x68] sm:$0xff]
    %v2289 = vld [vmem:[%s2274 + $0x70] sm:$0xff]
    %v2290 = vld [vmem:[%s2274 + $0x78] sm:$0xff]
    %s2291 = scalar_lea.vmem [#allocation10], 9
    %v2292 = vld [vmem:[%s2291] sm:$0x1]
    %v2294 = vlaneseq
    %v2295 = vshrl.u32 %v2294, 7
    %v2296 = vsub.s32 0, %v2295
    %v2297 = vrot.slane %v2292, %v2296
    %2299 = vmatprep.subr.mxu0 0.0
    %2300 = vmatpush1.msra.mxu0 %v2275
    %2301 = vmatprep.subr.mxu0 0.0
    %2302 = vmatpush1.msra.mxu0 %v2276
    %2303 = vmatprep.subr.mxu0 0.0
    %2304 = vmatpush1.msra.mxu0 %v2277
    %2305 = vmatprep.subr.mxu0 0.0
    %2306 = vmatpush1.msra.mxu0 %v2278
    %2307 = vmatprep.subr.mxu0 0.0
    %2308 = vmatpush1.msra.mxu0 %v2279
    %2309 = vmatprep.subr.mxu0 0.0
    %2310 = vmatpush1.msra.mxu0 %v2280
    %2311 = vmatprep.subr.mxu0 0.0
    %2312 = vmatpush1.msra.mxu0 %v2281
    %2313 = vmatprep.subr.mxu0 0.0
    %2314 = vmatpush1.msra.mxu0 %v2282
    %2315 = vmatprep.subr.mxu0 0.0
    %2316 = vmatpush1.msra.mxu0 %v2283
    %2317 = vmatprep.subr.mxu0 0.0
    %2318 = vmatpush1.msra.mxu0 %v2284
    %2319 = vmatprep.subr.mxu0 0.0
    %2320 = vmatpush1.msra.mxu0 %v2285
    %2321 = vmatprep.subr.mxu0 0.0
    %2322 = vmatpush1.msra.mxu0 %v2286
    %2323 = vmatprep.subr.mxu0 0.0
    %2324 = vmatpush1.msra.mxu0 %v2287
    %2325 = vmatprep.subr.mxu0 0.0
    %2326 = vmatpush1.msra.mxu0 %v2288
    %2327 = vmatprep.subr.mxu0 0.0
    %2328 = vmatpush1.msra.mxu0 %v2289
    %2329 = vmatprep.subr.mxu0 0.0
    %2330 = vmatpush1.msra.mxu0 %v2290
    %2331 = vmatprep.subr.mxu0 0.0
    %2332 = vmatpush1.msra.mxu0 0.0
    %2333 = vmatprep.subr.mxu0 0.0
    %2334 = vmatpush1.msra.mxu0 0.0
    %2335 = vmatprep.subr.mxu0 0.0
    %2336 = vmatpush1.msra.mxu0 0.0
    %2337 = vmatprep.subr.mxu0 0.0
    %2338 = vmatpush1.msra.mxu0 0.0
    %2339 = vmatprep.subr.mxu0 0.0
    %2340 = vmatpush1.msra.mxu0 0.0
    %2341 = vmatprep.subr.mxu0 0.0
    %2342 = vmatpush1.msra.mxu0 0.0
    %2343 = vmatprep.subr.mxu0 0.0
    %2344 = vmatpush1.msra.mxu0 0.0
    %2345 = vmatprep.subr.mxu0 0.0
    %2346 = vmatpush1.msra.mxu0 0.0
    %2347 = vmatprep.subr.mxu0 0.0
    %2348 = vmatpush1.msra.mxu0 0.0
    %2349 = vmatprep.subr.mxu0 0.0
    %2350 = vmatpush1.msra.mxu0 0.0
    %2351 = vmatprep.subr.mxu0 0.0
    %2352 = vmatpush1.msra.mxu0 0.0
    %2353 = vmatprep.subr.mxu0 0.0
    %2354 = vmatpush1.msra.mxu0 0.0
    %2355 = vmatprep.subr.mxu0 0.0
    %2356 = vmatpush1.msra.mxu0 0.0
    %2357 = vmatprep.subr.mxu0 0.0
    %2358 = vmatpush1.msra.mxu0 0.0
    %2359 = vmatprep.subr.mxu0 0.0
    %2360 = vmatpush1.msra.mxu0 0.0
    %2361 = vmatprep.subr.mxu0 0.0
    %2362 = vmatpush1.msra.mxu0 0.0
    %2363 = vmatprep.mubr.f32.mxu0 0.0
    %2364 = vmatmul.mubr.f32.gmra.mrb[0].mxu0 %v2270
    %v2365 = vpop.f32.mrb[0].mxu0
    %v2366 = vadd.f32 %v2297, %v2365
    %v2367 = vpop.f32.mrb[0].mxu0
    %2368 = vmatprep.mubr.f32.mxu0 0.0
    %2369 = vmatmul.mubr.f32.gmra.mrb[0].mxu0 %v2271
    %v2370 = vpop.f32.mrb[0].mxu0
    %v2371 = vadd.f32 %v2297, %v2370
    %v2372 = vpop.f32.mrb[0].mxu0
    %2373 = vmatprep.mubr.f32.mxu0 0.0
    %2374 = vmatmul.mubr.f32.gmra.mrb[0].mxu0 %v2272
    %v2375 = vpop.f32.mrb[0].mxu0
    %v2376 = vadd.f32 %v2297, %v2375
    %v2377 = vpop.f32.mrb[0].mxu0
    %2378 = vmatprep.mubr.f32.mxu0 0.0
    %2379 = vmatmul.mubr.f32.gmra.mrb[0].mxu0 %v2273
    %v2380 = vpop.f32.mrb[0].mxu0
    %v2381 = vadd.f32 %v2297, %v2380
    %v2382 = vpop.f32.mrb[0].mxu0
    %2383 = vdwg.mxu0
    %2384 = vmatprep.subr.mxu0 0.0
    %2385 = vmatpush1.msra.mxu0 %v2366
    %2386 = vmatprep.subr.mxu0 0.0
    %2387 = vmatpush1.msra.mxu0 %v2371
    %2388 = vmatprep.subr.mxu0 0.0
    %2389 = vmatpush1.msra.mxu0 %v2376
    %2390 = vmatprep.subr.mxu0 0.0
    %2391 = vmatpush1.msra.mxu0 %v2381
    %2392 = vmatprep.subr.mxu0 0.0
    %2393 = vmatpush1.msra.mxu0 0.0
    %2394 = vmatprep.subr.mxu0 0.0
    %2395 = vmatpush1.msra.mxu0 0.0
    %2396 = vmatprep.subr.mxu0 0.0
    %2397 = vmatpush1.msra.mxu0 0.0
    %2398 = vmatprep.subr.mxu0 0.0
    %2399 = vmatpush1.msra.mxu0 0.0
    %2400 = vmatprep.subr.mxu0 0.0
    %2401 = vmatpush1.msra.mxu0 0.0
    %2402 = vmatprep.subr.mxu0 0.0
    %2403 = vmatpush1.msra.mxu0 0.0
    %2404 = vmatprep.subr.mxu0 0.0
    %2405 = vmatpush1.msra.mxu0 0.0
    %2406 = vmatprep.subr.mxu0 0.0
    %2407 = vmatpush1.msra.mxu0 0.0
    %2408 = vmatprep.subr.mxu0 0.0
    %2409 = vmatpush1.msra.mxu0 0.0
    %2410 = vmatprep.subr.mxu0 0.0
    %2411 = vmatpush1.msra.mxu0 0.0
    %2412 = vmatprep.subr.mxu0 0.0
    %2413 = vmatpush1.msra.mxu0 0.0
    %2414 = vmatprep.subr.mxu0 0.0
    %2415 = vmatpush1.msra.mxu0 0.0
    %2416 = vmatprep.subr.mxu0 0.0
    %2417 = vmatpush1.msra.mxu0 0.0
    %2418 = vmatprep.subr.mxu0 0.0
    %2419 = vmatpush1.msra.mxu0 0.0
    %2420 = vmatprep.subr.mxu0 0.0
    %2421 = vmatpush1.msra.mxu0 0.0
    %2422 = vmatprep.subr.mxu0 0.0
    %2423 = vmatpush1.msra.mxu0 0.0
    %2424 = vmatprep.subr.mxu0 0.0
    %2425 = vmatpush1.msra.mxu0 0.0
    %2426 = vmatprep.subr.mxu0 0.0
    %2427 = vmatpush1.msra.mxu0 0.0
    %2428 = vmatprep.subr.mxu0 0.0
    %2429 = vmatpush1.msra.mxu0 0.0
    %2430 = vmatprep.subr.mxu0 0.0
    %2431 = vmatpush1.msra.mxu0 0.0
    %2432 = vmatprep.subr.mxu0 0.0
    %2433 = vmatpush1.msra.mxu0 0.0
    %2434 = vmatprep.subr.mxu0 0.0
    %2435 = vmatpush1.msra.mxu0 0.0
    %2436 = vmatprep.subr.mxu0 0.0
    %2437 = vmatpush1.msra.mxu0 0.0
    %2438 = vmatprep.subr.mxu0 0.0
    %2439 = vmatpush1.msra.mxu0 0.0
    %2440 = vmatprep.subr.mxu0 0.0
    %2441 = vmatpush1.msra.mxu0 0.0
    %2442 = vmatprep.subr.mxu0 0.0
    %2443 = vmatpush1.msra.mxu0 0.0
    %2444 = vmatprep.subr.mxu0 0.0
    %2445 = vmatpush1.msra.mxu0 0.0
    %2446 = vmatprep.subr.mxu0 0.0
    %2447 = vmatpush1.msra.mxu0 0.0
    %2448 = vmatprep.mubr.f32.mxu0 0.0
    %2449 = vmatmul.mubr.f32.gmra.mrb[0].mxu0 %v1072
    %v2450 = vpop.f32.mrb[0].mxu0
    %v2451 = vadd.f32 0.0, %v2450
    %v2452 = vpop.f32.mrb[0].mxu0
    %2453 = vmatprep.mubr.f32.mxu0 0.0
    %2454 = vmatmul.mubr.f32.gmra.mrb[0].mxu0 %v1075
    %v2455 = vpop.f32.mrb[0].mxu0
    %v2456 = vadd.f32 0.0, %v2455
    %v2457 = vpop.f32.mrb[0].mxu0
    %2458 = vdwg.mxu0
    %s2459 = scalar_lea.vmem [#allocation8], 2176
    %v2460 = vld [vmem:[%s2459] sm:$0xff]
    %v2461 = vld [vmem:[%s2459 + $0x8] sm:$0xff]
    %v2462 = vld [vmem:[%s2459 + $0x10] sm:$0xff]
    %v2463 = vld [vmem:[%s2459 + $0x18] sm:$0xff]
    %v2464 = vld [vmem:[%s2459 + $0x20] sm:$0xff]
    %v2465 = vld [vmem:[%s2459 + $0x28] sm:$0xff]
    %v2466 = vld [vmem:[%s2459 + $0x30] sm:$0xff]
    %v2467 = vld [vmem:[%s2459 + $0x38] sm:$0xff]
    %v2468 = vld [vmem:[%s2459 + $0x40] sm:$0xff]
    %v2469 = vld [vmem:[%s2459 + $0x48] sm:$0xff]
    %v2470 = vld [vmem:[%s2459 + $0x50] sm:$0xff]
    %v2471 = vld [vmem:[%s2459 + $0x58] sm:$0xff]
    %v2472 = vld [vmem:[%s2459 + $0x60] sm:$0xff]
    %v2473 = vld [vmem:[%s2459 + $0x68] sm:$0xff]
    %v2474 = vld [vmem:[%s2459 + $0x70] sm:$0xff]
    %v2475 = vld [vmem:[%s2459 + $0x78] sm:$0xff]
    %s2476 = scalar_lea.vmem [#allocation8], 2304
    %v2477 = vld [vmem:[%s2476] sm:$0xff]
    %v2478 = vld [vmem:[%s2476 + $0x8] sm:$0xff]
    %v2479 = vld [vmem:[%s2476 + $0x10] sm:$0xff]
    %v2480 = vld [vmem:[%s2476 + $0x18] sm:$0xff]
    %v2481 = vld [vmem:[%s2476 + $0x20] sm:$0xff]
    %v2482 = vld [vmem:[%s2476 + $0x28] sm:$0xff]
    %v2483 = vld [vmem:[%s2476 + $0x30] sm:$0xff]
    %v2484 = vld [vmem:[%s2476 + $0x38] sm:$0xff]
    %v2485 = vld [vmem:[%s2476 + $0x40] sm:$0xff]
    %v2486 = vld [vmem:[%s2476 + $0x48] sm:$0xff]
    %v2487 = vld [vmem:[%s2476 + $0x50] sm:$0xff]
    %v2488 = vld [vmem:[%s2476 + $0x58] sm:$0xff]
    %v2489 = vld [vmem:[%s2476 + $0x60] sm:$0xff]
    %v2490 = vld [vmem:[%s2476 + $0x68] sm:$0xff]
    %v2491 = vld [vmem:[%s2476 + $0x70] sm:$0xff]
    %v2492 = vld [vmem:[%s2476 + $0x78] sm:$0xff]
    %2493 = vmatprep.subr.mxu0 0.0
    %2494 = vmatpush1.msra.mxu0 %v2477
    %2495 = vmatprep.subr.mxu0 0.0
    %2496 = vmatpush1.msra.mxu0 %v2478
    %2497 = vmatprep.subr.mxu0 0.0
    %2498 = vmatpush1.msra.mxu0 %v2479
    %2499 = vmatprep.subr.mxu0 0.0
    %2500 = vmatpush1.msra.mxu0 %v2480
    %2501 = vmatprep.subr.mxu0 0.0
    %2502 = vmatpush1.msra.mxu0 %v2481
    %2503 = vmatprep.subr.mxu0 0.0
    %2504 = vmatpush1.msra.mxu0 %v2482
    %2505 = vmatprep.subr.mxu0 0.0
    %2506 = vmatpush1.msra.mxu0 %v2483
    %2507 = vmatprep.subr.mxu0 0.0
    %2508 = vmatpush1.msra.mxu0 %v2484
    %2509 = vmatprep.subr.mxu0 0.0
    %2510 = vmatpush1.msra.mxu0 %v2485
    %2511 = vmatprep.subr.mxu0 0.0
    %2512 = vmatpush1.msra.mxu0 %v2486
    %2513 = vmatprep.subr.mxu0 0.0
    %2514 = vmatpush1.msra.mxu0 %v2487
    %2515 = vmatprep.subr.mxu0 0.0
    %2516 = vmatpush1.msra.mxu0 %v2488
    %2517 = vmatprep.subr.mxu0 0.0
    %2518 = vmatpush1.msra.mxu0 %v2489
    %2519 = vmatprep.subr.mxu0 0.0
    %2520 = vmatpush1.msra.mxu0 %v2490
    %2521 = vmatprep.subr.mxu0 0.0
    %2522 = vmatpush1.msra.mxu0 %v2491
    %2523 = vmatprep.subr.mxu0 0.0
    %2524 = vmatpush1.msra.mxu0 %v2492
    %2525 = vmatprep.subr.mxu0 0.0
    %2526 = vmatpush1.msra.mxu0 0.0
    %2527 = vmatprep.subr.mxu0 0.0
    %2528 = vmatpush1.msra.mxu0 0.0
    %2529 = vmatprep.subr.mxu0 0.0
    %2530 = vmatpush1.msra.mxu0 0.0
    %2531 = vmatprep.subr.mxu0 0.0
    %2532 = vmatpush1.msra.mxu0 0.0
    %2533 = vmatprep.subr.mxu0 0.0
    %2534 = vmatpush1.msra.mxu0 0.0
    %2535 = vmatprep.subr.mxu0 0.0
    %2536 = vmatpush1.msra.mxu0 0.0
    %2537 = vmatprep.subr.mxu0 0.0
    %2538 = vmatpush1.msra.mxu0 0.0
    %2539 = vmatprep.subr.mxu0 0.0
    %2540 = vmatpush1.msra.mxu0 0.0
    %2541 = vmatprep.subr.mxu0 0.0
    %2542 = vmatpush1.msra.mxu0 0.0
    %2543 = vmatprep.subr.mxu0 0.0
    %2544 = vmatpush1.msra.mxu0 0.0
    %2545 = vmatprep.subr.mxu0 0.0
    %2546 = vmatpush1.msra.mxu0 0.0
    %2547 = vmatprep.subr.mxu0 0.0
    %2548 = vmatpush1.msra.mxu0 0.0
    %2549 = vmatprep.subr.mxu0 0.0
    %2550 = vmatpush1.msra.mxu0 0.0
    %2551 = vmatprep.subr.mxu0 0.0
    %2552 = vmatpush1.msra.mxu0 0.0
    %2553 = vmatprep.subr.mxu0 0.0
    %2554 = vmatpush1.msra.mxu0 0.0
    %2555 = vmatprep.subr.mxu0 0.0
    %2556 = vmatpush1.msra.mxu0 0.0
    %2557 = vmatprep.mubr.f32.mxu0 0.0
    %2558 = vmatmul.mubr.f32.gmra.mrb[0].mxu0 %v2451
    %v2559 = vpop.f32.mrb[0].mxu0
    %v2560 = vadd.f32 0.0, %v2559
    %v2561 = vpop.f32.mrb[0].mxu0
    %2562 = vmatprep.mubr.f32.mxu0 0.0
    %2563 = vmatmul.mubr.f32.gmra.mrb[0].mxu0 %v2456
    %v2564 = vpop.f32.mrb[0].mxu0
    %v2565 = vadd.f32 0.0, %v2564
    %v2566 = vpop.f32.mrb[0].mxu0
    %2567 = vdwg.mxu0
    %2568 = vmatprep.subr.mxu0 0.0
    %2569 = vmatpush1.msra.mxu0 %v2460
    %2570 = vmatprep.subr.mxu0 0.0
    %2571 = vmatpush1.msra.mxu0 %v2461
    %2572 = vmatprep.subr.mxu0 0.0
    %2573 = vmatpush1.msra.mxu0 %v2462
    %2574 = vmatprep.subr.mxu0 0.0
    %2575 = vmatpush1.msra.mxu0 %v2463
    %2576 = vmatprep.subr.mxu0 0.0
    %2577 = vmatpush1.msra.mxu0 %v2464
    %2578 = vmatprep.subr.mxu0 0.0
    %2579 = vmatpush1.msra.mxu0 %v2465
    %2580 = vmatprep.subr.mxu0 0.0
    %2581 = vmatpush1.msra.mxu0 %v2466
    %2582 = vmatprep.subr.mxu0 0.0
    %2583 = vmatpush1.msra.mxu0 %v2467
    %2584 = vmatprep.subr.mxu0 0.0
    %2585 = vmatpush1.msra.mxu0 %v2468
    %2586 = vmatprep.subr.mxu0 0.0
    %2587 = vmatpush1.msra.mxu0 %v2469
    %2588 = vmatprep.subr.mxu0 0.0
    %2589 = vmatpush1.msra.mxu0 %v2470
    %2590 = vmatprep.subr.mxu0 0.0
    %2591 = vmatpush1.msra.mxu0 %v2471
    %2592 = vmatprep.subr.mxu0 0.0
    %2593 = vmatpush1.msra.mxu0 %v2472
    %2594 = vmatprep.subr.mxu0 0.0
    %2595 = vmatpush1.msra.mxu0 %v2473
    %2596 = vmatprep.subr.mxu0 0.0
    %2597 = vmatpush1.msra.mxu0 %v2474
    %2598 = vmatprep.subr.mxu0 0.0
    %2599 = vmatpush1.msra.mxu0 %v2475
    %2600 = vmatprep.subr.mxu0 0.0
    %2601 = vmatpush1.msra.mxu0 0.0
    %2602 = vmatprep.subr.mxu0 0.0
    %2603 = vmatpush1.msra.mxu0 0.0
    %2604 = vmatprep.subr.mxu0 0.0
    %2605 = vmatpush1.msra.mxu0 0.0
    %2606 = vmatprep.subr.mxu0 0.0
    %2607 = vmatpush1.msra.mxu0 0.0
    %2608 = vmatprep.subr.mxu0 0.0
    %2609 = vmatpush1.msra.mxu0 0.0
    %2610 = vmatprep.subr.mxu0 0.0
    %2611 = vmatpush1.msra.mxu0 0.0
    %2612 = vmatprep.subr.mxu0 0.0
    %2613 = vmatpush1.msra.mxu0 0.0
    %2614 = vmatprep.subr.mxu0 0.0
    %2615 = vmatpush1.msra.mxu0 0.0
    %2616 = vmatprep.subr.mxu0 0.0
    %2617 = vmatpush1.msra.mxu0 0.0
    %2618 = vmatprep.subr.mxu0 0.0
    %2619 = vmatpush1.msra.mxu0 0.0
    %2620 = vmatprep.subr.mxu0 0.0
    %2621 = vmatpush1.msra.mxu0 0.0
    %2622 = vmatprep.subr.mxu0 0.0
    %2623 = vmatpush1.msra.mxu0 0.0
    %2624 = vmatprep.subr.mxu0 0.0
    %2625 = vmatpush1.msra.mxu0 0.0
    %2626 = vmatprep.subr.mxu0 0.0
    %2627 = vmatpush1.msra.mxu0 0.0
    %2628 = vmatprep.subr.mxu0 0.0
    %2629 = vmatpush1.msra.mxu0 0.0
    %2630 = vmatprep.subr.mxu0 0.0
    %2631 = vmatpush1.msra.mxu0 0.0
    %2632 = vmatprep.mubr.f32.mxu0 0.0
    %2633 = vmatmul.mubr.f32.gmra.mrb[0].mxu0 %v1440
    %v2634 = vpop.f32.mrb[0].mxu0
    %v2635 = vadd.f32 %v2560, %v2634
    %v2636 = vpop.f32.mrb[0].mxu0
    %2637 = vmatprep.mubr.f32.mxu0 0.0
    %2638 = vmatmul.mubr.f32.gmra.mrb[0].mxu0 %v1445
    %v2639 = vpop.f32.mrb[0].mxu0
    %v2640 = vadd.f32 %v2565, %v2639
    %v2641 = vpop.f32.mrb[0].mxu0
    %2642 = vdwg.mxu0
    %s2643 = scalar_lea.vmem [#allocation10], 10
    %v2644 = vld [vmem:[%s2643] sm:$0x1]
    %v2646 = vlaneseq
    %v2647 = vshrl.u32 %v2646, 7
    %v2648 = vsub.s32 0, %v2647
    %v2649 = vrot.slane %v2644, %v2648
    %v2651 = vadd.f32 %v2635, %v2649
    %v2652 = vadd.f32 %v2640, %v2649
    %v2653 = vmax.f32 %v2651, 0.0
    %v2654 = vmax.f32 %v2652, 0.0
    %s2655 = scalar_lea.vmem [#allocation8], 2432
    %v2656 = vld [vmem:[%s2655] sm:$0xff]
    %v2657 = vld [vmem:[%s2655 + $0x8] sm:$0xff]
    %v2658 = vld [vmem:[%s2655 + $0x10] sm:$0xff]
    %v2659 = vld [vmem:[%s2655 + $0x18] sm:$0xff]
    %v2660 = vld [vmem:[%s2655 + $0x20] sm:$0xff]
    %v2661 = vld [vmem:[%s2655 + $0x28] sm:$0xff]
    %v2662 = vld [vmem:[%s2655 + $0x30] sm:$0xff]
    %v2663 = vld [vmem:[%s2655 + $0x38] sm:$0xff]
    %v2664 = vld [vmem:[%s2655 + $0x40] sm:$0xff]
    %v2665 = vld [vmem:[%s2655 + $0x48] sm:$0xff]
    %v2666 = vld [vmem:[%s2655 + $0x50] sm:$0xff]
    %v2667 = vld [vmem:[%s2655 + $0x58] sm:$0xff]
    %v2668 = vld [vmem:[%s2655 + $0x60] sm:$0xff]
    %v2669 = vld [vmem:[%s2655 + $0x68] sm:$0xff]
    %v2670 = vld [vmem:[%s2655 + $0x70] sm:$0xff]
    %v2671 = vld [vmem:[%s2655 + $0x78] sm:$0xff]
    %s2672 = scalar_lea.vmem [#allocation10], 11
    %v2673 = vld [vmem:[%s2672] sm:$0x1]
    %v2675 = vlaneseq
    %v2676 = vshrl.u32 %v2675, 7
    %v2677 = vsub.s32 0, %v2676
    %v2678 = vrot.slane %v2673, %v2677
    %2680 = vmatprep.subr.mxu0 0.0
    %2681 = vmatpush1.msra.mxu0 %v2656
    %2682 = vmatprep.subr.mxu0 0.0
    %2683 = vmatpush1.msra.mxu0 %v2657
    %2684 = vmatprep.subr.mxu0 0.0
    %2685 = vmatpush1.msra.mxu0 %v2658
    %2686 = vmatprep.subr.mxu0 0.0
    %2687 = vmatpush1.msra.mxu0 %v2659
    %2688 = vmatprep.subr.mxu0 0.0
    %2689 = vmatpush1.msra.mxu0 %v2660
    %2690 = vmatprep.subr.mxu0 0.0
    %2691 = vmatpush1.msra.mxu0 %v2661
    %2692 = vmatprep.subr.mxu0 0.0
    %2693 = vmatpush1.msra.mxu0 %v2662
    %2694 = vmatprep.subr.mxu0 0.0
    %2695 = vmatpush1.msra.mxu0 %v2663
    %2696 = vmatprep.subr.mxu0 0.0
    %2697 = vmatpush1.msra.mxu0 %v2664
    %2698 = vmatprep.subr.mxu0 0.0
    %2699 = vmatpush1.msra.mxu0 %v2665
    %2700 = vmatprep.subr.mxu0 0.0
    %2701 = vmatpush1.msra.mxu0 %v2666
    %2702 = vmatprep.subr.mxu0 0.0
    %2703 = vmatpush1.msra.mxu0 %v2667
    %2704 = vmatprep.subr.mxu0 0.0
    %2705 = vmatpush1.msra.mxu0 %v2668
    %2706 = vmatprep.subr.mxu0 0.0
    %2707 = vmatpush1.msra.mxu0 %v2669
    %2708 = vmatprep.subr.mxu0 0.0
    %2709 = vmatpush1.msra.mxu0 %v2670
    %2710 = vmatprep.subr.mxu0 0.0
    %2711 = vmatpush1.msra.mxu0 %v2671
    %2712 = vmatprep.subr.mxu0 0.0
    %2713 = vmatpush1.msra.mxu0 0.0
    %2714 = vmatprep.subr.mxu0 0.0
    %2715 = vmatpush1.msra.mxu0 0.0
    %2716 = vmatprep.subr.mxu0 0.0
    %2717 = vmatpush1.msra.mxu0 0.0
    %2718 = vmatprep.subr.mxu0 0.0
    %2719 = vmatpush1.msra.mxu0 0.0
    %2720 = vmatprep.subr.mxu0 0.0
    %2721 = vmatpush1.msra.mxu0 0.0
    %2722 = vmatprep.subr.mxu0 0.0
    %2723 = vmatpush1.msra.mxu0 0.0
    %2724 = vmatprep.subr.mxu0 0.0
    %2725 = vmatpush1.msra.mxu0 0.0
    %2726 = vmatprep.subr.mxu0 0.0
    %2727 = vmatpush1.msra.mxu0 0.0
    %2728 = vmatprep.subr.mxu0 0.0
    %2729 = vmatpush1.msra.mxu0 0.0
    %2730 = vmatprep.subr.mxu0 0.0
    %2731 = vmatpush1.msra.mxu0 0.0
    %2732 = vmatprep.subr.mxu0 0.0
    %2733 = vmatpush1.msra.mxu0 0.0
    %2734 = vmatprep.subr.mxu0 0.0
    %2735 = vmatpush1.msra.mxu0 0.0
    %2736 = vmatprep.subr.mxu0 0.0
    %2737 = vmatpush1.msra.mxu0 0.0
    %2738 = vmatprep.subr.mxu0 0.0
    %2739 = vmatpush1.msra.mxu0 0.0
    %2740 = vmatprep.subr.mxu0 0.0
    %2741 = vmatpush1.msra.mxu0 0.0
    %2742 = vmatprep.subr.mxu0 0.0
    %2743 = vmatpush1.msra.mxu0 0.0
    %2744 = vmatprep.mubr.f32.mxu0 0.0
    %2745 = vmatmul.mubr.f32.gmra.mrb[0].mxu0 %v2653
    %v2746 = vpop.f32.mrb[0].mxu0
    %v2747 = vadd.f32 %v2678, %v2746
    %v2748 = vpop.f32.mrb[0].mxu0
    %2749 = vmatprep.mubr.f32.mxu0 0.0
    %2750 = vmatmul.mubr.f32.gmra.mrb[0].mxu0 %v2654
    %v2751 = vpop.f32.mrb[0].mxu0
    %v2752 = vadd.f32 %v2678, %v2751
    %v2753 = vpop.f32.mrb[0].mxu0
    %2754 = vdwg.mxu0
    %2755 = vmatprep.subr.mxu0 0.0
    %2756 = vmatpush1.msra.mxu0 %v2747
    %2757 = vmatprep.subr.mxu0 0.0
    %2758 = vmatpush1.msra.mxu0 %v2752
    %2759 = vmatprep.subr.mxu0 0.0
    %2760 = vmatpush1.msra.mxu0 0.0
    %2761 = vmatprep.subr.mxu0 0.0
    %2762 = vmatpush1.msra.mxu0 0.0
    %2763 = vmatprep.subr.mxu0 0.0
    %2764 = vmatpush1.msra.mxu0 0.0
    %2765 = vmatprep.subr.mxu0 0.0
    %2766 = vmatpush1.msra.mxu0 0.0
    %2767 = vmatprep.subr.mxu0 0.0
    %2768 = vmatpush1.msra.mxu0 0.0
    %2769 = vmatprep.subr.mxu0 0.0
    %2770 = vmatpush1.msra.mxu0 0.0
    %2771 = vmatprep.subr.mxu0 0.0
    %2772 = vmatpush1.msra.mxu0 0.0
    %2773 = vmatprep.subr.mxu0 0.0
    %2774 = vmatpush1.msra.mxu0 0.0
    %2775 = vmatprep.subr.mxu0 0.0
    %2776 = vmatpush1.msra.mxu0 0.0
    %2777 = vmatprep.subr.mxu0 0.0
    %2778 = vmatpush1.msra.mxu0 0.0
    %2779 = vmatprep.subr.mxu0 0.0
    %2780 = vmatpush1.msra.mxu0 0.0
    %2781 = vmatprep.subr.mxu0 0.0
    %2782 = vmatpush1.msra.mxu0 0.0
    %2783 = vmatprep.subr.mxu0 0.0
    %2784 = vmatpush1.msra.mxu0 0.0
    %2785 = vmatprep.subr.mxu0 0.0
    %2786 = vmatpush1.msra.mxu0 0.0
    %2787 = vmatprep.subr.mxu0 0.0
    %2788 = vmatpush1.msra.mxu0 0.0
    %2789 = vmatprep.subr.mxu0 0.0
    %2790 = vmatpush1.msra.mxu0 0.0
    %2791 = vmatprep.subr.mxu0 0.0
    %2792 = vmatpush1.msra.mxu0 0.0
    %2793 = vmatprep.subr.mxu0 0.0
    %2794 = vmatpush1.msra.mxu0 0.0
    %2795 = vmatprep.subr.mxu0 0.0
    %2796 = vmatpush1.msra.mxu0 0.0
    %2797 = vmatprep.subr.mxu0 0.0
    %2798 = vmatpush1.msra.mxu0 0.0
    %2799 = vmatprep.subr.mxu0 0.0
    %2800 = vmatpush1.msra.mxu0 0.0
    %2801 = vmatprep.subr.mxu0 0.0
    %2802 = vmatpush1.msra.mxu0 0.0
    %2803 = vmatprep.subr.mxu0 0.0
    %2804 = vmatpush1.msra.mxu0 0.0
    %2805 = vmatprep.subr.mxu0 0.0
    %2806 = vmatpush1.msra.mxu0 0.0
    %2807 = vmatprep.subr.mxu0 0.0
    %2808 = vmatpush1.msra.mxu0 0.0
    %2809 = vmatprep.subr.mxu0 0.0
    %2810 = vmatpush1.msra.mxu0 0.0
    %2811 = vmatprep.subr.mxu0 0.0
    %2812 = vmatpush1.msra.mxu0 0.0
    %2813 = vmatprep.subr.mxu0 0.0
    %2814 = vmatpush1.msra.mxu0 0.0
    %2815 = vmatprep.subr.mxu0 0.0
    %2816 = vmatpush1.msra.mxu0 0.0
    %2817 = vmatprep.subr.mxu0 0.0
    %2818 = vmatpush1.msra.mxu0 0.0
    %2819 = vmatprep.mubr.f32.mxu0 0.0
    %2820 = vmatmul.mubr.f32.gmra.mrb[0].mxu0 %v113
    %v2821 = vpop.f32.mrb[0].mxu0
    %v2822 = vadd.f32 0.0, %v2821
    %v2823 = vpop.f32.mrb[0].mxu0
    %2824 = vmatprep.mubr.f32.mxu0 0.0
    %2825 = vmatmul.mubr.f32.gmra.mrb[0].mxu0 %v116
    %v2826 = vpop.f32.mrb[0].mxu0
    %v2827 = vadd.f32 0.0, %v2826
    %v2828 = vpop.f32.mrb[0].mxu0
    %2829 = vmatprep.mubr.f32.mxu0 0.0
    %2830 = vmatmul.mubr.f32.gmra.mrb[0].mxu0 %v119
    %v2831 = vpop.f32.mrb[0].mxu0
    %v2832 = vadd.f32 0.0, %v2831
    %v2833 = vpop.f32.mrb[0].mxu0
    %2834 = vmatprep.mubr.f32.mxu0 0.0
    %2835 = vmatmul.mubr.f32.gmra.mrb[0].mxu0 %v122
    %v2836 = vpop.f32.mrb[0].mxu0
    %v2837 = vadd.f32 0.0, %v2836
    %v2838 = vpop.f32.mrb[0].mxu0
    %2839 = vdwg.mxu0
    %2840 = vmatprep.subr.mxu0 0.0
    %2841 = vmatpush1.msra.mxu0 %v2747
    %2842 = vmatprep.subr.mxu0 0.0
    %2843 = vmatpush1.msra.mxu0 %v2752
    %2844 = vmatprep.subr.mxu0 0.0
    %2845 = vmatpush1.msra.mxu0 0.0
    %2846 = vmatprep.subr.mxu0 0.0
    %2847 = vmatpush1.msra.mxu0 0.0
    %2848 = vmatprep.subr.mxu0 0.0
    %2849 = vmatpush1.msra.mxu0 0.0
    %2850 = vmatprep.subr.mxu0 0.0
    %2851 = vmatpush1.msra.mxu0 0.0
    %2852 = vmatprep.subr.mxu0 0.0
    %2853 = vmatpush1.msra.mxu0 0.0
    %2854 = vmatprep.subr.mxu0 0.0
    %2855 = vmatpush1.msra.mxu0 0.0
    %2856 = vmatprep.subr.mxu0 0.0
    %2857 = vmatpush1.msra.mxu0 0.0
    %2858 = vmatprep.subr.mxu0 0.0
    %2859 = vmatpush1.msra.mxu0 0.0
    %2860 = vmatprep.subr.mxu0 0.0
    %2861 = vmatpush1.msra.mxu0 0.0
    %2862 = vmatprep.subr.mxu0 0.0
    %2863 = vmatpush1.msra.mxu0 0.0
    %2864 = vmatprep.subr.mxu0 0.0
    %2865 = vmatpush1.msra.mxu0 0.0
    %2866 = vmatprep.subr.mxu0 0.0
    %2867 = vmatpush1.msra.mxu0 0.0
    %2868 = vmatprep.subr.mxu0 0.0
    %2869 = vmatpush1.msra.mxu0 0.0
    %2870 = vmatprep.subr.mxu0 0.0
    %2871 = vmatpush1.msra.mxu0 0.0
    %2872 = vmatprep.subr.mxu0 0.0
    %2873 = vmatpush1.msra.mxu0 0.0
    %2874 = vmatprep.subr.mxu0 0.0
    %2875 = vmatpush1.msra.mxu0 0.0
    %2876 = vmatprep.subr.mxu0 0.0
    %2877 = vmatpush1.msra.mxu0 0.0
    %2878 = vmatprep.subr.mxu0 0.0
    %2879 = vmatpush1.msra.mxu0 0.0
    %2880 = vmatprep.subr.mxu0 0.0
    %2881 = vmatpush1.msra.mxu0 0.0
    %2882 = vmatprep.subr.mxu0 0.0
    %2883 = vmatpush1.msra.mxu0 0.0
    %2884 = vmatprep.subr.mxu0 0.0
    %2885 = vmatpush1.msra.mxu0 0.0
    %2886 = vmatprep.subr.mxu0 0.0
    %2887 = vmatpush1.msra.mxu0 0.0
    %2888 = vmatprep.subr.mxu0 0.0
    %2889 = vmatpush1.msra.mxu0 0.0
    %2890 = vmatprep.subr.mxu0 0.0
    %2891 = vmatpush1.msra.mxu0 0.0
    %2892 = vmatprep.subr.mxu0 0.0
    %2893 = vmatpush1.msra.mxu0 0.0
    %2894 = vmatprep.subr.mxu0 0.0
    %2895 = vmatpush1.msra.mxu0 0.0
    %2896 = vmatprep.subr.mxu0 0.0
    %2897 = vmatpush1.msra.mxu0 0.0
    %2898 = vmatprep.subr.mxu0 0.0
    %2899 = vmatpush1.msra.mxu0 0.0
    %2900 = vmatprep.subr.mxu0 0.0
    %2901 = vmatpush1.msra.mxu0 0.0
    %2902 = vmatprep.subr.mxu0 0.0
    %2903 = vmatpush1.msra.mxu0 0.0
    %2904 = vmatprep.mubr.f32.mxu0 0.0
    %2905 = vmatmul.mubr.f32.gmra.mrb[0].mxu0 %v210
    %v2906 = vpop.f32.mrb[0].mxu0
    %v2907 = vadd.f32 0.0, %v2906
    %v2908 = vpop.f32.mrb[0].mxu0
    %2909 = vmatprep.mubr.f32.mxu0 0.0
    %2910 = vmatmul.mubr.f32.gmra.mrb[0].mxu0 %v213
    %v2911 = vpop.f32.mrb[0].mxu0
    %v2912 = vadd.f32 0.0, %v2911
    %v2913 = vpop.f32.mrb[0].mxu0
    %2914 = vmatprep.mubr.f32.mxu0 0.0
    %2915 = vmatmul.mubr.f32.gmra.mrb[0].mxu0 %v216
    %v2916 = vpop.f32.mrb[0].mxu0
    %v2917 = vadd.f32 0.0, %v2916
    %v2918 = vpop.f32.mrb[0].mxu0
    %2919 = vmatprep.mubr.f32.mxu0 0.0
    %2920 = vmatmul.mubr.f32.gmra.mrb[0].mxu0 %v219
    %v2921 = vpop.f32.mrb[0].mxu0
    %v2922 = vadd.f32 0.0, %v2921
    %v2923 = vpop.f32.mrb[0].mxu0
    %2924 = vdwg.mxu0
    %s2925 = scalar_lea.vmem [#allocation8], 2560
    %v2926 = vld [vmem:[%s2925] sm:$0xff]
    %v2927 = vld [vmem:[%s2925 + $0x8] sm:$0xff]
    %v2928 = vld [vmem:[%s2925 + $0x10] sm:$0xff]
    %v2929 = vld [vmem:[%s2925 + $0x18] sm:$0xff]
    %v2930 = vld [vmem:[%s2925 + $0x20] sm:$0xff]
    %v2931 = vld [vmem:[%s2925 + $0x28] sm:$0xff]
    %v2932 = vld [vmem:[%s2925 + $0x30] sm:$0xff]
    %v2933 = vld [vmem:[%s2925 + $0x38] sm:$0xff]
    %v2934 = vld [vmem:[%s2925 + $0x40] sm:$0xff]
    %v2935 = vld [vmem:[%s2925 + $0x48] sm:$0xff]
    %v2936 = vld [vmem:[%s2925 + $0x50] sm:$0xff]
    %v2937 = vld [vmem:[%s2925 + $0x58] sm:$0xff]
    %v2938 = vld [vmem:[%s2925 + $0x60] sm:$0xff]
    %v2939 = vld [vmem:[%s2925 + $0x68] sm:$0xff]
    %v2940 = vld [vmem:[%s2925 + $0x70] sm:$0xff]
    %v2941 = vld [vmem:[%s2925 + $0x78] sm:$0xff]
    %s2942 = scalar_lea.vmem [#allocation8], 2688
    %v2943 = vld [vmem:[%s2942] sm:$0xff]
    %v2944 = vld [vmem:[%s2942 + $0x8] sm:$0xff]
    %v2945 = vld [vmem:[%s2942 + $0x10] sm:$0xff]
    %v2946 = vld [vmem:[%s2942 + $0x18] sm:$0xff]
    %v2947 = vld [vmem:[%s2942 + $0x20] sm:$0xff]
    %v2948 = vld [vmem:[%s2942 + $0x28] sm:$0xff]
    %v2949 = vld [vmem:[%s2942 + $0x30] sm:$0xff]
    %v2950 = vld [vmem:[%s2942 + $0x38] sm:$0xff]
    %v2951 = vld [vmem:[%s2942 + $0x40] sm:$0xff]
    %v2952 = vld [vmem:[%s2942 + $0x48] sm:$0xff]
    %v2953 = vld [vmem:[%s2942 + $0x50] sm:$0xff]
    %v2954 = vld [vmem:[%s2942 + $0x58] sm:$0xff]
    %v2955 = vld [vmem:[%s2942 + $0x60] sm:$0xff]
    %v2956 = vld [vmem:[%s2942 + $0x68] sm:$0xff]
    %v2957 = vld [vmem:[%s2942 + $0x70] sm:$0xff]
    %v2958 = vld [vmem:[%s2942 + $0x78] sm:$0xff]
    %2959 = vmatprep.subr.mxu0 0.0
    %2960 = vmatpush1.msra.mxu0 %v2943
    %2961 = vmatprep.subr.mxu0 0.0
    %2962 = vmatpush1.msra.mxu0 %v2944
    %2963 = vmatprep.subr.mxu0 0.0
    %2964 = vmatpush1.msra.mxu0 %v2945
    %2965 = vmatprep.subr.mxu0 0.0
    %2966 = vmatpush1.msra.mxu0 %v2946
    %2967 = vmatprep.subr.mxu0 0.0
    %2968 = vmatpush1.msra.mxu0 %v2947
    %2969 = vmatprep.subr.mxu0 0.0
    %2970 = vmatpush1.msra.mxu0 %v2948
    %2971 = vmatprep.subr.mxu0 0.0
    %2972 = vmatpush1.msra.mxu0 %v2949
    %2973 = vmatprep.subr.mxu0 0.0
    %2974 = vmatpush1.msra.mxu0 %v2950
    %2975 = vmatprep.subr.mxu0 0.0
    %2976 = vmatpush1.msra.mxu0 %v2951
    %2977 = vmatprep.subr.mxu0 0.0
    %2978 = vmatpush1.msra.mxu0 %v2952
    %2979 = vmatprep.subr.mxu0 0.0
    %2980 = vmatpush1.msra.mxu0 %v2953
    %2981 = vmatprep.subr.mxu0 0.0
    %2982 = vmatpush1.msra.mxu0 %v2954
    %2983 = vmatprep.subr.mxu0 0.0
    %2984 = vmatpush1.msra.mxu0 %v2955
    %2985 = vmatprep.subr.mxu0 0.0
    %2986 = vmatpush1.msra.mxu0 %v2956
    %2987 = vmatprep.subr.mxu0 0.0
    %2988 = vmatpush1.msra.mxu0 %v2957
    %2989 = vmatprep.subr.mxu0 0.0
    %2990 = vmatpush1.msra.mxu0 %v2958
    %2991 = vmatprep.subr.mxu0 0.0
    %2992 = vmatpush1.msra.mxu0 0.0
    %2993 = vmatprep.subr.mxu0 0.0
    %2994 = vmatpush1.msra.mxu0 0.0
    %2995 = vmatprep.subr.mxu0 0.0
    %2996 = vmatpush1.msra.mxu0 0.0
    %2997 = vmatprep.subr.mxu0 0.0
    %2998 = vmatpush1.msra.mxu0 0.0
    %2999 = vmatprep.subr.mxu0 0.0
    %3000 = vmatpush1.msra.mxu0 0.0
    %3001 = vmatprep.subr.mxu0 0.0
    %3002 = vmatpush1.msra.mxu0 0.0
    %3003 = vmatprep.subr.mxu0 0.0
    %3004 = vmatpush1.msra.mxu0 0.0
    %3005 = vmatprep.subr.mxu0 0.0
    %3006 = vmatpush1.msra.mxu0 0.0
    %3007 = vmatprep.subr.mxu0 0.0
    %3008 = vmatpush1.msra.mxu0 0.0
    %3009 = vmatprep.subr.mxu0 0.0
    %3010 = vmatpush1.msra.mxu0 0.0
    %3011 = vmatprep.subr.mxu0 0.0
    %3012 = vmatpush1.msra.mxu0 0.0
    %3013 = vmatprep.subr.mxu0 0.0
    %3014 = vmatpush1.msra.mxu0 0.0
    %3015 = vmatprep.subr.mxu0 0.0
    %3016 = vmatpush1.msra.mxu0 0.0
    %3017 = vmatprep.subr.mxu0 0.0
    %3018 = vmatpush1.msra.mxu0 0.0
    %3019 = vmatprep.subr.mxu0 0.0
    %3020 = vmatpush1.msra.mxu0 0.0
    %3021 = vmatprep.subr.mxu0 0.0
    %3022 = vmatpush1.msra.mxu0 0.0
    %3023 = vmatprep.mubr.f32.mxu0 0.0
    %3024 = vmatmul.mubr.f32.gmra.mrb[0].mxu0 %v2907
    %v3025 = vpop.f32.mrb[0].mxu0
    %v3026 = vadd.f32 0.0, %v3025
    %v3027 = vpop.f32.mrb[0].mxu0
    %3028 = vmatprep.mubr.f32.mxu0 0.0
    %3029 = vmatmul.mubr.f32.gmra.mrb[0].mxu0 %v2912
    %v3030 = vpop.f32.mrb[0].mxu0
    %v3031 = vadd.f32 0.0, %v3030
    %v3032 = vpop.f32.mrb[0].mxu0
    %3033 = vmatprep.mubr.f32.mxu0 0.0
    %3034 = vmatmul.mubr.f32.gmra.mrb[0].mxu0 %v2917
    %v3035 = vpop.f32.mrb[0].mxu0
    %v3036 = vadd.f32 0.0, %v3035
    %v3037 = vpop.f32.mrb[0].mxu0
    %3038 = vmatprep.mubr.f32.mxu0 0.0
    %3039 = vmatmul.mubr.f32.gmra.mrb[0].mxu0 %v2922
    %v3040 = vpop.f32.mrb[0].mxu0
    %v3041 = vadd.f32 0.0, %v3040
    %v3042 = vpop.f32.mrb[0].mxu0
    %3043 = vdwg.mxu0
    %3044 = vmatprep.subr.mxu0 0.0
    %3045 = vmatpush1.msra.mxu0 %v2926
    %3046 = vmatprep.subr.mxu0 0.0
    %3047 = vmatpush1.msra.mxu0 %v2927
    %3048 = vmatprep.subr.mxu0 0.0
    %3049 = vmatpush1.msra.mxu0 %v2928
    %3050 = vmatprep.subr.mxu0 0.0
    %3051 = vmatpush1.msra.mxu0 %v2929
    %3052 = vmatprep.subr.mxu0 0.0
    %3053 = vmatpush1.msra.mxu0 %v2930
    %3054 = vmatprep.subr.mxu0 0.0
    %3055 = vmatpush1.msra.mxu0 %v2931
    %3056 = vmatprep.subr.mxu0 0.0
    %3057 = vmatpush1.msra.mxu0 %v2932
    %3058 = vmatprep.subr.mxu0 0.0
    %3059 = vmatpush1.msra.mxu0 %v2933
    %3060 = vmatprep.subr.mxu0 0.0
    %3061 = vmatpush1.msra.mxu0 %v2934
    %3062 = vmatprep.subr.mxu0 0.0
    %3063 = vmatpush1.msra.mxu0 %v2935
    %3064 = vmatprep.subr.mxu0 0.0
    %3065 = vmatpush1.msra.mxu0 %v2936
    %3066 = vmatprep.subr.mxu0 0.0
    %3067 = vmatpush1.msra.mxu0 %v2937
    %3068 = vmatprep.subr.mxu0 0.0
    %3069 = vmatpush1.msra.mxu0 %v2938
    %3070 = vmatprep.subr.mxu0 0.0
    %3071 = vmatpush1.msra.mxu0 %v2939
    %3072 = vmatprep.subr.mxu0 0.0
    %3073 = vmatpush1.msra.mxu0 %v2940
    %3074 = vmatprep.subr.mxu0 0.0
    %3075 = vmatpush1.msra.mxu0 %v2941
    %3076 = vmatprep.subr.mxu0 0.0
    %3077 = vmatpush1.msra.mxu0 0.0
    %3078 = vmatprep.subr.mxu0 0.0
    %3079 = vmatpush1.msra.mxu0 0.0
    %3080 = vmatprep.subr.mxu0 0.0
    %3081 = vmatpush1.msra.mxu0 0.0
    %3082 = vmatprep.subr.mxu0 0.0
    %3083 = vmatpush1.msra.mxu0 0.0
    %3084 = vmatprep.subr.mxu0 0.0
    %3085 = vmatpush1.msra.mxu0 0.0
    %3086 = vmatprep.subr.mxu0 0.0
    %3087 = vmatpush1.msra.mxu0 0.0
    %3088 = vmatprep.subr.mxu0 0.0
    %3089 = vmatpush1.msra.mxu0 0.0
    %3090 = vmatprep.subr.mxu0 0.0
    %3091 = vmatpush1.msra.mxu0 0.0
    %3092 = vmatprep.subr.mxu0 0.0
    %3093 = vmatpush1.msra.mxu0 0.0
    %3094 = vmatprep.subr.mxu0 0.0
    %3095 = vmatpush1.msra.mxu0 0.0
    %3096 = vmatprep.subr.mxu0 0.0
    %3097 = vmatpush1.msra.mxu0 0.0
    %3098 = vmatprep.subr.mxu0 0.0
    %3099 = vmatpush1.msra.mxu0 0.0
    %3100 = vmatprep.subr.mxu0 0.0
    %3101 = vmatpush1.msra.mxu0 0.0
    %3102 = vmatprep.subr.mxu0 0.0
    %3103 = vmatpush1.msra.mxu0 0.0
    %3104 = vmatprep.subr.mxu0 0.0
    %3105 = vmatpush1.msra.mxu0 0.0
    %3106 = vmatprep.subr.mxu0 0.0
    %3107 = vmatpush1.msra.mxu0 0.0
    %3108 = vmatprep.mubr.f32.mxu0 0.0
    %3109 = vmatmul.mubr.f32.gmra.mrb[0].mxu0 %v2822
    %v3110 = vpop.f32.mrb[0].mxu0
    %v3111 = vadd.f32 %v3026, %v3110
    %v3112 = vpop.f32.mrb[0].mxu0
    %3113 = vmatprep.mubr.f32.mxu0 0.0
    %3114 = vmatmul.mubr.f32.gmra.mrb[0].mxu0 %v2827
    %v3115 = vpop.f32.mrb[0].mxu0
    %v3116 = vadd.f32 %v3031, %v3115
    %v3117 = vpop.f32.mrb[0].mxu0
    %3118 = vmatprep.mubr.f32.mxu0 0.0
    %3119 = vmatmul.mubr.f32.gmra.mrb[0].mxu0 %v2832
    %v3120 = vpop.f32.mrb[0].mxu0
    %v3121 = vadd.f32 %v3036, %v3120
    %v3122 = vpop.f32.mrb[0].mxu0
    %3123 = vmatprep.mubr.f32.mxu0 0.0
    %3124 = vmatmul.mubr.f32.gmra.mrb[0].mxu0 %v2837
    %v3125 = vpop.f32.mrb[0].mxu0
    %v3126 = vadd.f32 %v3041, %v3125
    %v3127 = vpop.f32.mrb[0].mxu0
    %3128 = vdwg.mxu0
    %s3129 = scalar_lea.vmem [#allocation8], 2816
    %v3130 = vld [vmem:[%s3129] sm:$0xff]
    %v3131 = vld [vmem:[%s3129 + $0x8] sm:$0xff]
    %v3132 = vld [vmem:[%s3129 + $0x10] sm:$0xff]
    %v3133 = vld [vmem:[%s3129 + $0x18] sm:$0xff]
    %v3134 = vld [vmem:[%s3129 + $0x20] sm:$0xff]
    %v3135 = vld [vmem:[%s3129 + $0x28] sm:$0xff]
    %v3136 = vld [vmem:[%s3129 + $0x30] sm:$0xff]
    %v3137 = vld [vmem:[%s3129 + $0x38] sm:$0xff]
    %v3138 = vld [vmem:[%s3129 + $0x40] sm:$0xff]
    %v3139 = vld [vmem:[%s3129 + $0x48] sm:$0xff]
    %v3140 = vld [vmem:[%s3129 + $0x50] sm:$0xff]
    %v3141 = vld [vmem:[%s3129 + $0x58] sm:$0xff]
    %v3142 = vld [vmem:[%s3129 + $0x60] sm:$0xff]
    %v3143 = vld [vmem:[%s3129 + $0x68] sm:$0xff]
    %v3144 = vld [vmem:[%s3129 + $0x70] sm:$0xff]
    %v3145 = vld [vmem:[%s3129 + $0x78] sm:$0xff]
    %3146 = vmatprep.subr.mxu0 0.0
    %3147 = vmatpush1.msra.mxu0 %v3130
    %3148 = vmatprep.subr.mxu0 0.0
    %3149 = vmatpush1.msra.mxu0 %v3131
    %3150 = vmatprep.subr.mxu0 0.0
    %3151 = vmatpush1.msra.mxu0 %v3132
    %3152 = vmatprep.subr.mxu0 0.0
    %3153 = vmatpush1.msra.mxu0 %v3133
    %3154 = vmatprep.subr.mxu0 0.0
    %3155 = vmatpush1.msra.mxu0 %v3134
    %3156 = vmatprep.subr.mxu0 0.0
    %3157 = vmatpush1.msra.mxu0 %v3135
    %3158 = vmatprep.subr.mxu0 0.0
    %3159 = vmatpush1.msra.mxu0 %v3136
    %3160 = vmatprep.subr.mxu0 0.0
    %3161 = vmatpush1.msra.mxu0 %v3137
    %3162 = vmatprep.subr.mxu0 0.0
    %3163 = vmatpush1.msra.mxu0 %v3138
    %3164 = vmatprep.subr.mxu0 0.0
    %3165 = vmatpush1.msra.mxu0 %v3139
    %3166 = vmatprep.subr.mxu0 0.0
    %3167 = vmatpush1.msra.mxu0 %v3140
    %3168 = vmatprep.subr.mxu0 0.0
    %3169 = vmatpush1.msra.mxu0 %v3141
    %3170 = vmatprep.subr.mxu0 0.0
    %3171 = vmatpush1.msra.mxu0 %v3142
    %3172 = vmatprep.subr.mxu0 0.0
    %3173 = vmatpush1.msra.mxu0 %v3143
    %3174 = vmatprep.subr.mxu0 0.0
    %3175 = vmatpush1.msra.mxu0 %v3144
    %3176 = vmatprep.subr.mxu0 0.0
    %3177 = vmatpush1.msra.mxu0 %v3145
    %3178 = vmatprep.subr.mxu0 0.0
    %3179 = vmatpush1.msra.mxu0 0.0
    %3180 = vmatprep.subr.mxu0 0.0
    %3181 = vmatpush1.msra.mxu0 0.0
    %3182 = vmatprep.subr.mxu0 0.0
    %3183 = vmatpush1.msra.mxu0 0.0
    %3184 = vmatprep.subr.mxu0 0.0
    %3185 = vmatpush1.msra.mxu0 0.0
    %3186 = vmatprep.subr.mxu0 0.0
    %3187 = vmatpush1.msra.mxu0 0.0
    %3188 = vmatprep.subr.mxu0 0.0
    %3189 = vmatpush1.msra.mxu0 0.0
    %3190 = vmatprep.subr.mxu0 0.0
    %3191 = vmatpush1.msra.mxu0 0.0
    %3192 = vmatprep.subr.mxu0 0.0
    %3193 = vmatpush1.msra.mxu0 0.0
    %3194 = vmatprep.subr.mxu0 0.0
    %3195 = vmatpush1.msra.mxu0 0.0
    %3196 = vmatprep.subr.mxu0 0.0
    %3197 = vmatpush1.msra.mxu0 0.0
    %3198 = vmatprep.subr.mxu0 0.0
    %3199 = vmatpush1.msra.mxu0 0.0
    %3200 = vmatprep.subr.mxu0 0.0
    %3201 = vmatpush1.msra.mxu0 0.0
    %3202 = vmatprep.subr.mxu0 0.0
    %3203 = vmatpush1.msra.mxu0 0.0
    %3204 = vmatprep.subr.mxu0 0.0
    %3205 = vmatpush1.msra.mxu0 0.0
    %3206 = vmatprep.subr.mxu0 0.0
    %3207 = vmatpush1.msra.mxu0 0.0
    %3208 = vmatprep.subr.mxu0 0.0
    %3209 = vmatpush1.msra.mxu0 0.0
    %3210 = vmatprep.mubr.f32.mxu0 0.0
    %3211 = vmatmul.mubr.f32.gmra.mrb[0].mxu0 %v2036
    %v3212 = vpop.f32.mrb[0].mxu0
    %v3213 = vadd.f32 0.0, %v3212
    %v3214 = vpop.f32.mrb[0].mxu0
    %3215 = vmatprep.mubr.f32.mxu0 0.0
    %3216 = vmatmul.mubr.f32.gmra.mrb[0].mxu0 %v2041
    %v3217 = vpop.f32.mrb[0].mxu0
    %v3218 = vadd.f32 0.0, %v3217
    %v3219 = vpop.f32.mrb[0].mxu0
    %3220 = vmatprep.mubr.f32.mxu0 0.0
    %3221 = vmatmul.mubr.f32.gmra.mrb[0].mxu0 %v2046
    %v3222 = vpop.f32.mrb[0].mxu0
    %v3223 = vadd.f32 0.0, %v3222
    %v3224 = vpop.f32.mrb[0].mxu0
    %3225 = vmatprep.mubr.f32.mxu0 0.0
    %3226 = vmatmul.mubr.f32.gmra.mrb[0].mxu0 %v2051
    %v3227 = vpop.f32.mrb[0].mxu0
    %v3228 = vadd.f32 0.0, %v3227
    %v3229 = vpop.f32.mrb[0].mxu0
    %3230 = vdwg.mxu0
    %v3231 = vadd.f32 %v3111, %v3213
    %v3232 = vadd.f32 %v3116, %v3218
    %v3233 = vadd.f32 %v3121, %v3223
    %v3234 = vadd.f32 %v3126, %v3228
    %s3235 = scalar_lea.vmem [#allocation10], 12
    %v3236 = vld [vmem:[%s3235] sm:$0x1]
    %v3238 = vlaneseq
    %v3239 = vshrl.u32 %v3238, 7
    %v3240 = vsub.s32 0, %v3239
    %v3241 = vrot.slane %v3236, %v3240
    %v3243 = vadd.f32 %v3231, %v3241
    %v3244 = vadd.f32 %v3232, %v3241
    %v3245 = vadd.f32 %v3233, %v3241
    %v3246 = vadd.f32 %v3234, %v3241
    %v3247 = vmax.f32 %v3243, 0.0
    %v3248 = vmax.f32 %v3244, 0.0
    %v3249 = vmax.f32 %v3245, 0.0
    %v3250 = vmax.f32 %v3246, 0.0
    %s3251 = scalar_lea.vmem [#allocation8], 2944
    %v3252 = vld [vmem:[%s3251] sm:$0xff]
    %v3253 = vld [vmem:[%s3251 + $0x8] sm:$0xff]
    %v3254 = vld [vmem:[%s3251 + $0x10] sm:$0xff]
    %v3255 = vld [vmem:[%s3251 + $0x18] sm:$0xff]
    %v3256 = vld [vmem:[%s3251 + $0x20] sm:$0xff]
    %v3257 = vld [vmem:[%s3251 + $0x28] sm:$0xff]
    %v3258 = vld [vmem:[%s3251 + $0x30] sm:$0xff]
    %v3259 = vld [vmem:[%s3251 + $0x38] sm:$0xff]
    %v3260 = vld [vmem:[%s3251 + $0x40] sm:$0xff]
    %v3261 = vld [vmem:[%s3251 + $0x48] sm:$0xff]
    %v3262 = vld [vmem:[%s3251 + $0x50] sm:$0xff]
    %v3263 = vld [vmem:[%s3251 + $0x58] sm:$0xff]
    %v3264 = vld [vmem:[%s3251 + $0x60] sm:$0xff]
    %v3265 = vld [vmem:[%s3251 + $0x68] sm:$0xff]
    %v3266 = vld [vmem:[%s3251 + $0x70] sm:$0xff]
    %v3267 = vld [vmem:[%s3251 + $0x78] sm:$0xff]
    %s3268 = scalar_lea.vmem [#allocation10], 13
    %v3269 = vld [vmem:[%s3268] sm:$0x1]
    %v3271 = vlaneseq
    %v3272 = vshrl.u32 %v3271, 7
    %v3273 = vsub.s32 0, %v3272
    %v3274 = vrot.slane %v3269, %v3273
    %3276 = vmatprep.subr.mxu0 0.0
    %3277 = vmatpush1.msra.mxu0 %v3252
    %3278 = vmatprep.subr.mxu0 0.0
    %3279 = vmatpush1.msra.mxu0 %v3253
    %3280 = vmatprep.subr.mxu0 0.0
    %3281 = vmatpush1.msra.mxu0 %v3254
    %3282 = vmatprep.subr.mxu0 0.0
    %3283 = vmatpush1.msra.mxu0 %v3255
    %3284 = vmatprep.subr.mxu0 0.0
    %3285 = vmatpush1.msra.mxu0 %v3256
    %3286 = vmatprep.subr.mxu0 0.0
    %3287 = vmatpush1.msra.mxu0 %v3257
    %3288 = vmatprep.subr.mxu0 0.0
    %3289 = vmatpush1.msra.mxu0 %v3258
    %3290 = vmatprep.subr.mxu0 0.0
    %3291 = vmatpush1.msra.mxu0 %v3259
    %3292 = vmatprep.subr.mxu0 0.0
    %3293 = vmatpush1.msra.mxu0 %v3260
    %3294 = vmatprep.subr.mxu0 0.0
    %3295 = vmatpush1.msra.mxu0 %v3261
    %3296 = vmatprep.subr.mxu0 0.0
    %3297 = vmatpush1.msra.mxu0 %v3262
    %3298 = vmatprep.subr.mxu0 0.0
    %3299 = vmatpush1.msra.mxu0 %v3263
    %3300 = vmatprep.subr.mxu0 0.0
    %3301 = vmatpush1.msra.mxu0 %v3264
    %3302 = vmatprep.subr.mxu0 0.0
    %3303 = vmatpush1.msra.mxu0 %v3265
    %3304 = vmatprep.subr.mxu0 0.0
    %3305 = vmatpush1.msra.mxu0 %v3266
    %3306 = vmatprep.subr.mxu0 0.0
    %3307 = vmatpush1.msra.mxu0 %v3267
    %3308 = vmatprep.subr.mxu0 0.0
    %3309 = vmatpush1.msra.mxu0 0.0
    %3310 = vmatprep.subr.mxu0 0.0
    %3311 = vmatpush1.msra.mxu0 0.0
    %3312 = vmatprep.subr.mxu0 0.0
    %3313 = vmatpush1.msra.mxu0 0.0
    %3314 = vmatprep.subr.mxu0 0.0
    %3315 = vmatpush1.msra.mxu0 0.0
    %3316 = vmatprep.subr.mxu0 0.0
    %3317 = vmatpush1.msra.mxu0 0.0
    %3318 = vmatprep.subr.mxu0 0.0
    %3319 = vmatpush1.msra.mxu0 0.0
    %3320 = vmatprep.subr.mxu0 0.0
    %3321 = vmatpush1.msra.mxu0 0.0
    %3322 = vmatprep.subr.mxu0 0.0
    %3323 = vmatpush1.msra.mxu0 0.0
    %3324 = vmatprep.subr.mxu0 0.0
    %3325 = vmatpush1.msra.mxu0 0.0
    %3326 = vmatprep.subr.mxu0 0.0
    %3327 = vmatpush1.msra.mxu0 0.0
    %3328 = vmatprep.subr.mxu0 0.0
    %3329 = vmatpush1.msra.mxu0 0.0
    %3330 = vmatprep.subr.mxu0 0.0
    %3331 = vmatpush1.msra.mxu0 0.0
    %3332 = vmatprep.subr.mxu0 0.0
    %3333 = vmatpush1.msra.mxu0 0.0
    %3334 = vmatprep.subr.mxu0 0.0
    %3335 = vmatpush1.msra.mxu0 0.0
    %3336 = vmatprep.subr.mxu0 0.0
    %3337 = vmatpush1.msra.mxu0 0.0
    %3338 = vmatprep.subr.mxu0 0.0
    %3339 = vmatpush1.msra.mxu0 0.0
    %3340 = vmatprep.mubr.f32.mxu0 0.0
    %3341 = vmatmul.mubr.f32.gmra.mrb[0].mxu0 %v3247
    %v3342 = vpop.f32.mrb[0].mxu0
    %v3343 = vadd.f32 %v3274, %v3342
    %v3344 = vpop.f32.mrb[0].mxu0
    %3345 = vmatprep.mubr.f32.mxu0 0.0
    %3346 = vmatmul.mubr.f32.gmra.mrb[0].mxu0 %v3248
    %v3347 = vpop.f32.mrb[0].mxu0
    %v3348 = vadd.f32 %v3274, %v3347
    %v3349 = vpop.f32.mrb[0].mxu0
    %3350 = vmatprep.mubr.f32.mxu0 0.0
    %3351 = vmatmul.mubr.f32.gmra.mrb[0].mxu0 %v3249
    %v3352 = vpop.f32.mrb[0].mxu0
    %v3353 = vadd.f32 %v3274, %v3352
    %v3354 = vpop.f32.mrb[0].mxu0
    %3355 = vmatprep.mubr.f32.mxu0 0.0
    %3356 = vmatmul.mubr.f32.gmra.mrb[0].mxu0 %v3250
    %v3357 = vpop.f32.mrb[0].mxu0
    %v3358 = vadd.f32 %v3274, %v3357
    %v3359 = vpop.f32.mrb[0].mxu0
    %3360 = vdwg.mxu0
    %3361 = vst [vmem:[#allocation11] sm:$0xff] %v3343
    %3362 = vst [vmem:[#allocation11 + $0x8] sm:$0xff] %v3348
    %3363 = vst [vmem:[#allocation11 + $0x10] sm:$0xff] %v3353
    %3364 = vst [vmem:[#allocation11 + $0x18] sm:$0xff] %v3358
    // Predicated region
    $region50: #{tpu_custom_call.1} parent=1 // pred_check
      _
    $region51: #{tpu_custom_call.1} parent=1 // pred_check_branch
      %3366 = sbr.rel (0) target = $region53
    $region52: #{tpu_custom_call.1} parent=1 // pred_region
      %s3368 = ssub.s32 512, 512
      %3369 = vsyncadd [#allocation4], %s3368
      %s3370 = sshll.u32 [#allocation11], 4
      %s3371 = int_to_ptr.vmem [resolvable:$true] %s3370
      %3376 = dma.vmem_to_hbm [thread:$0]  %s3371, 512, %s7, [#allocation4], 128, 128, 8
    $region53: #{tpu_custom_call.1} parent=1 // pred_fallthru
      _
    // Predicated region
    $region54: #{tpu_custom_call.1} parent=1 // pred_check
      _
    $region55: #{tpu_custom_call.1} parent=1 // pred_check_branch
      %3378 = sbr.rel (0) target = $region57
    $region56: #{tpu_custom_call.1} parent=1 // pred_region
      %3379 = dma.done [#allocation4], 512
    $region57: #{tpu_custom_call.1} parent=1 // pred_fallthru
      _
    %3380 = vsyncpa [#allocation3], 1
    %3381 = vsyncpa [#allocation6], 1
    %3382 = vsyncpa [#allocation9], 1
    %3383 = vsyncpa [#allocation4], 1

</llo_original>
